<compile_context>
chip_gen: v7x
topology: tpu7x:2x2x1
jax: 0.10.0
libtpu: 0.0.40
codegen_flags: <defaults>
</compile_context>

<pallas_src>
import numpy as np

import jax
import jax.numpy as jnp
from jax import lax
from jax.experimental import pallas as pl
from jax.experimental.pallas import tpu as pltpu


def make_kernel(NB, Cin, Cout, H, W, HW, HWp, PAD):
    S = PAD + HWp                    # per-image stride inside the haloed buffer
    ACCW = NB * S - PAD              # width of the batched accumulator
    TAIL = HWp != HW                 # lane padding beyond the real H*W pixels

    def kernel(x_ref, w1_ref, w2_ref, wsk_ref, s0_ref, t0_ref, s1_ref,
               t1_ref, bf_ref, ml_ref, mr_ref, tm_ref, out_ref, pad_ref):
        # Re-zero the NB+1 inter-image halos each step (one (Cout,128) vreg
        # store apiece).  Deliberately NOT gated on pl.program_id(0)==0: the
        # batch axis is "parallel", so a megacore TC may only ever see
        # program_id > 0.
        zeros_halo = jnp.zeros((Cout, PAD), jnp.float32)
        for b in range(NB + 1):
            pad_ref[:, b * S:b * S + PAD] = zeros_halo

        mask_l = ml_ref[...]                     # (1, ACCW): has a left nbr
        mask_r = mr_ref[...]                     # (1, ACCW): has a right nbr
        s0, t0 = s0_ref[...], t0_ref[...]        # (Cin, 1)
        s1, t1 = s1_ref[...], t1_ref[...]        # (Cout, 1)
        bf = bf_ref[...]                         # (Cout, 1) = b2 + bsk
        tmask = tm_ref[...] if TAIL else None    # (1, HWp): real-pixel lanes

        def conv3x3(w_ref, cin):
            # 'same' 3x3 conv over ALL NB images at once: each tap is ONE
            # (Cout,cin)@(cin,ACCW) MXU matmul on a statically shifted lane
            # window of the zero-haloed buffer.  Taps are grouped by the
            # horizontal shift dx; the edge mask is applied once per group
            # AFTER the matmuls (exact for a 0/1 per-lane scale).  Vertical
            # out-of-range taps read the zero halos and contribute nothing.
            groups = []
            for kx, mask in ((0, mask_l), (1, None), (2, mask_r)):
                acc = None
                for ky in range(3):
                    s = (ky - 1) * W + (kx - 1)
                    win = pad_ref[0:cin, PAD + s:PAD + s + ACCW]
                    p = jnp.dot(w_ref[3 * ky + kx], win,
                                preferred_element_type=jnp.float32)
                    acc = p if acc is None else acc + p
                groups.append(acc if mask is None else acc * mask)
            return groups[0] + groups[1] + groups[2]

        # ---- BN0 (eval, folded) + ReLU on the raw input, whole batch at once.
        a0 = jnp.maximum(x_ref[...] * s0 + t0, 0.0)            # (NB,Cin,HWp)
        if TAIL:
            a0 = a0 * tmask                                     # keep tail = 0
        for b in range(NB):                                     # aligned vst
            pad_ref[0:Cin, PAD + b * S:PAD + b * S + HWp] = a0[b]
        # NOTE: rows Cin:Cout of the interiors may hold stale data from a
        # previous grid step; conv3x3(w1_ref, Cin) only ever reads rows 0:Cin
        # (Cin <= Cout asserted in the wrapper).

        # ---- Conv1 -> BN1 -> ReLU  (conv1 bias pre-folded into t1).
        a1 = jnp.maximum(conv3x3(w1_ref, Cin) * s1 + t1, 0.0)   # (Cout,ACCW)
        for b in range(NB):
            seg = a1[:, b * S:b * S + HWp]
            if TAIL:
                seg = seg * tmask
            pad_ref[0:Cout, PAD + b * S:PAD + b * S + HWp] = seg

        # ---- Conv2 (no BN/act) + 1x1 shortcut on the RAW input + biases.
        y2 = conv3x3(w2_ref, Cout)                              # (Cout,ACCW)
        wsk = wsk_ref[...]                                      # (Cout, Cin)
        for b in range(NB):
            sc = jnp.dot(wsk, x_ref[b], preferred_element_type=jnp.float32)
            out_ref[b] = (y2[:, b * S:b * S + HWp] + sc + bf
                          ).astype(out_ref.dtype)

    return kernel


def fold_params(p, eps=1e-5):
    """PyTorch-layout params -> kernel-layout params (host/XLA-side, tiny)."""
    Cout, Cin = p["w1"].shape[:2]
    s0 = p["gamma0"] / jnp.sqrt(p["var0"] + eps)
    t0 = p["beta0"] - p["mean0"] * s0
    s1 = p["gamma1"] / jnp.sqrt(p["var1"] + eps)
    t1 = p["beta1"] - p["mean1"] * s1
    # (Cout, Cin, 3, 3) -> (9, Cout, Cin); tap k = 3*ky + kx.
    w1t = jnp.transpose(p["w1"], (2, 3, 0, 1)).reshape(9, Cout, Cin)
    w2t = jnp.transpose(p["w2"], (2, 3, 0, 1)).reshape(9, Cout, Cout)
    wskm = p["wsk"][:, :, 0, 0]                         # (Cout, Cin)
    t1p = (p["b1"] * s1 + t1).reshape(Cout, 1)          # conv1 bias through BN1
    bfin = (p["b2"] + p["bsk"]).reshape(Cout, 1)        # conv2 bias + skip bias
    return (w1t, w2t, wskm, s0.reshape(Cin, 1), t0.reshape(Cin, 1),
            s1.reshape(Cout, 1), t1p, bfin)


def _tensorcores_per_device():
    """TensorCores reachable by one pallas_call (megacore / v7x chips = 2)."""
    try:
        kind = jax.devices()[0].device_kind.lower()
    except Exception:
        return 1
    return 2 if any(tag in kind for tag in ("v4", "v5p", "v7")) else 1


def resconv_block(x_nchw, params):
    """ResConvBlock forward: (N, Cin, H, W) f32 -> (N, Cout, H, W) f32."""
    N, Cin, H, W = x_nchw.shape
    Cout = params["w1"].shape[0]
    HW = H * W
    # Lane-dense guard: pad the per-image slab to a multiple of 128 lanes so
    # every activation / output store stays an unmasked `vst` (the single
    # biggest measured writeback lever).  PAD must cover the largest tap
    # shift (W+1) and remain a multiple of 128 so every image interior starts
    # lane-aligned inside the concatenated buffer.
    HWp = ((HW + 127) // 128) * 128
    PAD = 128
    assert W + 1 <= PAD, "widen PAD (in 128-lane steps) for larger W"
    assert Cin <= Cout, "activation buffer rows are sized for Cout"

    w1t, w2t, wskm, s0, t0, s1, t1p, bfin = fold_params(params)

    S = PAD + HWp

    def vmem_bytes(nb):
        accw = nb * S - PAD
        blk = 4 * nb * (Cin + Cout) * HWp             # x block + out block
        scr = 4 * Cout * (PAD + nb * S)               # haloed activation buf
        wts = 4 * (9 * Cout * Cin + 9 * Cout * Cout + Cout * Cin)
        msc = 4 * (2 * accw + HWp + 2 * Cin + 3 * Cout)
        return 2 * blk + scr + 2 * (wts + msc)        # blocks double-buffered

    # Images per grid step: at least one grid step per TensorCore (feeds both
    # v7x / megacore cores via the "parallel" axis), otherwise as many images
    # as the VMEM budget allows to amortize the ~0.35us per-step overhead.
    cores = _tensorcores_per_device()
    NB = max(1, N // max(1, min(N, cores)))
    while N % NB:
        NB -= 1
    budget = 24 << 20                                  # fits v7x's 64 MiB VMEM
    while NB > 1 and vmem_bytes(NB) > budget:
        NB -= 1
        while N % NB:
            NB -= 1
    grid = (N // NB,)
    ACCW = NB * S - PAD

    # Host-precomputed per-lane masks (no per-step iota / compare work).
    lane = np.arange(ACCW)
    off = lane % S                                     # within-image offset
    col = off % W
    interior = off < HW
    mask_l = ((col >= 1) & interior).astype(np.float32).reshape(1, ACCW)
    mask_r = ((col <= W - 2) & interior).astype(np.float32).reshape(1, ACCW)
    tmask = (np.arange(HWp) < HW).astype(np.float32).reshape(1, HWp)

    x_slab = x_nchw.reshape(N, Cin, HW).astype(jnp.float32)
    if HWp != HW:
        x_slab = jnp.pad(x_slab, ((0, 0), (0, 0), (0, HWp - HW)))

    kernel = make_kernel(NB, Cin, Cout, H, W, HW, HWp, PAD)

    def full(shape):
        r = len(shape)
        return pl.BlockSpec(shape, lambda n, r=r: (0,) * r)

    grid_spec = pltpu.PrefetchScalarGridSpec(
        num_scalar_prefetch=0,
        grid=grid,
        in_specs=[
            pl.BlockSpec((NB, Cin, HWp), lambda n: (n, 0, 0)),   # x
            full((9, Cout, Cin)),                                # conv1 taps
            full((9, Cout, Cout)),                               # conv2 taps
            full((Cout, Cin)),                                   # 1x1 shortcut
            full((Cin, 1)), full((Cin, 1)),                      # BN0 scale/shift
            full((Cout, 1)), full((Cout, 1)),                    # BN1 scale, bias'
            full((Cout, 1)),                                     # b2 + b_skip
            full((1, ACCW)), full((1, ACCW)),                    # col masks
            full((1, HWp)),                                      # tail mask
        ],
        out_specs=pl.BlockSpec((NB, Cout, HWp), lambda n: (n, 0, 0)),
        scratch_shapes=[pltpu.VMEM((Cout, PAD + NB * S), jnp.float32)],
    )
    out = pl.pallas_call(
        kernel,
        out_shape=jax.ShapeDtypeStruct((N, Cout, HWp), jnp.float32),
        grid_spec=grid_spec,
        compiler_params=pltpu.CompilerParams(
            dimension_semantics=("parallel",),
            vmem_limit_bytes=int(min(max(2 * vmem_bytes(NB), 8 << 20),
                                     32 << 20)),
        ),
    )(x_slab, w1t, w2t, wskm, s0, t0, s1, t1p, bfin,
      jnp.asarray(mask_l), jnp.asarray(mask_r), jnp.asarray(tmask))
    if HWp != HW:
        out = out[..., :HW]
    return out.reshape(N, Cout, H, W)


def ref_forward(x, p, eps=1e-5):
    """Plain-JAX NCHW reference (same math as the PyTorch module, eval mode)."""
    def bn(v, g, b, m, var):
        s = g / jnp.sqrt(var + eps)
        return v * s[None, :, None, None] + (b - m * s)[None, :, None, None]

    dn = ("NCHW", "OIHW", "NCHW")
    conv = lambda v, w: lax.conv_general_dilated(
        v, w, (1, 1), "SAME", dimension_numbers=dn)

    a0 = jnp.maximum(bn(x, p["gamma0"], p["beta0"], p["mean0"], p["var0"]), 0.0)
    y1 = conv(a0, p["w1"]) + p["b1"][None, :, None, None]
    a1 = jnp.maximum(bn(y1, p["gamma1"], p["beta1"], p["mean1"], p["var1"]), 0.0)
    y2 = conv(a1, p["w2"]) + p["b2"][None, :, None, None]
    sc = conv(x, p["wsk"]) + p["bsk"][None, :, None, None]
    return y2 + sc


def init_params(key, Cin, Cout):
    ks = jax.random.split(key, 14)
    p = {}
    p["w1"] = jax.random.normal(ks[0], (Cout, Cin, 3, 3), jnp.float32) * 0.1
    p["b1"] = jax.random.normal(ks[1], (Cout,), jnp.float32) * 0.05
    p["w2"] = jax.random.normal(ks[2], (Cout, Cout, 3, 3), jnp.float32) * 0.1
    p["b2"] = jax.random.normal(ks[3], (Cout,), jnp.float32) * 0.05
    p["wsk"] = jax.random.normal(ks[4], (Cout, Cin, 1, 1), jnp.float32) * 0.1
    p["bsk"] = jax.random.normal(ks[5], (Cout,), jnp.float32) * 0.05
    # BatchNorm (eval mode) statistics / affine params.
    p["gamma0"] = 0.5 + jax.random.uniform(ks[6], (Cin,), jnp.float32)
    p["beta0"] = jax.random.normal(ks[7], (Cin,), jnp.float32) * 0.1
    p["mean0"] = jax.random.normal(ks[8], (Cin,), jnp.float32) * 0.1
    p["var0"] = 0.5 + jax.random.uniform(ks[9], (Cin,), jnp.float32)
    p["gamma1"] = 0.5 + jax.random.uniform(ks[10], (Cout,), jnp.float32)
    p["beta1"] = jax.random.normal(ks[11], (Cout,), jnp.float32) * 0.1
    p["mean1"] = jax.random.normal(ks[12], (Cout,), jnp.float32) * 0.1
    p["var1"] = 0.5 + jax.random.uniform(ks[13], (Cout,), jnp.float32)
    return p


if __name__ == "__main__":
    key = jax.random.PRNGKey(0)
    kx, kp = jax.random.split(key)

    N, Cin, Cout, H, W = 2, 4, 8, 16, 16
    x = jax.random.normal(kx, (N, Cin, H, W), jnp.float32)   # NCHW like PyTorch
    params = init_params(kp, Cin, Cout)

    out = jax.block_until_ready(resconv_block(x, params))
    ref = jax.block_until_ready(ref_forward(x, params))

    assert out.shape == (N, Cout, H, W)
    err = jnp.max(jnp.abs(out - ref))
    assert jnp.allclose(out, ref, atol=5e-4, rtol=1e-3), f"max err {err}"
    print("KERNEL_OK")
</pallas_src>

<mosaic_0001>
module attributes {stable_mosaic.version = 11 : i64} {
  func.func @kernel(%arg0: i32, %arg1: memref<2x4x256xf32, #tpu.memory_space<vmem>>, %arg2: memref<9x8x4xf32, #tpu.memory_space<vmem>>, %arg3: memref<9x8x8xf32, #tpu.memory_space<vmem>>, %arg4: memref<8x4xf32, #tpu.memory_space<vmem>>, %arg5: memref<4x1xf32, #tpu.memory_space<vmem>>, %arg6: memref<4x1xf32, #tpu.memory_space<vmem>>, %arg7: memref<8x1xf32, #tpu.memory_space<vmem>>, %arg8: memref<8x1xf32, #tpu.memory_space<vmem>>, %arg9: memref<8x1xf32, #tpu.memory_space<vmem>>, %arg10: memref<1x640xf32, #tpu.memory_space<vmem>>, %arg11: memref<1x640xf32, #tpu.memory_space<vmem>>, %arg12: memref<1x256xf32, #tpu.memory_space<vmem>>, %arg13: memref<2x8x256xf32, #tpu.memory_space<vmem>>, %arg14: memref<8x896xf32, #tpu.memory_space<vmem>>) attributes {dimension_semantics = [#tpu.dimension_semantics<parallel>], iteration_bounds = array<i64: 1>, scalar_prefetch = 0 : i64, scratch_operands = 1 : i64, tpu.core_type = #tpu.core_type<tc>, window_params = [{transform_indices = @transform_0, window_bounds = array<i64: 2, 4, 256>}, {pipeline_mode = #tpu.pipeline_mode<synchronous>, transform_indices = @transform_1, window_bounds = array<i64: 9, 8, 4>}, {pipeline_mode = #tpu.pipeline_mode<synchronous>, transform_indices = @transform_2, window_bounds = array<i64: 9, 8, 8>}, {pipeline_mode = #tpu.pipeline_mode<synchronous>, transform_indices = @transform_3, window_bounds = array<i64: 8, 4>}, {pipeline_mode = #tpu.pipeline_mode<synchronous>, transform_indices = @transform_4, window_bounds = array<i64: 4, 1>}, {pipeline_mode = #tpu.pipeline_mode<synchronous>, transform_indices = @transform_5, window_bounds = array<i64: 4, 1>}, {pipeline_mode = #tpu.pipeline_mode<synchronous>, transform_indices = @transform_6, window_bounds = array<i64: 8, 1>}, {pipeline_mode = #tpu.pipeline_mode<synchronous>, transform_indices = @transform_7, window_bounds = array<i64: 8, 1>}, {pipeline_mode = #tpu.pipeline_mode<synchronous>, transform_indices = @transform_8, window_bounds = array<i64: 8, 1>}, {pipeline_mode = #tpu.pipeline_mode<synchronous>, transform_indices = @transform_9, window_bounds = array<i64: 1, 640>}, {pipeline_mode = #tpu.pipeline_mode<synchronous>, transform_indices = @transform_10, window_bounds = array<i64: 1, 640>}, {pipeline_mode = #tpu.pipeline_mode<synchronous>, transform_indices = @transform_11, window_bounds = array<i64: 1, 256>}, {transform_indices = @transform_12, window_bounds = array<i64: 2, 8, 256>}]} {
    %cst = arith.constant 0.000000e+00 : f32
    %0 = vector.broadcast %cst : f32 to vector<8x128xf32>
    %c0 = arith.constant 0 : index
    %c0_0 = arith.constant 0 : index
    %1 = vector.load %arg14[%c0, %c0_0] : memref<8x896xf32, #tpu.memory_space<vmem>>, vector<8x128xf32>
    tpu.vector_store %arg14[%c0, %c0_0], %0 {strides = array<i32>} : memref<8x896xf32, #tpu.memory_space<vmem>>, vector<8x128xf32>,
    %c0_1 = arith.constant 0 : index
    %c384 = arith.constant 384 : index
    %2 = vector.load %arg14[%c0_1, %c384] : memref<8x896xf32, #tpu.memory_space<vmem>>, vector<8x128xf32>
    tpu.vector_store %arg14[%c0_1, %c384], %0 {strides = array<i32>} : memref<8x896xf32, #tpu.memory_space<vmem>>, vector<8x128xf32>,
    %c0_2 = arith.constant 0 : index
    %c768 = arith.constant 768 : index
    %3 = vector.load %arg14[%c0_2, %c768] : memref<8x896xf32, #tpu.memory_space<vmem>>, vector<8x128xf32>
    tpu.vector_store %arg14[%c0_2, %c768], %0 {strides = array<i32>} : memref<8x896xf32, #tpu.memory_space<vmem>>, vector<8x128xf32>,
    %c0_3 = arith.constant 0 : index
    %c0_4 = arith.constant 0 : index
    %4 = vector.load %arg10[%c0_3, %c0_4] : memref<1x640xf32, #tpu.memory_space<vmem>>, vector<1x640xf32>
    %c0_5 = arith.constant 0 : index
    %c0_6 = arith.constant 0 : index
    %5 = vector.load %arg11[%c0_5, %c0_6] : memref<1x640xf32, #tpu.memory_space<vmem>>, vector<1x640xf32>
    %c0_7 = arith.constant 0 : index
    %c0_8 = arith.constant 0 : index
    %6 = vector.load %arg5[%c0_7, %c0_8] : memref<4x1xf32, #tpu.memory_space<vmem>>, vector<4x1xf32>
    %c0_9 = arith.constant 0 : index
    %c0_10 = arith.constant 0 : index
    %7 = vector.load %arg6[%c0_9, %c0_10] : memref<4x1xf32, #tpu.memory_space<vmem>>, vector<4x1xf32>
    %c0_11 = arith.constant 0 : index
    %c0_12 = arith.constant 0 : index
    %8 = vector.load %arg7[%c0_11, %c0_12] : memref<8x1xf32, #tpu.memory_space<vmem>>, vector<8x1xf32>
    %c0_13 = arith.constant 0 : index
    %c0_14 = arith.constant 0 : index
    %9 = vector.load %arg8[%c0_13, %c0_14] : memref<8x1xf32, #tpu.memory_space<vmem>>, vector<8x1xf32>
    %c0_15 = arith.constant 0 : index
    %c0_16 = arith.constant 0 : index
    %10 = vector.load %arg9[%c0_15, %c0_16] : memref<8x1xf32, #tpu.memory_space<vmem>>, vector<8x1xf32>
    %c0_17 = arith.constant 0 : index
    %c0_18 = arith.constant 0 : index
    %c0_19 = arith.constant 0 : index
    %11 = vector.load %arg1[%c0_17, %c0_18, %c0_19] : memref<2x4x256xf32, #tpu.memory_space<vmem>>, vector<2x4x256xf32>
    %12 = vector.shape_cast %6 : vector<4x1xf32> to vector<1x4x1xf32>
    %13 = vector.broadcast %12 : vector<1x4x1xf32> to vector<2x4x256xf32>
    %14 = arith.mulf %11, %13 : vector<2x4x256xf32>
    %15 = vector.shape_cast %7 : vector<4x1xf32> to vector<1x4x1xf32>
    %16 = vector.broadcast %15 : vector<1x4x1xf32> to vector<2x4x256xf32>
    %17 = arith.addf %14, %16 : vector<2x4x256xf32>
    %cst_20 = arith.constant 0.000000e+00 : f32
    %18 = vector.broadcast %cst_20 : f32 to vector<2x4x256xf32>
    %19 = arith.maximumf %17, %18 : vector<2x4x256xf32>
    %20 = vector.extract_strided_slice %19 {offsets = [0, 0, 0], sizes = [1, 4, 256], strides = [1, 1, 1]} : vector<2x4x256xf32> to vector<1x4x256xf32>
    %21 = vector.shape_cast %20 : vector<1x4x256xf32> to vector<4x256xf32>
    %c0_21 = arith.constant 0 : index
    %c128 = arith.constant 128 : index
    %22 = vector.load %arg14[%c0_21, %c128] : memref<8x896xf32, #tpu.memory_space<vmem>>, vector<4x256xf32>
    tpu.vector_store %arg14[%c0_21, %c128], %21 {strides = array<i32>} : memref<8x896xf32, #tpu.memory_space<vmem>>, vector<4x256xf32>,
    %23 = vector.extract_strided_slice %19 {offsets = [1, 0, 0], sizes = [1, 4, 256], strides = [1, 1, 1]} : vector<2x4x256xf32> to vector<1x4x256xf32>
    %24 = vector.shape_cast %23 : vector<1x4x256xf32> to vector<4x256xf32>
    %c0_22 = arith.constant 0 : index
    %c512 = arith.constant 512 : index
    %25 = vector.load %arg14[%c0_22, %c512] : memref<8x896xf32, #tpu.memory_space<vmem>>, vector<4x256xf32>
    tpu.vector_store %arg14[%c0_22, %c512], %24 {strides = array<i32>} : memref<8x896xf32, #tpu.memory_space<vmem>>, vector<4x256xf32>,
    %c0_23 = arith.constant 0 : index
    %c111 = arith.constant 111 : index
    %26 = vector.load %arg14[%c0_23, %c111] : memref<8x896xf32, #tpu.memory_space<vmem>>, vector<4x640xf32>
    %c0_24 = arith.constant 0 : index
    %c0_25 = arith.constant 0 : index
    %c0_26 = arith.constant 0 : index
    %27 = vector.load %arg2[%c0_24, %c0_25, %c0_26] : memref<9x8x4xf32, #tpu.memory_space<vmem>>, vector<1x8x4xf32>
    %28 = vector.shape_cast %27 : vector<1x8x4xf32> to vector<8x4xf32>
    %cst_27 = arith.constant dense<0.000000e+00> : vector<8x640xf32>
    %29 = tpu.matmul %28, %26, %cst_27 {dimension_numbers = #tpu.dot_dimension_numbers<[1], [0], [0], [1], [0, 0, 1, 1], [], []>} : vector<8x4xf32>, vector<4x640xf32>, vector<8x640xf32> -> vector<8x640xf32>
    %c0_28 = arith.constant 0 : index
    %c127 = arith.constant 127 : index
    %30 = vector.load %arg14[%c0_28, %c127] : memref<8x896xf32, #tpu.memory_space<vmem>>, vector<4x640xf32>
    %c3 = arith.constant 3 : index
    %c0_29 = arith.constant 0 : index
    %c0_30 = arith.constant 0 : index
    %31 = vector.load %arg2[%c3, %c0_29, %c0_30] : memref<9x8x4xf32, #tpu.memory_space<vmem>>, vector<1x8x4xf32>
    %32 = vector.shape_cast %31 : vector<1x8x4xf32> to vector<8x4xf32>
    %cst_31 = arith.constant dense<0.000000e+00> : vector<8x640xf32>
    %33 = tpu.matmul %32, %30, %cst_31 {dimension_numbers = #tpu.dot_dimension_numbers<[1], [0], [0], [1], [0, 0, 1, 1], [], []>} : vector<8x4xf32>, vector<4x640xf32>, vector<8x640xf32> -> vector<8x640xf32>
    %34 = arith.addf %29, %33 : vector<8x640xf32>
    %c0_32 = arith.constant 0 : index
    %c143 = arith.constant 143 : index
    %35 = vector.load %arg14[%c0_32, %c143] : memref<8x896xf32, #tpu.memory_space<vmem>>, vector<4x640xf32>
    %c6 = arith.constant 6 : index
    %c0_33 = arith.constant 0 : index
    %c0_34 = arith.constant 0 : index
    %36 = vector.load %arg2[%c6, %c0_33, %c0_34] : memref<9x8x4xf32, #tpu.memory_space<vmem>>, vector<1x8x4xf32>
    %37 = vector.shape_cast %36 : vector<1x8x4xf32> to vector<8x4xf32>
    %cst_35 = arith.constant dense<0.000000e+00> : vector<8x640xf32>
    %38 = tpu.matmul %37, %35, %cst_35 {dimension_numbers = #tpu.dot_dimension_numbers<[1], [0], [0], [1], [0, 0, 1, 1], [], []>} : vector<8x4xf32>, vector<4x640xf32>, vector<8x640xf32> -> vector<8x640xf32>
    %39 = arith.addf %34, %38 : vector<8x640xf32>
    %40 = vector.broadcast %4 : vector<1x640xf32> to vector<8x640xf32>
    %41 = arith.mulf %39, %40 : vector<8x640xf32>
    %c0_36 = arith.constant 0 : index
    %c112 = arith.constant 112 : index
    %42 = vector.load %arg14[%c0_36, %c112] : memref<8x896xf32, #tpu.memory_space<vmem>>, vector<4x640xf32>
    %c1 = arith.constant 1 : index
    %c0_37 = arith.constant 0 : index
    %c0_38 = arith.constant 0 : index
    %43 = vector.load %arg2[%c1, %c0_37, %c0_38] : memref<9x8x4xf32, #tpu.memory_space<vmem>>, vector<1x8x4xf32>
    %44 = vector.shape_cast %43 : vector<1x8x4xf32> to vector<8x4xf32>
    %cst_39 = arith.constant dense<0.000000e+00> : vector<8x640xf32>
    %45 = tpu.matmul %44, %42, %cst_39 {dimension_numbers = #tpu.dot_dimension_numbers<[1], [0], [0], [1], [0, 0, 1, 1], [], []>} : vector<8x4xf32>, vector<4x640xf32>, vector<8x640xf32> -> vector<8x640xf32>
    %c0_40 = arith.constant 0 : index
    %c128_41 = arith.constant 128 : index
    %46 = vector.load %arg14[%c0_40, %c128_41] : memref<8x896xf32, #tpu.memory_space<vmem>>, vector<4x640xf32>
    %c4 = arith.constant 4 : index
    %c0_42 = arith.constant 0 : index
    %c0_43 = arith.constant 0 : index
    %47 = vector.load %arg2[%c4, %c0_42, %c0_43] : memref<9x8x4xf32, #tpu.memory_space<vmem>>, vector<1x8x4xf32>
    %48 = vector.shape_cast %47 : vector<1x8x4xf32> to vector<8x4xf32>
    %cst_44 = arith.constant dense<0.000000e+00> : vector<8x640xf32>
    %49 = tpu.matmul %48, %46, %cst_44 {dimension_numbers = #tpu.dot_dimension_numbers<[1], [0], [0], [1], [0, 0, 1, 1], [], []>} : vector<8x4xf32>, vector<4x640xf32>, vector<8x640xf32> -> vector<8x640xf32>
    %50 = arith.addf %45, %49 : vector<8x640xf32>
    %c0_45 = arith.constant 0 : index
    %c144 = arith.constant 144 : index
    %51 = vector.load %arg14[%c0_45, %c144] : memref<8x896xf32, #tpu.memory_space<vmem>>, vector<4x640xf32>
    %c7 = arith.constant 7 : index
    %c0_46 = arith.constant 0 : index
    %c0_47 = arith.constant 0 : index
    %52 = vector.load %arg2[%c7, %c0_46, %c0_47] : memref<9x8x4xf32, #tpu.memory_space<vmem>>, vector<1x8x4xf32>
    %53 = vector.shape_cast %52 : vector<1x8x4xf32> to vector<8x4xf32>
    %cst_48 = arith.constant dense<0.000000e+00> : vector<8x640xf32>
    %54 = tpu.matmul %53, %51, %cst_48 {dimension_numbers = #tpu.dot_dimension_numbers<[1], [0], [0], [1], [0, 0, 1, 1], [], []>} : vector<8x4xf32>, vector<4x640xf32>, vector<8x640xf32> -> vector<8x640xf32>
    %55 = arith.addf %50, %54 : vector<8x640xf32>
    %c0_49 = arith.constant 0 : index
    %c113 = arith.constant 113 : index
    %56 = vector.load %arg14[%c0_49, %c113] : memref<8x896xf32, #tpu.memory_space<vmem>>, vector<4x640xf32>
    %c2 = arith.constant 2 : index
    %c0_50 = arith.constant 0 : index
    %c0_51 = arith.constant 0 : index
    %57 = vector.load %arg2[%c2, %c0_50, %c0_51] : memref<9x8x4xf32, #tpu.memory_space<vmem>>, vector<1x8x4xf32>
    %58 = vector.shape_cast %57 : vector<1x8x4xf32> to vector<8x4xf32>
    %cst_52 = arith.constant dense<0.000000e+00> : vector<8x640xf32>
    %59 = tpu.matmul %58, %56, %cst_52 {dimension_numbers = #tpu.dot_dimension_numbers<[1], [0], [0], [1], [0, 0, 1, 1], [], []>} : vector<8x4xf32>, vector<4x640xf32>, vector<8x640xf32> -> vector<8x640xf32>
    %c0_53 = arith.constant 0 : index
    %c129 = arith.constant 129 : index
    %60 = vector.load %arg14[%c0_53, %c129] : memref<8x896xf32, #tpu.memory_space<vmem>>, vector<4x640xf32>
    %c5 = arith.constant 5 : index
    %c0_54 = arith.constant 0 : index
    %c0_55 = arith.constant 0 : index
    %61 = vector.load %arg2[%c5, %c0_54, %c0_55] : memref<9x8x4xf32, #tpu.memory_space<vmem>>, vector<1x8x4xf32>
    %62 = vector.shape_cast %61 : vector<1x8x4xf32> to vector<8x4xf32>
    %cst_56 = arith.constant dense<0.000000e+00> : vector<8x640xf32>
    %63 = tpu.matmul %62, %60, %cst_56 {dimension_numbers = #tpu.dot_dimension_numbers<[1], [0], [0], [1], [0, 0, 1, 1], [], []>} : vector<8x4xf32>, vector<4x640xf32>, vector<8x640xf32> -> vector<8x640xf32>
    %64 = arith.addf %59, %63 : vector<8x640xf32>
    %c0_57 = arith.constant 0 : index
    %c145 = arith.constant 145 : index
    %65 = vector.load %arg14[%c0_57, %c145] : memref<8x896xf32, #tpu.memory_space<vmem>>, vector<4x640xf32>
    %c8 = arith.constant 8 : index
    %c0_58 = arith.constant 0 : index
    %c0_59 = arith.constant 0 : index
    %66 = vector.load %arg2[%c8, %c0_58, %c0_59] : memref<9x8x4xf32, #tpu.memory_space<vmem>>, vector<1x8x4xf32>
    %67 = vector.shape_cast %66 : vector<1x8x4xf32> to vector<8x4xf32>
    %cst_60 = arith.constant dense<0.000000e+00> : vector<8x640xf32>
    %68 = tpu.matmul %67, %65, %cst_60 {dimension_numbers = #tpu.dot_dimension_numbers<[1], [0], [0], [1], [0, 0, 1, 1], [], []>} : vector<8x4xf32>, vector<4x640xf32>, vector<8x640xf32> -> vector<8x640xf32>
    %69 = arith.addf %64, %68 : vector<8x640xf32>
    %70 = vector.broadcast %5 : vector<1x640xf32> to vector<8x640xf32>
    %71 = arith.mulf %69, %70 : vector<8x640xf32>
    %72 = arith.addf %41, %55 : vector<8x640xf32>
    %73 = arith.addf %72, %71 : vector<8x640xf32>
    %74 = vector.broadcast %8 : vector<8x1xf32> to vector<8x640xf32>
    %75 = arith.mulf %73, %74 : vector<8x640xf32>
    %76 = vector.broadcast %9 : vector<8x1xf32> to vector<8x640xf32>
    %77 = arith.addf %75, %76 : vector<8x640xf32>
    %cst_61 = arith.constant 0.000000e+00 : f32
    %78 = vector.broadcast %cst_61 : f32 to vector<8x640xf32>
    %79 = arith.maximumf %77, %78 : vector<8x640xf32>
    %80 = vector.extract_strided_slice %79 {offsets = [0, 0], sizes = [8, 256], strides = [1, 1]} : vector<8x640xf32> to vector<8x256xf32>
    %c0_62 = arith.constant 0 : index
    %c128_63 = arith.constant 128 : index
    %81 = vector.load %arg14[%c0_62, %c128_63] : memref<8x896xf32, #tpu.memory_space<vmem>>, vector<8x256xf32>
    tpu.vector_store %arg14[%c0_62, %c128_63], %80 {strides = array<i32>} : memref<8x896xf32, #tpu.memory_space<vmem>>, vector<8x256xf32>,
    %82 = vector.extract_strided_slice %79 {offsets = [0, 384], sizes = [8, 256], strides = [1, 1]} : vector<8x640xf32> to vector<8x256xf32>
    %c0_64 = arith.constant 0 : index
    %c512_65 = arith.constant 512 : index
    %83 = vector.load %arg14[%c0_64, %c512_65] : memref<8x896xf32, #tpu.memory_space<vmem>>, vector<8x256xf32>
    tpu.vector_store %arg14[%c0_64, %c512_65], %82 {strides = array<i32>} : memref<8x896xf32, #tpu.memory_space<vmem>>, vector<8x256xf32>,
    %c0_66 = arith.constant 0 : index
    %c111_67 = arith.constant 111 : index
    %84 = vector.load %arg14[%c0_66, %c111_67] : memref<8x896xf32, #tpu.memory_space<vmem>>, vector<8x640xf32>
    %c0_68 = arith.constant 0 : index
    %c0_69 = arith.constant 0 : index
    %c0_70 = arith.constant 0 : index
    %85 = vector.load %arg3[%c0_68, %c0_69, %c0_70] : memref<9x8x8xf32, #tpu.memory_space<vmem>>, vector<1x8x8xf32>
    %86 = vector.shape_cast %85 : vector<1x8x8xf32> to vector<8x8xf32>
    %cst_71 = arith.constant dense<0.000000e+00> : vector<8x640xf32>
    %87 = tpu.matmul %86, %84, %cst_71 {dimension_numbers = #tpu.dot_dimension_numbers<[1], [0], [0], [1], [0, 0, 1, 1], [], []>} : vector<8x8xf32>, vector<8x640xf32>, vector<8x640xf32> -> vector<8x640xf32>
    %c0_72 = arith.constant 0 : index
    %c127_73 = arith.constant 127 : index
    %88 = vector.load %arg14[%c0_72, %c127_73] : memref<8x896xf32, #tpu.memory_space<vmem>>, vector<8x640xf32>
    %c3_74 = arith.constant 3 : index
    %c0_75 = arith.constant 0 : index
    %c0_76 = arith.constant 0 : index
    %89 = vector.load %arg3[%c3_74, %c0_75, %c0_76] : memref<9x8x8xf32, #tpu.memory_space<vmem>>, vector<1x8x8xf32>
    %90 = vector.shape_cast %89 : vector<1x8x8xf32> to vector<8x8xf32>
    %cst_77 = arith.constant dense<0.000000e+00> : vector<8x640xf32>
    %91 = tpu.matmul %90, %88, %cst_77 {dimension_numbers = #tpu.dot_dimension_numbers<[1], [0], [0], [1], [0, 0, 1, 1], [], []>} : vector<8x8xf32>, vector<8x640xf32>, vector<8x640xf32> -> vector<8x640xf32>
    %92 = arith.addf %87, %91 : vector<8x640xf32>
    %c0_78 = arith.constant 0 : index
    %c143_79 = arith.constant 143 : index
    %93 = vector.load %arg14[%c0_78, %c143_79] : memref<8x896xf32, #tpu.memory_space<vmem>>, vector<8x640xf32>
    %c6_80 = arith.constant 6 : index
    %c0_81 = arith.constant 0 : index
    %c0_82 = arith.constant 0 : index
    %94 = vector.load %arg3[%c6_80, %c0_81, %c0_82] : memref<9x8x8xf32, #tpu.memory_space<vmem>>, vector<1x8x8xf32>
    %95 = vector.shape_cast %94 : vector<1x8x8xf32> to vector<8x8xf32>
    %cst_83 = arith.constant dense<0.000000e+00> : vector<8x640xf32>
    %96 = tpu.matmul %95, %93, %cst_83 {dimension_numbers = #tpu.dot_dimension_numbers<[1], [0], [0], [1], [0, 0, 1, 1], [], []>} : vector<8x8xf32>, vector<8x640xf32>, vector<8x640xf32> -> vector<8x640xf32>
    %97 = arith.addf %92, %96 : vector<8x640xf32>
    %98 = vector.broadcast %4 : vector<1x640xf32> to vector<8x640xf32>
    %99 = arith.mulf %97, %98 : vector<8x640xf32>
    %c0_84 = arith.constant 0 : index
    %c112_85 = arith.constant 112 : index
    %100 = vector.load %arg14[%c0_84, %c112_85] : memref<8x896xf32, #tpu.memory_space<vmem>>, vector<8x640xf32>
    %c1_86 = arith.constant 1 : index
    %c0_87 = arith.constant 0 : index
    %c0_88 = arith.constant 0 : index
    %101 = vector.load %arg3[%c1_86, %c0_87, %c0_88] : memref<9x8x8xf32, #tpu.memory_space<vmem>>, vector<1x8x8xf32>
    %102 = vector.shape_cast %101 : vector<1x8x8xf32> to vector<8x8xf32>
    %cst_89 = arith.constant dense<0.000000e+00> : vector<8x640xf32>
    %103 = tpu.matmul %102, %100, %cst_89 {dimension_numbers = #tpu.dot_dimension_numbers<[1], [0], [0], [1], [0, 0, 1, 1], [], []>} : vector<8x8xf32>, vector<8x640xf32>, vector<8x640xf32> -> vector<8x640xf32>
    %c0_90 = arith.constant 0 : index
    %c128_91 = arith.constant 128 : index
    %104 = vector.load %arg14[%c0_90, %c128_91] : memref<8x896xf32, #tpu.memory_space<vmem>>, vector<8x640xf32>
    %c4_92 = arith.constant 4 : index
    %c0_93 = arith.constant 0 : index
    %c0_94 = arith.constant 0 : index
    %105 = vector.load %arg3[%c4_92, %c0_93, %c0_94] : memref<9x8x8xf32, #tpu.memory_space<vmem>>, vector<1x8x8xf32>
    %106 = vector.shape_cast %105 : vector<1x8x8xf32> to vector<8x8xf32>
    %cst_95 = arith.constant dense<0.000000e+00> : vector<8x640xf32>
    %107 = tpu.matmul %106, %104, %cst_95 {dimension_numbers = #tpu.dot_dimension_numbers<[1], [0], [0], [1], [0, 0, 1, 1], [], []>} : vector<8x8xf32>, vector<8x640xf32>, vector<8x640xf32> -> vector<8x640xf32>
    %108 = arith.addf %103, %107 : vector<8x640xf32>
    %c0_96 = arith.constant 0 : index
    %c144_97 = arith.constant 144 : index
    %109 = vector.load %arg14[%c0_96, %c144_97] : memref<8x896xf32, #tpu.memory_space<vmem>>, vector<8x640xf32>
    %c7_98 = arith.constant 7 : index
    %c0_99 = arith.constant 0 : index
    %c0_100 = arith.constant 0 : index
    %110 = vector.load %arg3[%c7_98, %c0_99, %c0_100] : memref<9x8x8xf32, #tpu.memory_space<vmem>>, vector<1x8x8xf32>
    %111 = vector.shape_cast %110 : vector<1x8x8xf32> to vector<8x8xf32>
    %cst_101 = arith.constant dense<0.000000e+00> : vector<8x640xf32>
    %112 = tpu.matmul %111, %109, %cst_101 {dimension_numbers = #tpu.dot_dimension_numbers<[1], [0], [0], [1], [0, 0, 1, 1], [], []>} : vector<8x8xf32>, vector<8x640xf32>, vector<8x640xf32> -> vector<8x640xf32>
    %113 = arith.addf %108, %112 : vector<8x640xf32>
    %c0_102 = arith.constant 0 : index
    %c113_103 = arith.constant 113 : index
    %114 = vector.load %arg14[%c0_102, %c113_103] : memref<8x896xf32, #tpu.memory_space<vmem>>, vector<8x640xf32>
    %c2_104 = arith.constant 2 : index
    %c0_105 = arith.constant 0 : index
    %c0_106 = arith.constant 0 : index
    %115 = vector.load %arg3[%c2_104, %c0_105, %c0_106] : memref<9x8x8xf32, #tpu.memory_space<vmem>>, vector<1x8x8xf32>
    %116 = vector.shape_cast %115 : vector<1x8x8xf32> to vector<8x8xf32>
    %cst_107 = arith.constant dense<0.000000e+00> : vector<8x640xf32>
    %117 = tpu.matmul %116, %114, %cst_107 {dimension_numbers = #tpu.dot_dimension_numbers<[1], [0], [0], [1], [0, 0, 1, 1], [], []>} : vector<8x8xf32>, vector<8x640xf32>, vector<8x640xf32> -> vector<8x640xf32>
    %c0_108 = arith.constant 0 : index
    %c129_109 = arith.constant 129 : index
    %118 = vector.load %arg14[%c0_108, %c129_109] : memref<8x896xf32, #tpu.memory_space<vmem>>, vector<8x640xf32>
    %c5_110 = arith.constant 5 : index
    %c0_111 = arith.constant 0 : index
    %c0_112 = arith.constant 0 : index
    %119 = vector.load %arg3[%c5_110, %c0_111, %c0_112] : memref<9x8x8xf32, #tpu.memory_space<vmem>>, vector<1x8x8xf32>
    %120 = vector.shape_cast %119 : vector<1x8x8xf32> to vector<8x8xf32>
    %cst_113 = arith.constant dense<0.000000e+00> : vector<8x640xf32>
    %121 = tpu.matmul %120, %118, %cst_113 {dimension_numbers = #tpu.dot_dimension_numbers<[1], [0], [0], [1], [0, 0, 1, 1], [], []>} : vector<8x8xf32>, vector<8x640xf32>, vector<8x640xf32> -> vector<8x640xf32>
    %122 = arith.addf %117, %121 : vector<8x640xf32>
    %c0_114 = arith.constant 0 : index
    %c145_115 = arith.constant 145 : index
    %123 = vector.load %arg14[%c0_114, %c145_115] : memref<8x896xf32, #tpu.memory_space<vmem>>, vector<8x640xf32>
    %c8_116 = arith.constant 8 : index
    %c0_117 = arith.constant 0 : index
    %c0_118 = arith.constant 0 : index
    %124 = vector.load %arg3[%c8_116, %c0_117, %c0_118] : memref<9x8x8xf32, #tpu.memory_space<vmem>>, vector<1x8x8xf32>
    %125 = vector.shape_cast %124 : vector<1x8x8xf32> to vector<8x8xf32>
    %cst_119 = arith.constant dense<0.000000e+00> : vector<8x640xf32>
    %126 = tpu.matmul %125, %123, %cst_119 {dimension_numbers = #tpu.dot_dimension_numbers<[1], [0], [0], [1], [0, 0, 1, 1], [], []>} : vector<8x8xf32>, vector<8x640xf32>, vector<8x640xf32> -> vector<8x640xf32>
    %127 = arith.addf %122, %126 : vector<8x640xf32>
    %128 = vector.broadcast %5 : vector<1x640xf32> to vector<8x640xf32>
    %129 = arith.mulf %127, %128 : vector<8x640xf32>
    %130 = arith.addf %99, %113 : vector<8x640xf32>
    %131 = arith.addf %130, %129 : vector<8x640xf32>
    %c0_120 = arith.constant 0 : index
    %c0_121 = arith.constant 0 : index
    %132 = vector.load %arg4[%c0_120, %c0_121] : memref<8x4xf32, #tpu.memory_space<vmem>>, vector<8x4xf32>
    %c0_122 = arith.constant 0 : index
    %c0_123 = arith.constant 0 : index
    %c0_124 = arith.constant 0 : index
    %133 = vector.load %arg1[%c0_122, %c0_123, %c0_124] : memref<2x4x256xf32, #tpu.memory_space<vmem>>, vector<1x4x256xf32>
    %134 = vector.shape_cast %133 : vector<1x4x256xf32> to vector<4x256xf32>
    %cst_125 = arith.constant dense<0.000000e+00> : vector<8x256xf32>
    %135 = tpu.matmul %132, %134, %cst_125 {dimension_numbers = #tpu.dot_dimension_numbers<[1], [0], [0], [1], [0, 0, 1, 1], [], []>} : vector<8x4xf32>, vector<4x256xf32>, vector<8x256xf32> -> vector<8x256xf32>
    %136 = vector.extract_strided_slice %131 {offsets = [0, 0], sizes = [8, 256], strides = [1, 1]} : vector<8x640xf32> to vector<8x256xf32>
    %137 = arith.addf %136, %135 : vector<8x256xf32>
    %138 = vector.broadcast %10 : vector<8x1xf32> to vector<8x256xf32>
    %139 = arith.addf %137, %138 : vector<8x256xf32>
    %c0_126 = arith.constant 0 : index
    %c0_127 = arith.constant 0 : index
    %c0_128 = arith.constant 0 : index
    %140 = vector.load %arg13[%c0_126, %c0_127, %c0_128] : memref<2x8x256xf32, #tpu.memory_space<vmem>>, vector<1x8x256xf32>
    %141 = vector.shape_cast %140 : vector<1x8x256xf32> to vector<8x256xf32>
    %142 = vector.shape_cast %139 : vector<8x256xf32> to vector<1x8x256xf32>
    tpu.vector_store %arg13[%c0_126, %c0_127, %c0_128], %142 {strides = array<i32>} : memref<2x8x256xf32, #tpu.memory_space<vmem>>, vector<1x8x256xf32>,
    %c1_129 = arith.constant 1 : index
    %c0_130 = arith.constant 0 : index
    %c0_131 = arith.constant 0 : index
    %143 = vector.load %arg1[%c1_129, %c0_130, %c0_131] : memref<2x4x256xf32, #tpu.memory_space<vmem>>, vector<1x4x256xf32>
    %144 = vector.shape_cast %143 : vector<1x4x256xf32> to vector<4x256xf32>
    %cst_132 = arith.constant dense<0.000000e+00> : vector<8x256xf32>
    %145 = tpu.matmul %132, %144, %cst_132 {dimension_numbers = #tpu.dot_dimension_numbers<[1], [0], [0], [1], [0, 0, 1, 1], [], []>} : vector<8x4xf32>, vector<4x256xf32>, vector<8x256xf32> -> vector<8x256xf32>
    %146 = vector.extract_strided_slice %131 {offsets = [0, 384], sizes = [8, 256], strides = [1, 1]} : vector<8x640xf32> to vector<8x256xf32>
    %147 = arith.addf %146, %145 : vector<8x256xf32>
    %148 = vector.broadcast %10 : vector<8x1xf32> to vector<8x256xf32>
    %149 = arith.addf %147, %148 : vector<8x256xf32>
    %c1_133 = arith.constant 1 : index
    %c0_134 = arith.constant 0 : index
    %c0_135 = arith.constant 0 : index
    %150 = vector.load %arg13[%c1_133, %c0_134, %c0_135] : memref<2x8x256xf32, #tpu.memory_space<vmem>>, vector<1x8x256xf32>
    %151 = vector.shape_cast %150 : vector<1x8x256xf32> to vector<8x256xf32>
    %152 = vector.shape_cast %149 : vector<8x256xf32> to vector<1x8x256xf32>
    tpu.vector_store %arg13[%c1_133, %c0_134, %c0_135], %152 {strides = array<i32>} : memref<2x8x256xf32, #tpu.memory_space<vmem>>, vector<1x8x256xf32>,
    return
  }
  func.func @transform_0(%arg0: i32) -> (i32, i32, i32) {
    %c0_i32 = arith.constant 0 : i32
    %c0_i32_0 = arith.constant 0 : i32
    %c0_i32_1 = arith.constant 0 : i32
    return %arg0, %c0_i32, %c0_i32_0 : i32, i32, i32
  }
  func.func @transform_1(%arg0: i32) -> (i32, i32, i32) {
    %c0_i32 = arith.constant 0 : i32
    %c0_i32_0 = arith.constant 0 : i32
    %c0_i32_1 = arith.constant 0 : i32
    %c0_i32_2 = arith.constant 0 : i32
    return %c0_i32, %c0_i32_0, %c0_i32_1 : i32, i32, i32
  }
  func.func @transform_2(%arg0: i32) -> (i32, i32, i32) {
    %c0_i32 = arith.constant 0 : i32
    %c0_i32_0 = arith.constant 0 : i32
    %c0_i32_1 = arith.constant 0 : i32
    %c0_i32_2 = arith.constant 0 : i32
    return %c0_i32, %c0_i32_0, %c0_i32_1 : i32, i32, i32
  }
  func.func @transform_3(%arg0: i32) -> (i32, i32) {
    %c0_i32 = arith.constant 0 : i32
    %c0_i32_0 = arith.constant 0 : i32
    %c0_i32_1 = arith.constant 0 : i32
    return %c0_i32, %c0_i32_0 : i32, i32
  }
  func.func @transform_4(%arg0: i32) -> (i32, i32) {
    %c0_i32 = arith.constant 0 : i32
    %c0_i32_0 = arith.constant 0 : i32
    %c0_i32_1 = arith.constant 0 : i32
    return %c0_i32, %c0_i32_0 : i32, i32
  }
  func.func @transform_5(%arg0: i32) -> (i32, i32) {
    %c0_i32 = arith.constant 0 : i32
    %c0_i32_0 = arith.constant 0 : i32
    %c0_i32_1 = arith.constant 0 : i32
    return %c0_i32, %c0_i32_0 : i32, i32
  }
  func.func @transform_6(%arg0: i32) -> (i32, i32) {
    %c0_i32 = arith.constant 0 : i32
    %c0_i32_0 = arith.constant 0 : i32
    %c0_i32_1 = arith.constant 0 : i32
    return %c0_i32, %c0_i32_0 : i32, i32
  }
  func.func @transform_7(%arg0: i32) -> (i32, i32) {
    %c0_i32 = arith.constant 0 : i32
    %c0_i32_0 = arith.constant 0 : i32
    %c0_i32_1 = arith.constant 0 : i32
    return %c0_i32, %c0_i32_0 : i32, i32
  }
  func.func @transform_8(%arg0: i32) -> (i32, i32) {
    %c0_i32 = arith.constant 0 : i32
    %c0_i32_0 = arith.constant 0 : i32
    %c0_i32_1 = arith.constant 0 : i32
    return %c0_i32, %c0_i32_0 : i32, i32
  }
  func.func @transform_9(%arg0: i32) -> (i32, i32) {
    %c0_i32 = arith.constant 0 : i32
    %c0_i32_0 = arith.constant 0 : i32
    %c0_i32_1 = arith.constant 0 : i32
    return %c0_i32, %c0_i32_0 : i32, i32
  }
  func.func @transform_10(%arg0: i32) -> (i32, i32) {
    %c0_i32 = arith.constant 0 : i32
    %c0_i32_0 = arith.constant 0 : i32
    %c0_i32_1 = arith.constant 0 : i32
    return %c0_i32, %c0_i32_0 : i32, i32
  }
  func.func @transform_11(%arg0: i32) -> (i32, i32) {
    %c0_i32 = arith.constant 0 : i32
    %c0_i32_0 = arith.constant 0 : i32
    %c0_i32_1 = arith.constant 0 : i32
    return %c0_i32, %c0_i32_0 : i32, i32
  }
  func.func @transform_12(%arg0: i32) -> (i32, i32, i32) {
    %c0_i32 = arith.constant 0 : i32
    %c0_i32_0 = arith.constant 0 : i32
    %c0_i32_1 = arith.constant 0 : i32
    return %arg0, %c0_i32, %c0_i32_0 : i32, i32, i32
  }
}

</mosaic_0001>

<llo_original>
// kernel: tpu_custom_call.1
$region0: #{tpu_custom_call.1}
  #allocation0 [shape = 'u32[]', space=smem, size = 0x4, offset = 0x4, fixed_abs, tag = 'smem constant byte address 0x4 - core index']
  #allocation1 [shape = 'u32[144,128]{1,0:T(1,128)}', space=vmem, size = 0x12000, scoped, tag = 'internal scratch']
  #allocation2 [shape = 'f32[8,896]{1,0:T(8,128)}', space=vmem, size = 0x7000, scoped, tag = 'scratch operand']
  %s0 = inlined_call_operand.vmem [shape: f32[2,4,256], index: 0, kind: input, shape index: {}]
  %s1 = inlined_call_operand.vmem [shape: f32[9,8,4], index: 1, kind: input, shape index: {}]
  %s2 = inlined_call_operand.vmem [shape: f32[9,8,8], index: 2, kind: input, shape index: {}]
  %s3 = inlined_call_operand.vmem [shape: f32[8,4], index: 3, kind: input, shape index: {}]
  %s4 = inlined_call_operand.vmem [shape: f32[4,1], index: 4, kind: input, shape index: {}]
  %s5 = inlined_call_operand.vmem [shape: f32[4,1], index: 5, kind: input, shape index: {}]
  %s6 = inlined_call_operand.vmem [shape: f32[8,1], index: 6, kind: input, shape index: {}]
  %s7 = inlined_call_operand.vmem [shape: f32[8,1], index: 7, kind: input, shape index: {}]
  %s8 = inlined_call_operand.vmem [shape: f32[8,1], index: 8, kind: input, shape index: {}]
  %s9 = inlined_call_operand.vmem [shape: f32[1,640], index: 9, kind: input, shape index: {}]
  %s10 = inlined_call_operand.vmem [shape: f32[1,640], index: 10, kind: input, shape index: {}]
  %s11 = inlined_call_operand.vmem [shape: f32[1,256], index: 11, kind: input, shape index: {}]
  %s12 = inlined_call_operand.hbm [shape: f32[2,8,256], index: 12, kind: output, shape index: {}]
  %s13 = sld [smem:[#allocation0]]
  $region58: #{tpu_custom_call.1} parent=0
    _
  %s15 = ssub.s32 1, %s13
  %s16 = scalar_select 0, %s15, %s13
  $region1: #{tpu_custom_call.1} parent=0
    #allocation3 [shape = 'u8[16384]{0}', space=vmem, size = 0x4000, scoped, tag = 'output window, operand 0, single buffered']
    #allocation4 [shape = 's32[1]{0}', space=sflag, size = 0x4, scoped, tag = 'scoped memory for tpu_custom_call.1']
    %17 = vsyncpa [#allocation4], 0
    // Predicated region
    $region2: #{tpu_custom_call.1} parent=1 // pred_check
      _
    $region3: #{tpu_custom_call.1} parent=1 // pred_check_branch
      %19 = sbr.rel (0) target = $region5
    $region4: #{tpu_custom_call.1} parent=1 // pred_region
      _
    $region5: #{tpu_custom_call.1} parent=1 // pred_fallthru
      _
    // Predicated region
    $region6: #{tpu_custom_call.1} parent=1 // pred_check
      _
    $region7: #{tpu_custom_call.1} parent=1 // pred_check_branch
      %21 = sbr.rel (0) target = $region9
    $region8: #{tpu_custom_call.1} parent=1 // pred_region
      _
    $region9: #{tpu_custom_call.1} parent=1 // pred_fallthru
      _
    // Predicated region
    $region10: #{tpu_custom_call.1} parent=1 // pred_check
      _
    $region11: #{tpu_custom_call.1} parent=1 // pred_check_branch
      %23 = sbr.rel (0) target = $region13
    $region12: #{tpu_custom_call.1} parent=1 // pred_region
      _
    $region13: #{tpu_custom_call.1} parent=1 // pred_fallthru
      _
    // Predicated region
    $region14: #{tpu_custom_call.1} parent=1 // pred_check
      _
    $region15: #{tpu_custom_call.1} parent=1 // pred_check_branch
      %25 = sbr.rel (0) target = $region17
    $region16: #{tpu_custom_call.1} parent=1 // pred_region
      _
    $region17: #{tpu_custom_call.1} parent=1 // pred_fallthru
      _
    // Predicated region
    $region18: #{tpu_custom_call.1} parent=1 // pred_check
      _
    $region19: #{tpu_custom_call.1} parent=1 // pred_check_branch
      %27 = sbr.rel (0) target = $region21
    $region20: #{tpu_custom_call.1} parent=1 // pred_region
      _
    $region21: #{tpu_custom_call.1} parent=1 // pred_fallthru
      _
    // Predicated region
    $region22: #{tpu_custom_call.1} parent=1 // pred_check
      _
    $region23: #{tpu_custom_call.1} parent=1 // pred_check_branch
      %29 = sbr.rel (0) target = $region25
    $region24: #{tpu_custom_call.1} parent=1 // pred_region
      _
    $region25: #{tpu_custom_call.1} parent=1 // pred_fallthru
      _
    // Predicated region
    $region26: #{tpu_custom_call.1} parent=1 // pred_check
      _
    $region27: #{tpu_custom_call.1} parent=1 // pred_check_branch
      %31 = sbr.rel (0) target = $region29
    $region28: #{tpu_custom_call.1} parent=1 // pred_region
      _
    $region29: #{tpu_custom_call.1} parent=1 // pred_fallthru
      _
    // Predicated region
    $region30: #{tpu_custom_call.1} parent=1 // pred_check
      _
    $region31: #{tpu_custom_call.1} parent=1 // pred_check_branch
      %33 = sbr.rel (0) target = $region33
    $region32: #{tpu_custom_call.1} parent=1 // pred_region
      _
    $region33: #{tpu_custom_call.1} parent=1 // pred_fallthru
      _
    // Predicated region
    $region34: #{tpu_custom_call.1} parent=1 // pred_check
      _
    $region35: #{tpu_custom_call.1} parent=1 // pred_check_branch
      %35 = sbr.rel (0) target = $region37
    $region36: #{tpu_custom_call.1} parent=1 // pred_region
      _
    $region37: #{tpu_custom_call.1} parent=1 // pred_fallthru
      _
    // Predicated region
    $region38: #{tpu_custom_call.1} parent=1 // pred_check
      _
    $region39: #{tpu_custom_call.1} parent=1 // pred_check_branch
      %37 = sbr.rel (0) target = $region41
    $region40: #{tpu_custom_call.1} parent=1 // pred_region
      _
    $region41: #{tpu_custom_call.1} parent=1 // pred_fallthru
      _
    // Predicated region
    $region42: #{tpu_custom_call.1} parent=1 // pred_check
      _
    $region43: #{tpu_custom_call.1} parent=1 // pred_check_branch
      %39 = sbr.rel (0) target = $region45
    $region44: #{tpu_custom_call.1} parent=1 // pred_region
      _
    $region45: #{tpu_custom_call.1} parent=1 // pred_fallthru
      _
    // Predicated region
    $region46: #{tpu_custom_call.1} parent=1 // pred_check
      _
    $region47: #{tpu_custom_call.1} parent=1 // pred_check_branch
      %41 = sbr.rel (0) target = $region49
    $region48: #{tpu_custom_call.1} parent=1 // pred_region
      _
    $region49: #{tpu_custom_call.1} parent=1 // pred_fallthru
      _
    %42 = vst [vmem:[#allocation2] sm:$0xff] 0.0
    %43 = vst [vmem:[#allocation2 + $0x18] sm:$0xff] 0.0
    %44 = vst [vmem:[#allocation2 + $0x30] sm:$0xff] 0.0
    %v45 = vld [vmem:[%s9] sm:$0x1f]
    %v46 = vld [vmem:[%s10] sm:$0x1f]
    %v47 = vld [vmem:[%s4] sm:$0xf]
    %v48 = vld [vmem:[%s5] sm:$0xf]
    %v49 = vld [vmem:[%s6] sm:$0xff]
    %v50 = vld [vmem:[%s7] sm:$0xff]
    %v51 = vld [vmem:[%s8] sm:$0xff]
    %v52 = vld [vmem:[%s0] sm:$0xff]
    %v53 = vld [vmem:[%s0 + $0x8] sm:$0xff]
    %55 = vset.pattern.permute.xlu0 0
    %56 = vperm.xlu0 %55, %v47
    %v57 = vpop.permute.xlu0 %56
    %v59 = vunpack.c.l.s4 839922192
    %v60 = vunpack.c.0.s8 %v59
    %v61 = vlaneseq
    %v62 = vshrl.u32 %v61, 7
    %v63 = vsub.s32 %v60, %v62
    %v64 = vrot.slane %v57, %v63
    %v66 = vmul.f32 %v52, %v64
    %v67 = vmul.f32 %v53, %v64
    %69 = vset.pattern.permute.xlu0 0
    %70 = vperm.xlu0 %69, %v48
    %v71 = vpop.permute.xlu0 %70
    %v73 = vunpack.c.l.s4 839922192
    %v74 = vunpack.c.0.s8 %v73
    %v75 = vlaneseq
    %v76 = vshrl.u32 %v75, 7
    %v77 = vsub.s32 %v74, %v76
    %v78 = vrot.slane %v71, %v77
    %v80 = vadd.f32 %v66, %v78
    %v81 = vadd.f32 %v67, %v78
    %v82 = vmax.f32 %v80, 0.0
    %v83 = vmax.f32 %v81, 0.0
    %v85 = vcombine.high %v82, %v82
    %87 = vst [vmem:[#allocation2 + $0x8] sm:$0xf] %v82
    %88 = vst [vmem:[#allocation2 + $0x10] sm:$0xf] %v85
    %v90 = vcombine.high %v83, %v83
    %92 = vst [vmem:[#allocation2 + $0x20] sm:$0xf] %v83
    %93 = vst [vmem:[#allocation2 + $0x28] sm:$0xf] %v90
    %v94 = vld [vmem:[#allocation2] sm:$0xf]
    %v95 = vld [vmem:[#allocation2 + $0x8] sm:$0xf]
    %v96 = vld [vmem:[#allocation2 + $0x10] sm:$0xf]
    %v97 = vld [vmem:[#allocation2 + $0x18] sm:$0xf]
    %v98 = vld [vmem:[#allocation2 + $0x20] sm:$0xf]
    %v99 = vld [vmem:[#allocation2 + $0x28] sm:$0xf]
    %v100 = vld [vmem:[%s1] sm:$0xff]
    %s101 = scalar_lea.vmem %s1, 24
    %v102 = vld [vmem:[%s101] sm:$0xff]
    %109 = vrot.lane.b32.xlu0 %v94, 1
    %v110 = vpop.permute.xlu0 %109
    %111 = vrot.lane.b32.xlu0 %v95, 1
    %v112 = vpop.permute.xlu0 %111
    %113 = vrot.lane.b32.xlu0 %v96, 1
    %v114 = vpop.permute.xlu0 %113
    %115 = vrot.lane.b32.xlu0 %v97, 1
    %v116 = vpop.permute.xlu0 %115
    %117 = vrot.lane.b32.xlu0 %v98, 1
    %v118 = vpop.permute.xlu0 %117
    %119 = vrot.lane.b32.xlu0 %v99, 1
    %v120 = vpop.permute.xlu0 %119
    %vm121 = vcmask 7168
    %v122 = vsel %vm121, %v110, %v112
    %v123 = vsel %vm121, %v112, %v114
    %v124 = vsel %vm121, %v114, %v116
    %v125 = vsel %vm121, %v116, %v118
    %v126 = vsel %vm121, %v118, %v120
    %vm127 = vcmask 31744
    %v129 = vsel %vm127, %v102, 0
    %vm131 = vcmask 1043456
    %v132 = vsel %vm131, %v122, 0
    %v134 = vsel %vm131, %v123, 0
    %v136 = vsel %vm131, %v124, 0
    %v138 = vsel %vm131, %v125, 0
    %v140 = vsel %vm131, %v126, 0
    %142 = vmatprep.subr.mxu0 %v134
    %143 = vmatpush1.msra.mxu0 %v132
    %144 = vmatprep.subr.mxu0 0.0
    %145 = vmatpush1.msra.mxu0 0.0
    %146 = vmatprep.subr.mxu0 0.0
    %147 = vmatpush1.msra.mxu0 0.0
    %148 = vmatprep.subr.mxu0 0.0
    %149 = vmatpush1.msra.mxu0 0.0
    %150 = vmatprep.subr.mxu0 0.0
    %151 = vmatpush1.msra.mxu0 0.0
    %152 = vmatprep.subr.mxu0 0.0
    %153 = vmatpush1.msra.mxu0 0.0
    %154 = vmatprep.subr.mxu0 0.0
    %155 = vmatpush1.msra.mxu0 0.0
    %156 = vmatprep.subr.mxu0 0.0
    %157 = vmatpush1.msra.mxu0 0.0
    %158 = vmatprep.subr.mxu0 0.0
    %159 = vmatpush1.msra.mxu0 0.0
    %160 = vmatprep.subr.mxu0 0.0
    %161 = vmatpush1.msra.mxu0 0.0
    %162 = vmatprep.subr.mxu0 0.0
    %163 = vmatpush1.msra.mxu0 0.0
    %164 = vmatprep.subr.mxu0 0.0
    %165 = vmatpush1.msra.mxu0 0.0
    %166 = vmatprep.subr.mxu0 0.0
    %167 = vmatpush1.msra.mxu0 0.0
    %168 = vmatprep.subr.mxu0 0.0
    %169 = vmatpush1.msra.mxu0 0.0
    %170 = vmatprep.subr.mxu0 0.0
    %171 = vmatpush1.msra.mxu0 0.0
    %172 = vmatprep.subr.mxu0 0.0
    %173 = vmatpush1.msra.mxu0 0.0
    %174 = vmatprep.subr.mxu0 0.0
    %175 = vmatpush1.msra.mxu0 0.0
    %176 = vmatprep.subr.mxu0 0.0
    %177 = vmatpush1.msra.mxu0 0.0
    %178 = vmatprep.subr.mxu0 0.0
    %179 = vmatpush1.msra.mxu0 0.0
    %180 = vmatprep.subr.mxu0 0.0
    %181 = vmatpush1.msra.mxu0 0.0
    %182 = vmatprep.subr.mxu0 0.0
    %183 = vmatpush1.msra.mxu0 0.0
    %184 = vmatprep.subr.mxu0 0.0
    %185 = vmatpush1.msra.mxu0 0.0
    %186 = vmatprep.subr.mxu0 0.0
    %187 = vmatpush1.msra.mxu0 0.0
    %188 = vmatprep.subr.mxu0 0.0
    %189 = vmatpush1.msra.mxu0 0.0
    %190 = vmatprep.subr.mxu0 0.0
    %191 = vmatpush1.msra.mxu0 0.0
    %192 = vmatprep.subr.mxu0 0.0
    %193 = vmatpush1.msra.mxu0 0.0
    %194 = vmatprep.subr.mxu0 0.0
    %195 = vmatpush1.msra.mxu0 0.0
    %196 = vmatprep.subr.mxu0 0.0
    %197 = vmatpush1.msra.mxu0 0.0
    %198 = vmatprep.subr.mxu0 0.0
    %199 = vmatpush1.msra.mxu0 0.0
    %200 = vmatprep.subr.mxu0 0.0
    %201 = vmatpush1.msra.mxu0 0.0
    %202 = vmatprep.subr.mxu0 0.0
    %203 = vmatpush1.msra.mxu0 0.0
    %204 = vmatprep.subr.mxu0 0.0
    %205 = vmatpush1.msra.mxu0 0.0
    %206 = vmatprep.mubr.f32.mxu0 0.0
    %207 = vmatmul.mubr.f32.gmra.mrb[0].mxu0 %v129
    %v208 = vpop.f32.mrb[0].mxu0
    %v209 = vadd.f32 0.0, %v208
    %v210 = vpop.f32.mrb[0].mxu0
    %v211 = vadd.f32 0.0, %v210
    %212 = vdwg.mxu0
    %213 = vmatprep.subr.mxu0 %v138
    %214 = vmatpush1.msra.mxu0 %v136
    %215 = vmatprep.subr.mxu0 0.0
    %216 = vmatpush1.msra.mxu0 0.0
    %217 = vmatprep.subr.mxu0 0.0
    %218 = vmatpush1.msra.mxu0 0.0
    %219 = vmatprep.subr.mxu0 0.0
    %220 = vmatpush1.msra.mxu0 0.0
    %221 = vmatprep.subr.mxu0 0.0
    %222 = vmatpush1.msra.mxu0 0.0
    %223 = vmatprep.subr.mxu0 0.0
    %224 = vmatpush1.msra.mxu0 0.0
    %225 = vmatprep.subr.mxu0 0.0
    %226 = vmatpush1.msra.mxu0 0.0
    %227 = vmatprep.subr.mxu0 0.0
    %228 = vmatpush1.msra.mxu0 0.0
    %229 = vmatprep.subr.mxu0 0.0
    %230 = vmatpush1.msra.mxu0 0.0
    %231 = vmatprep.subr.mxu0 0.0
    %232 = vmatpush1.msra.mxu0 0.0
    %233 = vmatprep.subr.mxu0 0.0
    %234 = vmatpush1.msra.mxu0 0.0
    %235 = vmatprep.subr.mxu0 0.0
    %236 = vmatpush1.msra.mxu0 0.0
    %237 = vmatprep.subr.mxu0 0.0
    %238 = vmatpush1.msra.mxu0 0.0
    %239 = vmatprep.subr.mxu0 0.0
    %240 = vmatpush1.msra.mxu0 0.0
    %241 = vmatprep.subr.mxu0 0.0
    %242 = vmatpush1.msra.mxu0 0.0
    %243 = vmatprep.subr.mxu0 0.0
    %244 = vmatpush1.msra.mxu0 0.0
    %245 = vmatprep.subr.mxu0 0.0
    %246 = vmatpush1.msra.mxu0 0.0
    %247 = vmatprep.subr.mxu0 0.0
    %248 = vmatpush1.msra.mxu0 0.0
    %249 = vmatprep.subr.mxu0 0.0
    %250 = vmatpush1.msra.mxu0 0.0
    %251 = vmatprep.subr.mxu0 0.0
    %252 = vmatpush1.msra.mxu0 0.0
    %253 = vmatprep.subr.mxu0 0.0
    %254 = vmatpush1.msra.mxu0 0.0
    %255 = vmatprep.subr.mxu0 0.0
    %256 = vmatpush1.msra.mxu0 0.0
    %257 = vmatprep.subr.mxu0 0.0
    %258 = vmatpush1.msra.mxu0 0.0
    %259 = vmatprep.subr.mxu0 0.0
    %260 = vmatpush1.msra.mxu0 0.0
    %261 = vmatprep.subr.mxu0 0.0
    %262 = vmatpush1.msra.mxu0 0.0
    %263 = vmatprep.subr.mxu0 0.0
    %264 = vmatpush1.msra.mxu0 0.0
    %265 = vmatprep.subr.mxu0 0.0
    %266 = vmatpush1.msra.mxu0 0.0
    %267 = vmatprep.subr.mxu0 0.0
    %268 = vmatpush1.msra.mxu0 0.0
    %269 = vmatprep.subr.mxu0 0.0
    %270 = vmatpush1.msra.mxu0 0.0
    %271 = vmatprep.subr.mxu0 0.0
    %272 = vmatpush1.msra.mxu0 0.0
    %273 = vmatprep.subr.mxu0 0.0
    %274 = vmatpush1.msra.mxu0 0.0
    %275 = vmatprep.subr.mxu0 0.0
    %276 = vmatpush1.msra.mxu0 0.0
    %277 = vmatprep.mubr.f32.mxu0 0.0
    %278 = vmatmul.mubr.f32.gmra.mrb[0].mxu0 %v129
    %v279 = vpop.f32.mrb[0].mxu0
    %v280 = vpop.f32.mrb[0].mxu0
    %v281 = vadd.f32 0.0, %v280
    %282 = vdwg.mxu0
    %283 = vmatprep.subr.mxu0 0.0
    %284 = vmatpush1.msra.mxu0 %v140
    %285 = vmatprep.subr.mxu0 0.0
    %286 = vmatpush1.msra.mxu0 0.0
    %287 = vmatprep.subr.mxu0 0.0
    %288 = vmatpush1.msra.mxu0 0.0
    %289 = vmatprep.subr.mxu0 0.0
    %290 = vmatpush1.msra.mxu0 0.0
    %291 = vmatprep.subr.mxu0 0.0
    %292 = vmatpush1.msra.mxu0 0.0
    %293 = vmatprep.subr.mxu0 0.0
    %294 = vmatpush1.msra.mxu0 0.0
    %295 = vmatprep.subr.mxu0 0.0
    %296 = vmatpush1.msra.mxu0 0.0
    %297 = vmatprep.subr.mxu0 0.0
    %298 = vmatpush1.msra.mxu0 0.0
    %299 = vmatprep.subr.mxu0 0.0
    %300 = vmatpush1.msra.mxu0 0.0
    %301 = vmatprep.subr.mxu0 0.0
    %302 = vmatpush1.msra.mxu0 0.0
    %303 = vmatprep.subr.mxu0 0.0
    %304 = vmatpush1.msra.mxu0 0.0
    %305 = vmatprep.subr.mxu0 0.0
    %306 = vmatpush1.msra.mxu0 0.0
    %307 = vmatprep.subr.mxu0 0.0
    %308 = vmatpush1.msra.mxu0 0.0
    %309 = vmatprep.subr.mxu0 0.0
    %310 = vmatpush1.msra.mxu0 0.0
    %311 = vmatprep.subr.mxu0 0.0
    %312 = vmatpush1.msra.mxu0 0.0
    %313 = vmatprep.subr.mxu0 0.0
    %314 = vmatpush1.msra.mxu0 0.0
    %315 = vmatprep.subr.mxu0 0.0
    %316 = vmatpush1.msra.mxu0 0.0
    %317 = vmatprep.subr.mxu0 0.0
    %318 = vmatpush1.msra.mxu0 0.0
    %319 = vmatprep.subr.mxu0 0.0
    %320 = vmatpush1.msra.mxu0 0.0
    %321 = vmatprep.subr.mxu0 0.0
    %322 = vmatpush1.msra.mxu0 0.0
    %323 = vmatprep.subr.mxu0 0.0
    %324 = vmatpush1.msra.mxu0 0.0
    %325 = vmatprep.subr.mxu0 0.0
    %326 = vmatpush1.msra.mxu0 0.0
    %327 = vmatprep.subr.mxu0 0.0
    %328 = vmatpush1.msra.mxu0 0.0
    %329 = vmatprep.subr.mxu0 0.0
    %330 = vmatpush1.msra.mxu0 0.0
    %331 = vmatprep.subr.mxu0 0.0
    %332 = vmatpush1.msra.mxu0 0.0
    %333 = vmatprep.subr.mxu0 0.0
    %334 = vmatpush1.msra.mxu0 0.0
    %335 = vmatprep.subr.mxu0 0.0
    %336 = vmatpush1.msra.mxu0 0.0
    %337 = vmatprep.subr.mxu0 0.0
    %338 = vmatpush1.msra.mxu0 0.0
    %339 = vmatprep.subr.mxu0 0.0
    %340 = vmatpush1.msra.mxu0 0.0
    %341 = vmatprep.subr.mxu0 0.0
    %342 = vmatpush1.msra.mxu0 0.0
    %343 = vmatprep.subr.mxu0 0.0
    %344 = vmatpush1.msra.mxu0 0.0
    %345 = vmatprep.subr.mxu0 0.0
    %346 = vmatpush1.msra.mxu0 0.0
    %347 = vmatprep.mubr.f32.mxu0 0.0
    %348 = vmatmul.mubr.f32.gmra.mrb[0].mxu0 %v129
    %v349 = vpop.f32.mrb[0].mxu0
    %v350 = vadd.f32 0.0, %v349
    %v351 = vpop.f32.mrb[0].mxu0
    %352 = vdwg.mxu0
    %353 = vrot.lane.b32.xlu0 %v94, 17
    %v354 = vpop.permute.xlu0 %353
    %355 = vrot.lane.b32.xlu0 %v95, 17
    %v356 = vpop.permute.xlu0 %355
    %357 = vrot.lane.b32.xlu0 %v96, 17
    %v358 = vpop.permute.xlu0 %357
    %359 = vrot.lane.b32.xlu0 %v97, 17
    %v360 = vpop.permute.xlu0 %359
    %361 = vrot.lane.b32.xlu0 %v98, 17
    %v362 = vpop.permute.xlu0 %361
    %363 = vrot.lane.b32.xlu0 %v99, 17
    %v364 = vpop.permute.xlu0 %363
    %vm365 = vcmask 138240
    %v366 = vsel %vm365, %v354, %v356
    %v367 = vsel %vm365, %v356, %v358
    %v368 = vsel %vm365, %v358, %v360
    %v369 = vsel %vm365, %v360, %v362
    %v370 = vsel %vm365, %v362, %v364
    %v372 = vsel %vm127, %v100, 0
    %v374 = vsel %vm131, %v366, 0
    %v376 = vsel %vm131, %v367, 0
    %v378 = vsel %vm131, %v368, 0
    %v380 = vsel %vm131, %v369, 0
    %v382 = vsel %vm131, %v370, 0
    %384 = vmatprep.subr.mxu0 %v376
    %385 = vmatpush1.msra.mxu0 %v374
    %386 = vmatprep.subr.mxu0 0.0
    %387 = vmatpush1.msra.mxu0 0.0
    %388 = vmatprep.subr.mxu0 0.0
    %389 = vmatpush1.msra.mxu0 0.0
    %390 = vmatprep.subr.mxu0 0.0
    %391 = vmatpush1.msra.mxu0 0.0
    %392 = vmatprep.subr.mxu0 0.0
    %393 = vmatpush1.msra.mxu0 0.0
    %394 = vmatprep.subr.mxu0 0.0
    %395 = vmatpush1.msra.mxu0 0.0
    %396 = vmatprep.subr.mxu0 0.0
    %397 = vmatpush1.msra.mxu0 0.0
    %398 = vmatprep.subr.mxu0 0.0
    %399 = vmatpush1.msra.mxu0 0.0
    %400 = vmatprep.subr.mxu0 0.0
    %401 = vmatpush1.msra.mxu0 0.0
    %402 = vmatprep.subr.mxu0 0.0
    %403 = vmatpush1.msra.mxu0 0.0
    %404 = vmatprep.subr.mxu0 0.0
    %405 = vmatpush1.msra.mxu0 0.0
    %406 = vmatprep.subr.mxu0 0.0
    %407 = vmatpush1.msra.mxu0 0.0
    %408 = vmatprep.subr.mxu0 0.0
    %409 = vmatpush1.msra.mxu0 0.0
    %410 = vmatprep.subr.mxu0 0.0
    %411 = vmatpush1.msra.mxu0 0.0
    %412 = vmatprep.subr.mxu0 0.0
    %413 = vmatpush1.msra.mxu0 0.0
    %414 = vmatprep.subr.mxu0 0.0
    %415 = vmatpush1.msra.mxu0 0.0
    %416 = vmatprep.subr.mxu0 0.0
    %417 = vmatpush1.msra.mxu0 0.0
    %418 = vmatprep.subr.mxu0 0.0
    %419 = vmatpush1.msra.mxu0 0.0
    %420 = vmatprep.subr.mxu0 0.0
    %421 = vmatpush1.msra.mxu0 0.0
    %422 = vmatprep.subr.mxu0 0.0
    %423 = vmatpush1.msra.mxu0 0.0
    %424 = vmatprep.subr.mxu0 0.0
    %425 = vmatpush1.msra.mxu0 0.0
    %426 = vmatprep.subr.mxu0 0.0
    %427 = vmatpush1.msra.mxu0 0.0
    %428 = vmatprep.subr.mxu0 0.0
    %429 = vmatpush1.msra.mxu0 0.0
    %430 = vmatprep.subr.mxu0 0.0
    %431 = vmatpush1.msra.mxu0 0.0
    %432 = vmatprep.subr.mxu0 0.0
    %433 = vmatpush1.msra.mxu0 0.0
    %434 = vmatprep.subr.mxu0 0.0
    %435 = vmatpush1.msra.mxu0 0.0
    %436 = vmatprep.subr.mxu0 0.0
    %437 = vmatpush1.msra.mxu0 0.0
    %438 = vmatprep.subr.mxu0 0.0
    %439 = vmatpush1.msra.mxu0 0.0
    %440 = vmatprep.subr.mxu0 0.0
    %441 = vmatpush1.msra.mxu0 0.0
    %442 = vmatprep.subr.mxu0 0.0
    %443 = vmatpush1.msra.mxu0 0.0
    %444 = vmatprep.subr.mxu0 0.0
    %445 = vmatpush1.msra.mxu0 0.0
    %446 = vmatprep.subr.mxu0 0.0
    %447 = vmatpush1.msra.mxu0 0.0
    %448 = vmatprep.mubr.f32.mxu0 0.0
    %449 = vmatmul.mubr.f32.gmra.mrb[0].mxu0 %v372
    %v450 = vpop.f32.mrb[0].mxu0
    %v451 = vadd.f32 %v209, %v450
    %v452 = vpop.f32.mrb[0].mxu0
    %v453 = vadd.f32 %v211, %v452
    %454 = vdwg.mxu0
    %455 = vmatprep.subr.mxu0 %v380
    %456 = vmatpush1.msra.mxu0 %v378
    %457 = vmatprep.subr.mxu0 0.0
    %458 = vmatpush1.msra.mxu0 0.0
    %459 = vmatprep.subr.mxu0 0.0
    %460 = vmatpush1.msra.mxu0 0.0
    %461 = vmatprep.subr.mxu0 0.0
    %462 = vmatpush1.msra.mxu0 0.0
    %463 = vmatprep.subr.mxu0 0.0
    %464 = vmatpush1.msra.mxu0 0.0
    %465 = vmatprep.subr.mxu0 0.0
    %466 = vmatpush1.msra.mxu0 0.0
    %467 = vmatprep.subr.mxu0 0.0
    %468 = vmatpush1.msra.mxu0 0.0
    %469 = vmatprep.subr.mxu0 0.0
    %470 = vmatpush1.msra.mxu0 0.0
    %471 = vmatprep.subr.mxu0 0.0
    %472 = vmatpush1.msra.mxu0 0.0
    %473 = vmatprep.subr.mxu0 0.0
    %474 = vmatpush1.msra.mxu0 0.0
    %475 = vmatprep.subr.mxu0 0.0
    %476 = vmatpush1.msra.mxu0 0.0
    %477 = vmatprep.subr.mxu0 0.0
    %478 = vmatpush1.msra.mxu0 0.0
    %479 = vmatprep.subr.mxu0 0.0
    %480 = vmatpush1.msra.mxu0 0.0
    %481 = vmatprep.subr.mxu0 0.0
    %482 = vmatpush1.msra.mxu0 0.0
    %483 = vmatprep.subr.mxu0 0.0
    %484 = vmatpush1.msra.mxu0 0.0
    %485 = vmatprep.subr.mxu0 0.0
    %486 = vmatpush1.msra.mxu0 0.0
    %487 = vmatprep.subr.mxu0 0.0
    %488 = vmatpush1.msra.mxu0 0.0
    %489 = vmatprep.subr.mxu0 0.0
    %490 = vmatpush1.msra.mxu0 0.0
    %491 = vmatprep.subr.mxu0 0.0
    %492 = vmatpush1.msra.mxu0 0.0
    %493 = vmatprep.subr.mxu0 0.0
    %494 = vmatpush1.msra.mxu0 0.0
    %495 = vmatprep.subr.mxu0 0.0
    %496 = vmatpush1.msra.mxu0 0.0
    %497 = vmatprep.subr.mxu0 0.0
    %498 = vmatpush1.msra.mxu0 0.0
    %499 = vmatprep.subr.mxu0 0.0
    %500 = vmatpush1.msra.mxu0 0.0
    %501 = vmatprep.subr.mxu0 0.0
    %502 = vmatpush1.msra.mxu0 0.0
    %503 = vmatprep.subr.mxu0 0.0
    %504 = vmatpush1.msra.mxu0 0.0
    %505 = vmatprep.subr.mxu0 0.0
    %506 = vmatpush1.msra.mxu0 0.0
    %507 = vmatprep.subr.mxu0 0.0
    %508 = vmatpush1.msra.mxu0 0.0
    %509 = vmatprep.subr.mxu0 0.0
    %510 = vmatpush1.msra.mxu0 0.0
    %511 = vmatprep.subr.mxu0 0.0
    %512 = vmatpush1.msra.mxu0 0.0
    %513 = vmatprep.subr.mxu0 0.0
    %514 = vmatpush1.msra.mxu0 0.0
    %515 = vmatprep.subr.mxu0 0.0
    %516 = vmatpush1.msra.mxu0 0.0
    %517 = vmatprep.subr.mxu0 0.0
    %518 = vmatpush1.msra.mxu0 0.0
    %519 = vmatprep.mubr.f32.mxu0 0.0
    %520 = vmatmul.mubr.f32.gmra.mrb[0].mxu0 %v372
    %v521 = vpop.f32.mrb[0].mxu0
    %v522 = vpop.f32.mrb[0].mxu0
    %v523 = vadd.f32 %v281, %v522
    %524 = vdwg.mxu0
    %525 = vmatprep.subr.mxu0 0.0
    %526 = vmatpush1.msra.mxu0 %v382
    %527 = vmatprep.subr.mxu0 0.0
    %528 = vmatpush1.msra.mxu0 0.0
    %529 = vmatprep.subr.mxu0 0.0
    %530 = vmatpush1.msra.mxu0 0.0
    %531 = vmatprep.subr.mxu0 0.0
    %532 = vmatpush1.msra.mxu0 0.0
    %533 = vmatprep.subr.mxu0 0.0
    %534 = vmatpush1.msra.mxu0 0.0
    %535 = vmatprep.subr.mxu0 0.0
    %536 = vmatpush1.msra.mxu0 0.0
    %537 = vmatprep.subr.mxu0 0.0
    %538 = vmatpush1.msra.mxu0 0.0
    %539 = vmatprep.subr.mxu0 0.0
    %540 = vmatpush1.msra.mxu0 0.0
    %541 = vmatprep.subr.mxu0 0.0
    %542 = vmatpush1.msra.mxu0 0.0
    %543 = vmatprep.subr.mxu0 0.0
    %544 = vmatpush1.msra.mxu0 0.0
    %545 = vmatprep.subr.mxu0 0.0
    %546 = vmatpush1.msra.mxu0 0.0
    %547 = vmatprep.subr.mxu0 0.0
    %548 = vmatpush1.msra.mxu0 0.0
    %549 = vmatprep.subr.mxu0 0.0
    %550 = vmatpush1.msra.mxu0 0.0
    %551 = vmatprep.subr.mxu0 0.0
    %552 = vmatpush1.msra.mxu0 0.0
    %553 = vmatprep.subr.mxu0 0.0
    %554 = vmatpush1.msra.mxu0 0.0
    %555 = vmatprep.subr.mxu0 0.0
    %556 = vmatpush1.msra.mxu0 0.0
    %557 = vmatprep.subr.mxu0 0.0
    %558 = vmatpush1.msra.mxu0 0.0
    %559 = vmatprep.subr.mxu0 0.0
    %560 = vmatpush1.msra.mxu0 0.0
    %561 = vmatprep.subr.mxu0 0.0
    %562 = vmatpush1.msra.mxu0 0.0
    %563 = vmatprep.subr.mxu0 0.0
    %564 = vmatpush1.msra.mxu0 0.0
    %565 = vmatprep.subr.mxu0 0.0
    %566 = vmatpush1.msra.mxu0 0.0
    %567 = vmatprep.subr.mxu0 0.0
    %568 = vmatpush1.msra.mxu0 0.0
    %569 = vmatprep.subr.mxu0 0.0
    %570 = vmatpush1.msra.mxu0 0.0
    %571 = vmatprep.subr.mxu0 0.0
    %572 = vmatpush1.msra.mxu0 0.0
    %573 = vmatprep.subr.mxu0 0.0
    %574 = vmatpush1.msra.mxu0 0.0
    %575 = vmatprep.subr.mxu0 0.0
    %576 = vmatpush1.msra.mxu0 0.0
    %577 = vmatprep.subr.mxu0 0.0
    %578 = vmatpush1.msra.mxu0 0.0
    %579 = vmatprep.subr.mxu0 0.0
    %580 = vmatpush1.msra.mxu0 0.0
    %581 = vmatprep.subr.mxu0 0.0
    %582 = vmatpush1.msra.mxu0 0.0
    %583 = vmatprep.subr.mxu0 0.0
    %584 = vmatpush1.msra.mxu0 0.0
    %585 = vmatprep.subr.mxu0 0.0
    %586 = vmatpush1.msra.mxu0 0.0
    %587 = vmatprep.subr.mxu0 0.0
    %588 = vmatpush1.msra.mxu0 0.0
    %589 = vmatprep.mubr.f32.mxu0 0.0
    %590 = vmatmul.mubr.f32.gmra.mrb[0].mxu0 %v372
    %v591 = vpop.f32.mrb[0].mxu0
    %v592 = vadd.f32 %v350, %v591
    %v593 = vpop.f32.mrb[0].mxu0
    %594 = vdwg.mxu0
    %v595 = vld [vmem:[#allocation2 + $0x8] sm:$0xf]
    %v596 = vld [vmem:[#allocation2 + $0x10] sm:$0xf]
    %v597 = vld [vmem:[#allocation2 + $0x18] sm:$0xf]
    %v598 = vld [vmem:[#allocation2 + $0x20] sm:$0xf]
    %v599 = vld [vmem:[#allocation2 + $0x28] sm:$0xf]
    %v600 = vld [vmem:[#allocation2 + $0x30] sm:$0xf]
    %s601 = scalar_lea.vmem %s1, 48
    %v602 = vld [vmem:[%s601] sm:$0xff]
    %609 = vrot.lane.b32.xlu0 %v595, 113
    %v610 = vpop.permute.xlu0 %609
    %611 = vrot.lane.b32.xlu0 %v596, 113
    %v612 = vpop.permute.xlu0 %611
    %613 = vrot.lane.b32.xlu0 %v597, 113
    %v614 = vpop.permute.xlu0 %613
    %615 = vrot.lane.b32.xlu0 %v598, 113
    %v616 = vpop.permute.xlu0 %615
    %617 = vrot.lane.b32.xlu0 %v599, 113
    %v618 = vpop.permute.xlu0 %617
    %619 = vrot.lane.b32.xlu0 %v600, 113
    %v620 = vpop.permute.xlu0 %619
    %vm621 = vcmask 924672
    %v622 = vsel %vm621, %v610, %v612
    %v623 = vsel %vm621, %v612, %v614
    %v624 = vsel %vm621, %v614, %v616
    %v625 = vsel %vm621, %v616, %v618
    %v626 = vsel %vm621, %v618, %v620
    %v628 = vsel %vm127, %v602, 0
    %v630 = vsel %vm131, %v622, 0
    %v632 = vsel %vm131, %v623, 0
    %v634 = vsel %vm131, %v624, 0
    %v636 = vsel %vm131, %v625, 0
    %v638 = vsel %vm131, %v626, 0
    %640 = vmatprep.subr.mxu0 %v632
    %641 = vmatpush1.msra.mxu0 %v630
    %642 = vmatprep.subr.mxu0 0.0
    %643 = vmatpush1.msra.mxu0 0.0
    %644 = vmatprep.subr.mxu0 0.0
    %645 = vmatpush1.msra.mxu0 0.0
    %646 = vmatprep.subr.mxu0 0.0
    %647 = vmatpush1.msra.mxu0 0.0
    %648 = vmatprep.subr.mxu0 0.0
    %649 = vmatpush1.msra.mxu0 0.0
    %650 = vmatprep.subr.mxu0 0.0
    %651 = vmatpush1.msra.mxu0 0.0
    %652 = vmatprep.subr.mxu0 0.0
    %653 = vmatpush1.msra.mxu0 0.0
    %654 = vmatprep.subr.mxu0 0.0
    %655 = vmatpush1.msra.mxu0 0.0
    %656 = vmatprep.subr.mxu0 0.0
    %657 = vmatpush1.msra.mxu0 0.0
    %658 = vmatprep.subr.mxu0 0.0
    %659 = vmatpush1.msra.mxu0 0.0
    %660 = vmatprep.subr.mxu0 0.0
    %661 = vmatpush1.msra.mxu0 0.0
    %662 = vmatprep.subr.mxu0 0.0
    %663 = vmatpush1.msra.mxu0 0.0
    %664 = vmatprep.subr.mxu0 0.0
    %665 = vmatpush1.msra.mxu0 0.0
    %666 = vmatprep.subr.mxu0 0.0
    %667 = vmatpush1.msra.mxu0 0.0
    %668 = vmatprep.subr.mxu0 0.0
    %669 = vmatpush1.msra.mxu0 0.0
    %670 = vmatprep.subr.mxu0 0.0
    %671 = vmatpush1.msra.mxu0 0.0
    %672 = vmatprep.subr.mxu0 0.0
    %673 = vmatpush1.msra.mxu0 0.0
    %674 = vmatprep.subr.mxu0 0.0
    %675 = vmatpush1.msra.mxu0 0.0
    %676 = vmatprep.subr.mxu0 0.0
    %677 = vmatpush1.msra.mxu0 0.0
    %678 = vmatprep.subr.mxu0 0.0
    %679 = vmatpush1.msra.mxu0 0.0
    %680 = vmatprep.subr.mxu0 0.0
    %681 = vmatpush1.msra.mxu0 0.0
    %682 = vmatprep.subr.mxu0 0.0
    %683 = vmatpush1.msra.mxu0 0.0
    %684 = vmatprep.subr.mxu0 0.0
    %685 = vmatpush1.msra.mxu0 0.0
    %686 = vmatprep.subr.mxu0 0.0
    %687 = vmatpush1.msra.mxu0 0.0
    %688 = vmatprep.subr.mxu0 0.0
    %689 = vmatpush1.msra.mxu0 0.0
    %690 = vmatprep.subr.mxu0 0.0
    %691 = vmatpush1.msra.mxu0 0.0
    %692 = vmatprep.subr.mxu0 0.0
    %693 = vmatpush1.msra.mxu0 0.0
    %694 = vmatprep.subr.mxu0 0.0
    %695 = vmatpush1.msra.mxu0 0.0
    %696 = vmatprep.subr.mxu0 0.0
    %697 = vmatpush1.msra.mxu0 0.0
    %698 = vmatprep.subr.mxu0 0.0
    %699 = vmatpush1.msra.mxu0 0.0
    %700 = vmatprep.subr.mxu0 0.0
    %701 = vmatpush1.msra.mxu0 0.0
    %702 = vmatprep.subr.mxu0 0.0
    %703 = vmatpush1.msra.mxu0 0.0
    %704 = vmatprep.mubr.f32.mxu0 0.0
    %705 = vmatmul.mubr.f32.gmra.mrb[0].mxu0 %v628
    %v706 = vpop.f32.mrb[0].mxu0
    %v707 = vadd.f32 0.0, %v706
    %v708 = vpop.f32.mrb[0].mxu0
    %v709 = vadd.f32 0.0, %v708
    %710 = vdwg.mxu0
    %711 = vmatprep.subr.mxu0 %v636
    %712 = vmatpush1.msra.mxu0 %v634
    %713 = vmatprep.subr.mxu0 0.0
    %714 = vmatpush1.msra.mxu0 0.0
    %715 = vmatprep.subr.mxu0 0.0
    %716 = vmatpush1.msra.mxu0 0.0
    %717 = vmatprep.subr.mxu0 0.0
    %718 = vmatpush1.msra.mxu0 0.0
    %719 = vmatprep.subr.mxu0 0.0
    %720 = vmatpush1.msra.mxu0 0.0
    %721 = vmatprep.subr.mxu0 0.0
    %722 = vmatpush1.msra.mxu0 0.0
    %723 = vmatprep.subr.mxu0 0.0
    %724 = vmatpush1.msra.mxu0 0.0
    %725 = vmatprep.subr.mxu0 0.0
    %726 = vmatpush1.msra.mxu0 0.0
    %727 = vmatprep.subr.mxu0 0.0
    %728 = vmatpush1.msra.mxu0 0.0
    %729 = vmatprep.subr.mxu0 0.0
    %730 = vmatpush1.msra.mxu0 0.0
    %731 = vmatprep.subr.mxu0 0.0
    %732 = vmatpush1.msra.mxu0 0.0
    %733 = vmatprep.subr.mxu0 0.0
    %734 = vmatpush1.msra.mxu0 0.0
    %735 = vmatprep.subr.mxu0 0.0
    %736 = vmatpush1.msra.mxu0 0.0
    %737 = vmatprep.subr.mxu0 0.0
    %738 = vmatpush1.msra.mxu0 0.0
    %739 = vmatprep.subr.mxu0 0.0
    %740 = vmatpush1.msra.mxu0 0.0
    %741 = vmatprep.subr.mxu0 0.0
    %742 = vmatpush1.msra.mxu0 0.0
    %743 = vmatprep.subr.mxu0 0.0
    %744 = vmatpush1.msra.mxu0 0.0
    %745 = vmatprep.subr.mxu0 0.0
    %746 = vmatpush1.msra.mxu0 0.0
    %747 = vmatprep.subr.mxu0 0.0
    %748 = vmatpush1.msra.mxu0 0.0
    %749 = vmatprep.subr.mxu0 0.0
    %750 = vmatpush1.msra.mxu0 0.0
    %751 = vmatprep.subr.mxu0 0.0
    %752 = vmatpush1.msra.mxu0 0.0
    %753 = vmatprep.subr.mxu0 0.0
    %754 = vmatpush1.msra.mxu0 0.0
    %755 = vmatprep.subr.mxu0 0.0
    %756 = vmatpush1.msra.mxu0 0.0
    %757 = vmatprep.subr.mxu0 0.0
    %758 = vmatpush1.msra.mxu0 0.0
    %759 = vmatprep.subr.mxu0 0.0
    %760 = vmatpush1.msra.mxu0 0.0
    %761 = vmatprep.subr.mxu0 0.0
    %762 = vmatpush1.msra.mxu0 0.0
    %763 = vmatprep.subr.mxu0 0.0
    %764 = vmatpush1.msra.mxu0 0.0
    %765 = vmatprep.subr.mxu0 0.0
    %766 = vmatpush1.msra.mxu0 0.0
    %767 = vmatprep.subr.mxu0 0.0
    %768 = vmatpush1.msra.mxu0 0.0
    %769 = vmatprep.subr.mxu0 0.0
    %770 = vmatpush1.msra.mxu0 0.0
    %771 = vmatprep.subr.mxu0 0.0
    %772 = vmatpush1.msra.mxu0 0.0
    %773 = vmatprep.subr.mxu0 0.0
    %774 = vmatpush1.msra.mxu0 0.0
    %775 = vmatprep.mubr.f32.mxu0 0.0
    %776 = vmatmul.mubr.f32.gmra.mrb[0].mxu0 %v628
    %v777 = vpop.f32.mrb[0].mxu0
    %v778 = vpop.f32.mrb[0].mxu0
    %v779 = vadd.f32 0.0, %v778
    %780 = vdwg.mxu0
    %781 = vmatprep.subr.mxu0 0.0
    %782 = vmatpush1.msra.mxu0 %v638
    %783 = vmatprep.subr.mxu0 0.0
    %784 = vmatpush1.msra.mxu0 0.0
    %785 = vmatprep.subr.mxu0 0.0
    %786 = vmatpush1.msra.mxu0 0.0
    %787 = vmatprep.subr.mxu0 0.0
    %788 = vmatpush1.msra.mxu0 0.0
    %789 = vmatprep.subr.mxu0 0.0
    %790 = vmatpush1.msra.mxu0 0.0
    %791 = vmatprep.subr.mxu0 0.0
    %792 = vmatpush1.msra.mxu0 0.0
    %793 = vmatprep.subr.mxu0 0.0
    %794 = vmatpush1.msra.mxu0 0.0
    %795 = vmatprep.subr.mxu0 0.0
    %796 = vmatpush1.msra.mxu0 0.0
    %797 = vmatprep.subr.mxu0 0.0
    %798 = vmatpush1.msra.mxu0 0.0
    %799 = vmatprep.subr.mxu0 0.0
    %800 = vmatpush1.msra.mxu0 0.0
    %801 = vmatprep.subr.mxu0 0.0
    %802 = vmatpush1.msra.mxu0 0.0
    %803 = vmatprep.subr.mxu0 0.0
    %804 = vmatpush1.msra.mxu0 0.0
    %805 = vmatprep.subr.mxu0 0.0
    %806 = vmatpush1.msra.mxu0 0.0
    %807 = vmatprep.subr.mxu0 0.0
    %808 = vmatpush1.msra.mxu0 0.0
    %809 = vmatprep.subr.mxu0 0.0
    %810 = vmatpush1.msra.mxu0 0.0
    %811 = vmatprep.subr.mxu0 0.0
    %812 = vmatpush1.msra.mxu0 0.0
    %813 = vmatprep.subr.mxu0 0.0
    %814 = vmatpush1.msra.mxu0 0.0
    %815 = vmatprep.subr.mxu0 0.0
    %816 = vmatpush1.msra.mxu0 0.0
    %817 = vmatprep.subr.mxu0 0.0
    %818 = vmatpush1.msra.mxu0 0.0
    %819 = vmatprep.subr.mxu0 0.0
    %820 = vmatpush1.msra.mxu0 0.0
    %821 = vmatprep.subr.mxu0 0.0
    %822 = vmatpush1.msra.mxu0 0.0
    %823 = vmatprep.subr.mxu0 0.0
    %824 = vmatpush1.msra.mxu0 0.0
    %825 = vmatprep.subr.mxu0 0.0
    %826 = vmatpush1.msra.mxu0 0.0
    %827 = vmatprep.subr.mxu0 0.0
    %828 = vmatpush1.msra.mxu0 0.0
    %829 = vmatprep.subr.mxu0 0.0
    %830 = vmatpush1.msra.mxu0 0.0
    %831 = vmatprep.subr.mxu0 0.0
    %832 = vmatpush1.msra.mxu0 0.0
    %833 = vmatprep.subr.mxu0 0.0
    %834 = vmatpush1.msra.mxu0 0.0
    %835 = vmatprep.subr.mxu0 0.0
    %836 = vmatpush1.msra.mxu0 0.0
    %837 = vmatprep.subr.mxu0 0.0
    %838 = vmatpush1.msra.mxu0 0.0
    %839 = vmatprep.subr.mxu0 0.0
    %840 = vmatpush1.msra.mxu0 0.0
    %841 = vmatprep.subr.mxu0 0.0
    %842 = vmatpush1.msra.mxu0 0.0
    %843 = vmatprep.subr.mxu0 0.0
    %844 = vmatpush1.msra.mxu0 0.0
    %845 = vmatprep.mubr.f32.mxu0 0.0
    %846 = vmatmul.mubr.f32.gmra.mrb[0].mxu0 %v628
    %v847 = vpop.f32.mrb[0].mxu0
    %v848 = vadd.f32 0.0, %v847
    %v849 = vpop.f32.mrb[0].mxu0
    %850 = vdwg.mxu0
    %v851 = vadd.f32 %v451, %v707
    %v852 = vadd.f32 %v453, %v709
    %v853 = vadd.f32 %v523, %v779
    %v854 = vadd.f32 %v592, %v848
    %v856 = vlaneseq
    %v857 = vshrl.u32 %v856, 7
    %v858 = vsub.s32 0, %v857
    %v859 = vrot.slane %v45, %v858
    %v860 = vlaneseq
    %v861 = vshrl.u32 %v860, 7
    %v862 = vsub.s32 1, %v861
    %v863 = vrot.slane %v45, %v862
    %v864 = vlaneseq
    %v865 = vshrl.u32 %v864, 7
    %v866 = vsub.s32 3, %v865
    %v867 = vrot.slane %v45, %v866
    %v868 = vlaneseq
    %v869 = vshrl.u32 %v868, 7
    %v870 = vsub.s32 4, %v869
    %v871 = vrot.slane %v45, %v870
    %v876 = vmul.f32 %v851, %v859
    %v877 = vmul.f32 %v852, %v863
    %v878 = vmul.f32 %v853, %v867
    %v879 = vmul.f32 %v854, %v871
    %s880 = scalar_lea.vmem %s1, 8
    %v881 = vld [vmem:[%s880] sm:$0xff]
    %s882 = scalar_lea.vmem %s1, 32
    %v883 = vld [vmem:[%s882] sm:$0xff]
    %v885 = vsel %vm127, %v883, 0
    %v887 = vsel %vm131, %v95, 0
    %v889 = vsel %vm131, %v96, 0
    %v891 = vsel %vm131, %v97, 0
    %v893 = vsel %vm131, %v98, 0
    %v895 = vsel %vm131, %v99, 0
    %897 = vmatprep.subr.mxu0 %v889
    %898 = vmatpush1.msra.mxu0 %v887
    %899 = vmatprep.subr.mxu0 0.0
    %900 = vmatpush1.msra.mxu0 0.0
    %901 = vmatprep.subr.mxu0 0.0
    %902 = vmatpush1.msra.mxu0 0.0
    %903 = vmatprep.subr.mxu0 0.0
    %904 = vmatpush1.msra.mxu0 0.0
    %905 = vmatprep.subr.mxu0 0.0
    %906 = vmatpush1.msra.mxu0 0.0
    %907 = vmatprep.subr.mxu0 0.0
    %908 = vmatpush1.msra.mxu0 0.0
    %909 = vmatprep.subr.mxu0 0.0
    %910 = vmatpush1.msra.mxu0 0.0
    %911 = vmatprep.subr.mxu0 0.0
    %912 = vmatpush1.msra.mxu0 0.0
    %913 = vmatprep.subr.mxu0 0.0
    %914 = vmatpush1.msra.mxu0 0.0
    %915 = vmatprep.subr.mxu0 0.0
    %916 = vmatpush1.msra.mxu0 0.0
    %917 = vmatprep.subr.mxu0 0.0
    %918 = vmatpush1.msra.mxu0 0.0
    %919 = vmatprep.subr.mxu0 0.0
    %920 = vmatpush1.msra.mxu0 0.0
    %921 = vmatprep.subr.mxu0 0.0
    %922 = vmatpush1.msra.mxu0 0.0
    %923 = vmatprep.subr.mxu0 0.0
    %924 = vmatpush1.msra.mxu0 0.0
    %925 = vmatprep.subr.mxu0 0.0
    %926 = vmatpush1.msra.mxu0 0.0
    %927 = vmatprep.subr.mxu0 0.0
    %928 = vmatpush1.msra.mxu0 0.0
    %929 = vmatprep.subr.mxu0 0.0
    %930 = vmatpush1.msra.mxu0 0.0
    %931 = vmatprep.subr.mxu0 0.0
    %932 = vmatpush1.msra.mxu0 0.0
    %933 = vmatprep.subr.mxu0 0.0
    %934 = vmatpush1.msra.mxu0 0.0
    %935 = vmatprep.subr.mxu0 0.0
    %936 = vmatpush1.msra.mxu0 0.0
    %937 = vmatprep.subr.mxu0 0.0
    %938 = vmatpush1.msra.mxu0 0.0
    %939 = vmatprep.subr.mxu0 0.0
    %940 = vmatpush1.msra.mxu0 0.0
    %941 = vmatprep.subr.mxu0 0.0
    %942 = vmatpush1.msra.mxu0 0.0
    %943 = vmatprep.subr.mxu0 0.0
    %944 = vmatpush1.msra.mxu0 0.0
    %945 = vmatprep.subr.mxu0 0.0
    %946 = vmatpush1.msra.mxu0 0.0
    %947 = vmatprep.subr.mxu0 0.0
    %948 = vmatpush1.msra.mxu0 0.0
    %949 = vmatprep.subr.mxu0 0.0
    %950 = vmatpush1.msra.mxu0 0.0
    %951 = vmatprep.subr.mxu0 0.0
    %952 = vmatpush1.msra.mxu0 0.0
    %953 = vmatprep.subr.mxu0 0.0
    %954 = vmatpush1.msra.mxu0 0.0
    %955 = vmatprep.subr.mxu0 0.0
    %956 = vmatpush1.msra.mxu0 0.0
    %957 = vmatprep.subr.mxu0 0.0
    %958 = vmatpush1.msra.mxu0 0.0
    %959 = vmatprep.subr.mxu0 0.0
    %960 = vmatpush1.msra.mxu0 0.0
    %961 = vmatprep.mubr.f32.mxu0 0.0
    %962 = vmatmul.mubr.f32.gmra.mrb[0].mxu0 %v885
    %v963 = vpop.f32.mrb[0].mxu0
    %v964 = vadd.f32 0.0, %v963
    %v965 = vpop.f32.mrb[0].mxu0
    %v966 = vadd.f32 0.0, %v965
    %967 = vdwg.mxu0
    %968 = vmatprep.subr.mxu0 %v893
    %969 = vmatpush1.msra.mxu0 %v891
    %970 = vmatprep.subr.mxu0 0.0
    %971 = vmatpush1.msra.mxu0 0.0
    %972 = vmatprep.subr.mxu0 0.0
    %973 = vmatpush1.msra.mxu0 0.0
    %974 = vmatprep.subr.mxu0 0.0
    %975 = vmatpush1.msra.mxu0 0.0
    %976 = vmatprep.subr.mxu0 0.0
    %977 = vmatpush1.msra.mxu0 0.0
    %978 = vmatprep.subr.mxu0 0.0
    %979 = vmatpush1.msra.mxu0 0.0
    %980 = vmatprep.subr.mxu0 0.0
    %981 = vmatpush1.msra.mxu0 0.0
    %982 = vmatprep.subr.mxu0 0.0
    %983 = vmatpush1.msra.mxu0 0.0
    %984 = vmatprep.subr.mxu0 0.0
    %985 = vmatpush1.msra.mxu0 0.0
    %986 = vmatprep.subr.mxu0 0.0
    %987 = vmatpush1.msra.mxu0 0.0
    %988 = vmatprep.subr.mxu0 0.0
    %989 = vmatpush1.msra.mxu0 0.0
    %990 = vmatprep.subr.mxu0 0.0
    %991 = vmatpush1.msra.mxu0 0.0
    %992 = vmatprep.subr.mxu0 0.0
    %993 = vmatpush1.msra.mxu0 0.0
    %994 = vmatprep.subr.mxu0 0.0
    %995 = vmatpush1.msra.mxu0 0.0
    %996 = vmatprep.subr.mxu0 0.0
    %997 = vmatpush1.msra.mxu0 0.0
    %998 = vmatprep.subr.mxu0 0.0
    %999 = vmatpush1.msra.mxu0 0.0
    %1000 = vmatprep.subr.mxu0 0.0
    %1001 = vmatpush1.msra.mxu0 0.0
    %1002 = vmatprep.subr.mxu0 0.0
    %1003 = vmatpush1.msra.mxu0 0.0
    %1004 = vmatprep.subr.mxu0 0.0
    %1005 = vmatpush1.msra.mxu0 0.0
    %1006 = vmatprep.subr.mxu0 0.0
    %1007 = vmatpush1.msra.mxu0 0.0
    %1008 = vmatprep.subr.mxu0 0.0
    %1009 = vmatpush1.msra.mxu0 0.0
    %1010 = vmatprep.subr.mxu0 0.0
    %1011 = vmatpush1.msra.mxu0 0.0
    %1012 = vmatprep.subr.mxu0 0.0
    %1013 = vmatpush1.msra.mxu0 0.0
    %1014 = vmatprep.subr.mxu0 0.0
    %1015 = vmatpush1.msra.mxu0 0.0
    %1016 = vmatprep.subr.mxu0 0.0
    %1017 = vmatpush1.msra.mxu0 0.0
    %1018 = vmatprep.subr.mxu0 0.0
    %1019 = vmatpush1.msra.mxu0 0.0
    %1020 = vmatprep.subr.mxu0 0.0
    %1021 = vmatpush1.msra.mxu0 0.0
    %1022 = vmatprep.subr.mxu0 0.0
    %1023 = vmatpush1.msra.mxu0 0.0
    %1024 = vmatprep.subr.mxu0 0.0
    %1025 = vmatpush1.msra.mxu0 0.0
    %1026 = vmatprep.subr.mxu0 0.0
    %1027 = vmatpush1.msra.mxu0 0.0
    %1028 = vmatprep.subr.mxu0 0.0
    %1029 = vmatpush1.msra.mxu0 0.0
    %1030 = vmatprep.subr.mxu0 0.0
    %1031 = vmatpush1.msra.mxu0 0.0
    %1032 = vmatprep.mubr.f32.mxu0 0.0
    %1033 = vmatmul.mubr.f32.gmra.mrb[0].mxu0 %v885
    %v1034 = vpop.f32.mrb[0].mxu0
    %v1035 = vpop.f32.mrb[0].mxu0
    %v1036 = vadd.f32 0.0, %v1035
    %1037 = vdwg.mxu0
    %1038 = vmatprep.subr.mxu0 0.0
    %1039 = vmatpush1.msra.mxu0 %v895
    %1040 = vmatprep.subr.mxu0 0.0
    %1041 = vmatpush1.msra.mxu0 0.0
    %1042 = vmatprep.subr.mxu0 0.0
    %1043 = vmatpush1.msra.mxu0 0.0
    %1044 = vmatprep.subr.mxu0 0.0
    %1045 = vmatpush1.msra.mxu0 0.0
    %1046 = vmatprep.subr.mxu0 0.0
    %1047 = vmatpush1.msra.mxu0 0.0
    %1048 = vmatprep.subr.mxu0 0.0
    %1049 = vmatpush1.msra.mxu0 0.0
    %1050 = vmatprep.subr.mxu0 0.0
    %1051 = vmatpush1.msra.mxu0 0.0
    %1052 = vmatprep.subr.mxu0 0.0
    %1053 = vmatpush1.msra.mxu0 0.0
    %1054 = vmatprep.subr.mxu0 0.0
    %1055 = vmatpush1.msra.mxu0 0.0
    %1056 = vmatprep.subr.mxu0 0.0
    %1057 = vmatpush1.msra.mxu0 0.0
    %1058 = vmatprep.subr.mxu0 0.0
    %1059 = vmatpush1.msra.mxu0 0.0
    %1060 = vmatprep.subr.mxu0 0.0
    %1061 = vmatpush1.msra.mxu0 0.0
    %1062 = vmatprep.subr.mxu0 0.0
    %1063 = vmatpush1.msra.mxu0 0.0
    %1064 = vmatprep.subr.mxu0 0.0
    %1065 = vmatpush1.msra.mxu0 0.0
    %1066 = vmatprep.subr.mxu0 0.0
    %1067 = vmatpush1.msra.mxu0 0.0
    %1068 = vmatprep.subr.mxu0 0.0
    %1069 = vmatpush1.msra.mxu0 0.0
    %1070 = vmatprep.subr.mxu0 0.0
    %1071 = vmatpush1.msra.mxu0 0.0
    %1072 = vmatprep.subr.mxu0 0.0
    %1073 = vmatpush1.msra.mxu0 0.0
    %1074 = vmatprep.subr.mxu0 0.0
    %1075 = vmatpush1.msra.mxu0 0.0
    %1076 = vmatprep.subr.mxu0 0.0
    %1077 = vmatpush1.msra.mxu0 0.0
    %1078 = vmatprep.subr.mxu0 0.0
    %1079 = vmatpush1.msra.mxu0 0.0
    %1080 = vmatprep.subr.mxu0 0.0
    %1081 = vmatpush1.msra.mxu0 0.0
    %1082 = vmatprep.subr.mxu0 0.0
    %1083 = vmatpush1.msra.mxu0 0.0
    %1084 = vmatprep.subr.mxu0 0.0
    %1085 = vmatpush1.msra.mxu0 0.0
    %1086 = vmatprep.subr.mxu0 0.0
    %1087 = vmatpush1.msra.mxu0 0.0
    %1088 = vmatprep.subr.mxu0 0.0
    %1089 = vmatpush1.msra.mxu0 0.0
    %1090 = vmatprep.subr.mxu0 0.0
    %1091 = vmatpush1.msra.mxu0 0.0
    %1092 = vmatprep.subr.mxu0 0.0
    %1093 = vmatpush1.msra.mxu0 0.0
    %1094 = vmatprep.subr.mxu0 0.0
    %1095 = vmatpush1.msra.mxu0 0.0
    %1096 = vmatprep.subr.mxu0 0.0
    %1097 = vmatpush1.msra.mxu0 0.0
    %1098 = vmatprep.subr.mxu0 0.0
    %1099 = vmatpush1.msra.mxu0 0.0
    %1100 = vmatprep.subr.mxu0 0.0
    %1101 = vmatpush1.msra.mxu0 0.0
    %1102 = vmatprep.mubr.f32.mxu0 0.0
    %1103 = vmatmul.mubr.f32.gmra.mrb[0].mxu0 %v885
    %v1104 = vpop.f32.mrb[0].mxu0
    %v1105 = vadd.f32 0.0, %v1104
    %v1106 = vpop.f32.mrb[0].mxu0
    %1107 = vdwg.mxu0
    %1108 = vrot.lane.b32.xlu0 %v94, 16
    %v1109 = vpop.permute.xlu0 %1108
    %1110 = vrot.lane.b32.xlu0 %v95, 16
    %v1111 = vpop.permute.xlu0 %1110
    %1112 = vrot.lane.b32.xlu0 %v96, 16
    %v1113 = vpop.permute.xlu0 %1112
    %1114 = vrot.lane.b32.xlu0 %v97, 16
    %v1115 = vpop.permute.xlu0 %1114
    %1116 = vrot.lane.b32.xlu0 %v98, 16
    %v1117 = vpop.permute.xlu0 %1116
    %1118 = vrot.lane.b32.xlu0 %v99, 16
    %v1119 = vpop.permute.xlu0 %1118
    %vm1120 = vcmask 130048
    %v1121 = vsel %vm1120, %v1109, %v1111
    %v1122 = vsel %vm1120, %v1111, %v1113
    %v1123 = vsel %vm1120, %v1113, %v1115
    %v1124 = vsel %vm1120, %v1115, %v1117
    %v1125 = vsel %vm1120, %v1117, %v1119
    %v1127 = vsel %vm127, %v881, 0
    %v1129 = vsel %vm131, %v1121, 0
    %v1131 = vsel %vm131, %v1122, 0
    %v1133 = vsel %vm131, %v1123, 0
    %v1135 = vsel %vm131, %v1124, 0
    %v1137 = vsel %vm131, %v1125, 0
    %1139 = vmatprep.subr.mxu0 %v1131
    %1140 = vmatpush1.msra.mxu0 %v1129
    %1141 = vmatprep.subr.mxu0 0.0
    %1142 = vmatpush1.msra.mxu0 0.0
    %1143 = vmatprep.subr.mxu0 0.0
    %1144 = vmatpush1.msra.mxu0 0.0
    %1145 = vmatprep.subr.mxu0 0.0
    %1146 = vmatpush1.msra.mxu0 0.0
    %1147 = vmatprep.subr.mxu0 0.0
    %1148 = vmatpush1.msra.mxu0 0.0
    %1149 = vmatprep.subr.mxu0 0.0
    %1150 = vmatpush1.msra.mxu0 0.0
    %1151 = vmatprep.subr.mxu0 0.0
    %1152 = vmatpush1.msra.mxu0 0.0
    %1153 = vmatprep.subr.mxu0 0.0
    %1154 = vmatpush1.msra.mxu0 0.0
    %1155 = vmatprep.subr.mxu0 0.0
    %1156 = vmatpush1.msra.mxu0 0.0
    %1157 = vmatprep.subr.mxu0 0.0
    %1158 = vmatpush1.msra.mxu0 0.0
    %1159 = vmatprep.subr.mxu0 0.0
    %1160 = vmatpush1.msra.mxu0 0.0
    %1161 = vmatprep.subr.mxu0 0.0
    %1162 = vmatpush1.msra.mxu0 0.0
    %1163 = vmatprep.subr.mxu0 0.0
    %1164 = vmatpush1.msra.mxu0 0.0
    %1165 = vmatprep.subr.mxu0 0.0
    %1166 = vmatpush1.msra.mxu0 0.0
    %1167 = vmatprep.subr.mxu0 0.0
    %1168 = vmatpush1.msra.mxu0 0.0
    %1169 = vmatprep.subr.mxu0 0.0
    %1170 = vmatpush1.msra.mxu0 0.0
    %1171 = vmatprep.subr.mxu0 0.0
    %1172 = vmatpush1.msra.mxu0 0.0
    %1173 = vmatprep.subr.mxu0 0.0
    %1174 = vmatpush1.msra.mxu0 0.0
    %1175 = vmatprep.subr.mxu0 0.0
    %1176 = vmatpush1.msra.mxu0 0.0
    %1177 = vmatprep.subr.mxu0 0.0
    %1178 = vmatpush1.msra.mxu0 0.0
    %1179 = vmatprep.subr.mxu0 0.0
    %1180 = vmatpush1.msra.mxu0 0.0
    %1181 = vmatprep.subr.mxu0 0.0
    %1182 = vmatpush1.msra.mxu0 0.0
    %1183 = vmatprep.subr.mxu0 0.0
    %1184 = vmatpush1.msra.mxu0 0.0
    %1185 = vmatprep.subr.mxu0 0.0
    %1186 = vmatpush1.msra.mxu0 0.0
    %1187 = vmatprep.subr.mxu0 0.0
    %1188 = vmatpush1.msra.mxu0 0.0
    %1189 = vmatprep.subr.mxu0 0.0
    %1190 = vmatpush1.msra.mxu0 0.0
    %1191 = vmatprep.subr.mxu0 0.0
    %1192 = vmatpush1.msra.mxu0 0.0
    %1193 = vmatprep.subr.mxu0 0.0
    %1194 = vmatpush1.msra.mxu0 0.0
    %1195 = vmatprep.subr.mxu0 0.0
    %1196 = vmatpush1.msra.mxu0 0.0
    %1197 = vmatprep.subr.mxu0 0.0
    %1198 = vmatpush1.msra.mxu0 0.0
    %1199 = vmatprep.subr.mxu0 0.0
    %1200 = vmatpush1.msra.mxu0 0.0
    %1201 = vmatprep.subr.mxu0 0.0
    %1202 = vmatpush1.msra.mxu0 0.0
    %1203 = vmatprep.mubr.f32.mxu0 0.0
    %1204 = vmatmul.mubr.f32.gmra.mrb[0].mxu0 %v1127
    %v1205 = vpop.f32.mrb[0].mxu0
    %v1206 = vadd.f32 %v964, %v1205
    %v1207 = vpop.f32.mrb[0].mxu0
    %v1208 = vadd.f32 %v966, %v1207
    %1209 = vdwg.mxu0
    %1210 = vmatprep.subr.mxu0 %v1135
    %1211 = vmatpush1.msra.mxu0 %v1133
    %1212 = vmatprep.subr.mxu0 0.0
    %1213 = vmatpush1.msra.mxu0 0.0
    %1214 = vmatprep.subr.mxu0 0.0
    %1215 = vmatpush1.msra.mxu0 0.0
    %1216 = vmatprep.subr.mxu0 0.0
    %1217 = vmatpush1.msra.mxu0 0.0
    %1218 = vmatprep.subr.mxu0 0.0
    %1219 = vmatpush1.msra.mxu0 0.0
    %1220 = vmatprep.subr.mxu0 0.0
    %1221 = vmatpush1.msra.mxu0 0.0
    %1222 = vmatprep.subr.mxu0 0.0
    %1223 = vmatpush1.msra.mxu0 0.0
    %1224 = vmatprep.subr.mxu0 0.0
    %1225 = vmatpush1.msra.mxu0 0.0
    %1226 = vmatprep.subr.mxu0 0.0
    %1227 = vmatpush1.msra.mxu0 0.0
    %1228 = vmatprep.subr.mxu0 0.0
    %1229 = vmatpush1.msra.mxu0 0.0
    %1230 = vmatprep.subr.mxu0 0.0
    %1231 = vmatpush1.msra.mxu0 0.0
    %1232 = vmatprep.subr.mxu0 0.0
    %1233 = vmatpush1.msra.mxu0 0.0
    %1234 = vmatprep.subr.mxu0 0.0
    %1235 = vmatpush1.msra.mxu0 0.0
    %1236 = vmatprep.subr.mxu0 0.0
    %1237 = vmatpush1.msra.mxu0 0.0
    %1238 = vmatprep.subr.mxu0 0.0
    %1239 = vmatpush1.msra.mxu0 0.0
    %1240 = vmatprep.subr.mxu0 0.0
    %1241 = vmatpush1.msra.mxu0 0.0
    %1242 = vmatprep.subr.mxu0 0.0
    %1243 = vmatpush1.msra.mxu0 0.0
    %1244 = vmatprep.subr.mxu0 0.0
    %1245 = vmatpush1.msra.mxu0 0.0
    %1246 = vmatprep.subr.mxu0 0.0
    %1247 = vmatpush1.msra.mxu0 0.0
    %1248 = vmatprep.subr.mxu0 0.0
    %1249 = vmatpush1.msra.mxu0 0.0
    %1250 = vmatprep.subr.mxu0 0.0
    %1251 = vmatpush1.msra.mxu0 0.0
    %1252 = vmatprep.subr.mxu0 0.0
    %1253 = vmatpush1.msra.mxu0 0.0
    %1254 = vmatprep.subr.mxu0 0.0
    %1255 = vmatpush1.msra.mxu0 0.0
    %1256 = vmatprep.subr.mxu0 0.0
    %1257 = vmatpush1.msra.mxu0 0.0
    %1258 = vmatprep.subr.mxu0 0.0
    %1259 = vmatpush1.msra.mxu0 0.0
    %1260 = vmatprep.subr.mxu0 0.0
    %1261 = vmatpush1.msra.mxu0 0.0
    %1262 = vmatprep.subr.mxu0 0.0
    %1263 = vmatpush1.msra.mxu0 0.0
    %1264 = vmatprep.subr.mxu0 0.0
    %1265 = vmatpush1.msra.mxu0 0.0
    %1266 = vmatprep.subr.mxu0 0.0
    %1267 = vmatpush1.msra.mxu0 0.0
    %1268 = vmatprep.subr.mxu0 0.0
    %1269 = vmatpush1.msra.mxu0 0.0
    %1270 = vmatprep.subr.mxu0 0.0
    %1271 = vmatpush1.msra.mxu0 0.0
    %1272 = vmatprep.subr.mxu0 0.0
    %1273 = vmatpush1.msra.mxu0 0.0
    %1274 = vmatprep.mubr.f32.mxu0 0.0
    %1275 = vmatmul.mubr.f32.gmra.mrb[0].mxu0 %v1127
    %v1276 = vpop.f32.mrb[0].mxu0
    %v1277 = vpop.f32.mrb[0].mxu0
    %v1278 = vadd.f32 %v1036, %v1277
    %1279 = vdwg.mxu0
    %1280 = vmatprep.subr.mxu0 0.0
    %1281 = vmatpush1.msra.mxu0 %v1137
    %1282 = vmatprep.subr.mxu0 0.0
    %1283 = vmatpush1.msra.mxu0 0.0
    %1284 = vmatprep.subr.mxu0 0.0
    %1285 = vmatpush1.msra.mxu0 0.0
    %1286 = vmatprep.subr.mxu0 0.0
    %1287 = vmatpush1.msra.mxu0 0.0
    %1288 = vmatprep.subr.mxu0 0.0
    %1289 = vmatpush1.msra.mxu0 0.0
    %1290 = vmatprep.subr.mxu0 0.0
    %1291 = vmatpush1.msra.mxu0 0.0
    %1292 = vmatprep.subr.mxu0 0.0
    %1293 = vmatpush1.msra.mxu0 0.0
    %1294 = vmatprep.subr.mxu0 0.0
    %1295 = vmatpush1.msra.mxu0 0.0
    %1296 = vmatprep.subr.mxu0 0.0
    %1297 = vmatpush1.msra.mxu0 0.0
    %1298 = vmatprep.subr.mxu0 0.0
    %1299 = vmatpush1.msra.mxu0 0.0
    %1300 = vmatprep.subr.mxu0 0.0
    %1301 = vmatpush1.msra.mxu0 0.0
    %1302 = vmatprep.subr.mxu0 0.0
    %1303 = vmatpush1.msra.mxu0 0.0
    %1304 = vmatprep.subr.mxu0 0.0
    %1305 = vmatpush1.msra.mxu0 0.0
    %1306 = vmatprep.subr.mxu0 0.0
    %1307 = vmatpush1.msra.mxu0 0.0
    %1308 = vmatprep.subr.mxu0 0.0
    %1309 = vmatpush1.msra.mxu0 0.0
    %1310 = vmatprep.subr.mxu0 0.0
    %1311 = vmatpush1.msra.mxu0 0.0
    %1312 = vmatprep.subr.mxu0 0.0
    %1313 = vmatpush1.msra.mxu0 0.0
    %1314 = vmatprep.subr.mxu0 0.0
    %1315 = vmatpush1.msra.mxu0 0.0
    %1316 = vmatprep.subr.mxu0 0.0
    %1317 = vmatpush1.msra.mxu0 0.0
    %1318 = vmatprep.subr.mxu0 0.0
    %1319 = vmatpush1.msra.mxu0 0.0
    %1320 = vmatprep.subr.mxu0 0.0
    %1321 = vmatpush1.msra.mxu0 0.0
    %1322 = vmatprep.subr.mxu0 0.0
    %1323 = vmatpush1.msra.mxu0 0.0
    %1324 = vmatprep.subr.mxu0 0.0
    %1325 = vmatpush1.msra.mxu0 0.0
    %1326 = vmatprep.subr.mxu0 0.0
    %1327 = vmatpush1.msra.mxu0 0.0
    %1328 = vmatprep.subr.mxu0 0.0
    %1329 = vmatpush1.msra.mxu0 0.0
    %1330 = vmatprep.subr.mxu0 0.0
    %1331 = vmatpush1.msra.mxu0 0.0
    %1332 = vmatprep.subr.mxu0 0.0
    %1333 = vmatpush1.msra.mxu0 0.0
    %1334 = vmatprep.subr.mxu0 0.0
    %1335 = vmatpush1.msra.mxu0 0.0
    %1336 = vmatprep.subr.mxu0 0.0
    %1337 = vmatpush1.msra.mxu0 0.0
    %1338 = vmatprep.subr.mxu0 0.0
    %1339 = vmatpush1.msra.mxu0 0.0
    %1340 = vmatprep.subr.mxu0 0.0
    %1341 = vmatpush1.msra.mxu0 0.0
    %1342 = vmatprep.subr.mxu0 0.0
    %1343 = vmatpush1.msra.mxu0 0.0
    %1344 = vmatprep.mubr.f32.mxu0 0.0
    %1345 = vmatmul.mubr.f32.gmra.mrb[0].mxu0 %v1127
    %v1346 = vpop.f32.mrb[0].mxu0
    %v1347 = vadd.f32 %v1105, %v1346
    %v1348 = vpop.f32.mrb[0].mxu0
    %1349 = vdwg.mxu0
    %s1350 = scalar_lea.vmem %s1, 56
    %v1351 = vld [vmem:[%s1350] sm:$0xff]
    %1352 = vrot.lane.b32.xlu0 %v595, 112
    %v1353 = vpop.permute.xlu0 %1352
    %1354 = vrot.lane.b32.xlu0 %v596, 112
    %v1355 = vpop.permute.xlu0 %1354
    %1356 = vrot.lane.b32.xlu0 %v597, 112
    %v1357 = vpop.permute.xlu0 %1356
    %1358 = vrot.lane.b32.xlu0 %v598, 112
    %v1359 = vpop.permute.xlu0 %1358
    %1360 = vrot.lane.b32.xlu0 %v599, 112
    %v1361 = vpop.permute.xlu0 %1360
    %1362 = vrot.lane.b32.xlu0 %v600, 112
    %v1363 = vpop.permute.xlu0 %1362
    %vm1364 = vcmask 916480
    %v1365 = vsel %vm1364, %v1353, %v1355
    %v1366 = vsel %vm1364, %v1355, %v1357
    %v1367 = vsel %vm1364, %v1357, %v1359
    %v1368 = vsel %vm1364, %v1359, %v1361
    %v1369 = vsel %vm1364, %v1361, %v1363
    %v1371 = vsel %vm127, %v1351, 0
    %v1373 = vsel %vm131, %v1365, 0
    %v1375 = vsel %vm131, %v1366, 0
    %v1377 = vsel %vm131, %v1367, 0
    %v1379 = vsel %vm131, %v1368, 0
    %v1381 = vsel %vm131, %v1369, 0
    %1383 = vmatprep.subr.mxu0 %v1375
    %1384 = vmatpush1.msra.mxu0 %v1373
    %1385 = vmatprep.subr.mxu0 0.0
    %1386 = vmatpush1.msra.mxu0 0.0
    %1387 = vmatprep.subr.mxu0 0.0
    %1388 = vmatpush1.msra.mxu0 0.0
    %1389 = vmatprep.subr.mxu0 0.0
    %1390 = vmatpush1.msra.mxu0 0.0
    %1391 = vmatprep.subr.mxu0 0.0
    %1392 = vmatpush1.msra.mxu0 0.0
    %1393 = vmatprep.subr.mxu0 0.0
    %1394 = vmatpush1.msra.mxu0 0.0
    %1395 = vmatprep.subr.mxu0 0.0
    %1396 = vmatpush1.msra.mxu0 0.0
    %1397 = vmatprep.subr.mxu0 0.0
    %1398 = vmatpush1.msra.mxu0 0.0
    %1399 = vmatprep.subr.mxu0 0.0
    %1400 = vmatpush1.msra.mxu0 0.0
    %1401 = vmatprep.subr.mxu0 0.0
    %1402 = vmatpush1.msra.mxu0 0.0
    %1403 = vmatprep.subr.mxu0 0.0
    %1404 = vmatpush1.msra.mxu0 0.0
    %1405 = vmatprep.subr.mxu0 0.0
    %1406 = vmatpush1.msra.mxu0 0.0
    %1407 = vmatprep.subr.mxu0 0.0
    %1408 = vmatpush1.msra.mxu0 0.0
    %1409 = vmatprep.subr.mxu0 0.0
    %1410 = vmatpush1.msra.mxu0 0.0
    %1411 = vmatprep.subr.mxu0 0.0
    %1412 = vmatpush1.msra.mxu0 0.0
    %1413 = vmatprep.subr.mxu0 0.0
    %1414 = vmatpush1.msra.mxu0 0.0
    %1415 = vmatprep.subr.mxu0 0.0
    %1416 = vmatpush1.msra.mxu0 0.0
    %1417 = vmatprep.subr.mxu0 0.0
    %1418 = vmatpush1.msra.mxu0 0.0
    %1419 = vmatprep.subr.mxu0 0.0
    %1420 = vmatpush1.msra.mxu0 0.0
    %1421 = vmatprep.subr.mxu0 0.0
    %1422 = vmatpush1.msra.mxu0 0.0
    %1423 = vmatprep.subr.mxu0 0.0
    %1424 = vmatpush1.msra.mxu0 0.0
    %1425 = vmatprep.subr.mxu0 0.0
    %1426 = vmatpush1.msra.mxu0 0.0
    %1427 = vmatprep.subr.mxu0 0.0
    %1428 = vmatpush1.msra.mxu0 0.0
    %1429 = vmatprep.subr.mxu0 0.0
    %1430 = vmatpush1.msra.mxu0 0.0
    %1431 = vmatprep.subr.mxu0 0.0
    %1432 = vmatpush1.msra.mxu0 0.0
    %1433 = vmatprep.subr.mxu0 0.0
    %1434 = vmatpush1.msra.mxu0 0.0
    %1435 = vmatprep.subr.mxu0 0.0
    %1436 = vmatpush1.msra.mxu0 0.0
    %1437 = vmatprep.subr.mxu0 0.0
    %1438 = vmatpush1.msra.mxu0 0.0
    %1439 = vmatprep.subr.mxu0 0.0
    %1440 = vmatpush1.msra.mxu0 0.0
    %1441 = vmatprep.subr.mxu0 0.0
    %1442 = vmatpush1.msra.mxu0 0.0
    %1443 = vmatprep.subr.mxu0 0.0
    %1444 = vmatpush1.msra.mxu0 0.0
    %1445 = vmatprep.subr.mxu0 0.0
    %1446 = vmatpush1.msra.mxu0 0.0
    %1447 = vmatprep.mubr.f32.mxu0 0.0
    %1448 = vmatmul.mubr.f32.gmra.mrb[0].mxu0 %v1371
    %v1449 = vpop.f32.mrb[0].mxu0
    %v1450 = vadd.f32 0.0, %v1449
    %v1451 = vpop.f32.mrb[0].mxu0
    %v1452 = vadd.f32 0.0, %v1451
    %1453 = vdwg.mxu0
    %1454 = vmatprep.subr.mxu0 %v1379
    %1455 = vmatpush1.msra.mxu0 %v1377
    %1456 = vmatprep.subr.mxu0 0.0
    %1457 = vmatpush1.msra.mxu0 0.0
    %1458 = vmatprep.subr.mxu0 0.0
    %1459 = vmatpush1.msra.mxu0 0.0
    %1460 = vmatprep.subr.mxu0 0.0
    %1461 = vmatpush1.msra.mxu0 0.0
    %1462 = vmatprep.subr.mxu0 0.0
    %1463 = vmatpush1.msra.mxu0 0.0
    %1464 = vmatprep.subr.mxu0 0.0
    %1465 = vmatpush1.msra.mxu0 0.0
    %1466 = vmatprep.subr.mxu0 0.0
    %1467 = vmatpush1.msra.mxu0 0.0
    %1468 = vmatprep.subr.mxu0 0.0
    %1469 = vmatpush1.msra.mxu0 0.0
    %1470 = vmatprep.subr.mxu0 0.0
    %1471 = vmatpush1.msra.mxu0 0.0
    %1472 = vmatprep.subr.mxu0 0.0
    %1473 = vmatpush1.msra.mxu0 0.0
    %1474 = vmatprep.subr.mxu0 0.0
    %1475 = vmatpush1.msra.mxu0 0.0
    %1476 = vmatprep.subr.mxu0 0.0
    %1477 = vmatpush1.msra.mxu0 0.0
    %1478 = vmatprep.subr.mxu0 0.0
    %1479 = vmatpush1.msra.mxu0 0.0
    %1480 = vmatprep.subr.mxu0 0.0
    %1481 = vmatpush1.msra.mxu0 0.0
    %1482 = vmatprep.subr.mxu0 0.0
    %1483 = vmatpush1.msra.mxu0 0.0
    %1484 = vmatprep.subr.mxu0 0.0
    %1485 = vmatpush1.msra.mxu0 0.0
    %1486 = vmatprep.subr.mxu0 0.0
    %1487 = vmatpush1.msra.mxu0 0.0
    %1488 = vmatprep.subr.mxu0 0.0
    %1489 = vmatpush1.msra.mxu0 0.0
    %1490 = vmatprep.subr.mxu0 0.0
    %1491 = vmatpush1.msra.mxu0 0.0
    %1492 = vmatprep.subr.mxu0 0.0
    %1493 = vmatpush1.msra.mxu0 0.0
    %1494 = vmatprep.subr.mxu0 0.0
    %1495 = vmatpush1.msra.mxu0 0.0
    %1496 = vmatprep.subr.mxu0 0.0
    %1497 = vmatpush1.msra.mxu0 0.0
    %1498 = vmatprep.subr.mxu0 0.0
    %1499 = vmatpush1.msra.mxu0 0.0
    %1500 = vmatprep.subr.mxu0 0.0
    %1501 = vmatpush1.msra.mxu0 0.0
    %1502 = vmatprep.subr.mxu0 0.0
    %1503 = vmatpush1.msra.mxu0 0.0
    %1504 = vmatprep.subr.mxu0 0.0
    %1505 = vmatpush1.msra.mxu0 0.0
    %1506 = vmatprep.subr.mxu0 0.0
    %1507 = vmatpush1.msra.mxu0 0.0
    %1508 = vmatprep.subr.mxu0 0.0
    %1509 = vmatpush1.msra.mxu0 0.0
    %1510 = vmatprep.subr.mxu0 0.0
    %1511 = vmatpush1.msra.mxu0 0.0
    %1512 = vmatprep.subr.mxu0 0.0
    %1513 = vmatpush1.msra.mxu0 0.0
    %1514 = vmatprep.subr.mxu0 0.0
    %1515 = vmatpush1.msra.mxu0 0.0
    %1516 = vmatprep.subr.mxu0 0.0
    %1517 = vmatpush1.msra.mxu0 0.0
    %1518 = vmatprep.mubr.f32.mxu0 0.0
    %1519 = vmatmul.mubr.f32.gmra.mrb[0].mxu0 %v1371
    %v1520 = vpop.f32.mrb[0].mxu0
    %v1521 = vpop.f32.mrb[0].mxu0
    %v1522 = vadd.f32 0.0, %v1521
    %1523 = vdwg.mxu0
    %1524 = vmatprep.subr.mxu0 0.0
    %1525 = vmatpush1.msra.mxu0 %v1381
    %1526 = vmatprep.subr.mxu0 0.0
    %1527 = vmatpush1.msra.mxu0 0.0
    %1528 = vmatprep.subr.mxu0 0.0
    %1529 = vmatpush1.msra.mxu0 0.0
    %1530 = vmatprep.subr.mxu0 0.0
    %1531 = vmatpush1.msra.mxu0 0.0
    %1532 = vmatprep.subr.mxu0 0.0
    %1533 = vmatpush1.msra.mxu0 0.0
    %1534 = vmatprep.subr.mxu0 0.0
    %1535 = vmatpush1.msra.mxu0 0.0
    %1536 = vmatprep.subr.mxu0 0.0
    %1537 = vmatpush1.msra.mxu0 0.0
    %1538 = vmatprep.subr.mxu0 0.0
    %1539 = vmatpush1.msra.mxu0 0.0
    %1540 = vmatprep.subr.mxu0 0.0
    %1541 = vmatpush1.msra.mxu0 0.0
    %1542 = vmatprep.subr.mxu0 0.0
    %1543 = vmatpush1.msra.mxu0 0.0
    %1544 = vmatprep.subr.mxu0 0.0
    %1545 = vmatpush1.msra.mxu0 0.0
    %1546 = vmatprep.subr.mxu0 0.0
    %1547 = vmatpush1.msra.mxu0 0.0
    %1548 = vmatprep.subr.mxu0 0.0
    %1549 = vmatpush1.msra.mxu0 0.0
    %1550 = vmatprep.subr.mxu0 0.0
    %1551 = vmatpush1.msra.mxu0 0.0
    %1552 = vmatprep.subr.mxu0 0.0
    %1553 = vmatpush1.msra.mxu0 0.0
    %1554 = vmatprep.subr.mxu0 0.0
    %1555 = vmatpush1.msra.mxu0 0.0
    %1556 = vmatprep.subr.mxu0 0.0
    %1557 = vmatpush1.msra.mxu0 0.0
    %1558 = vmatprep.subr.mxu0 0.0
    %1559 = vmatpush1.msra.mxu0 0.0
    %1560 = vmatprep.subr.mxu0 0.0
    %1561 = vmatpush1.msra.mxu0 0.0
    %1562 = vmatprep.subr.mxu0 0.0
    %1563 = vmatpush1.msra.mxu0 0.0
    %1564 = vmatprep.subr.mxu0 0.0
    %1565 = vmatpush1.msra.mxu0 0.0
    %1566 = vmatprep.subr.mxu0 0.0
    %1567 = vmatpush1.msra.mxu0 0.0
    %1568 = vmatprep.subr.mxu0 0.0
    %1569 = vmatpush1.msra.mxu0 0.0
    %1570 = vmatprep.subr.mxu0 0.0
    %1571 = vmatpush1.msra.mxu0 0.0
    %1572 = vmatprep.subr.mxu0 0.0
    %1573 = vmatpush1.msra.mxu0 0.0
    %1574 = vmatprep.subr.mxu0 0.0
    %1575 = vmatpush1.msra.mxu0 0.0
    %1576 = vmatprep.subr.mxu0 0.0
    %1577 = vmatpush1.msra.mxu0 0.0
    %1578 = vmatprep.subr.mxu0 0.0
    %1579 = vmatpush1.msra.mxu0 0.0
    %1580 = vmatprep.subr.mxu0 0.0
    %1581 = vmatpush1.msra.mxu0 0.0
    %1582 = vmatprep.subr.mxu0 0.0
    %1583 = vmatpush1.msra.mxu0 0.0
    %1584 = vmatprep.subr.mxu0 0.0
    %1585 = vmatpush1.msra.mxu0 0.0
    %1586 = vmatprep.subr.mxu0 0.0
    %1587 = vmatpush1.msra.mxu0 0.0
    %1588 = vmatprep.mubr.f32.mxu0 0.0
    %1589 = vmatmul.mubr.f32.gmra.mrb[0].mxu0 %v1371
    %v1590 = vpop.f32.mrb[0].mxu0
    %v1591 = vadd.f32 0.0, %v1590
    %v1592 = vpop.f32.mrb[0].mxu0
    %1593 = vdwg.mxu0
    %v1594 = vadd.f32 %v1206, %v1450
    %v1595 = vadd.f32 %v1208, %v1452
    %v1596 = vadd.f32 %v1278, %v1522
    %v1597 = vadd.f32 %v1347, %v1591
    %s1598 = scalar_lea.vmem %s1, 16
    %v1599 = vld [vmem:[%s1598] sm:$0xff]
    %s1600 = scalar_lea.vmem %s1, 40
    %v1601 = vld [vmem:[%s1600] sm:$0xff]
    %1602 = vrot.lane.b32.xlu0 %v595, 127
    %v1603 = vpop.permute.xlu0 %1602
    %1604 = vrot.lane.b32.xlu0 %v596, 127
    %v1605 = vpop.permute.xlu0 %1604
    %1606 = vrot.lane.b32.xlu0 %v597, 127
    %v1607 = vpop.permute.xlu0 %1606
    %1608 = vrot.lane.b32.xlu0 %v598, 127
    %v1609 = vpop.permute.xlu0 %1608
    %1610 = vrot.lane.b32.xlu0 %v599, 127
    %v1611 = vpop.permute.xlu0 %1610
    %1612 = vrot.lane.b32.xlu0 %v600, 127
    %v1613 = vpop.permute.xlu0 %1612
    %vm1614 = vcmask 1039360
    %v1615 = vsel %vm1614, %v1603, %v1605
    %v1616 = vsel %vm1614, %v1605, %v1607
    %v1617 = vsel %vm1614, %v1607, %v1609
    %v1618 = vsel %vm1614, %v1609, %v1611
    %v1619 = vsel %vm1614, %v1611, %v1613
    %v1621 = vsel %vm127, %v1601, 0
    %v1623 = vsel %vm131, %v1615, 0
    %v1625 = vsel %vm131, %v1616, 0
    %v1627 = vsel %vm131, %v1617, 0
    %v1629 = vsel %vm131, %v1618, 0
    %v1631 = vsel %vm131, %v1619, 0
    %1633 = vmatprep.subr.mxu0 %v1625
    %1634 = vmatpush1.msra.mxu0 %v1623
    %1635 = vmatprep.subr.mxu0 0.0
    %1636 = vmatpush1.msra.mxu0 0.0
    %1637 = vmatprep.subr.mxu0 0.0
    %1638 = vmatpush1.msra.mxu0 0.0
    %1639 = vmatprep.subr.mxu0 0.0
    %1640 = vmatpush1.msra.mxu0 0.0
    %1641 = vmatprep.subr.mxu0 0.0
    %1642 = vmatpush1.msra.mxu0 0.0
    %1643 = vmatprep.subr.mxu0 0.0
    %1644 = vmatpush1.msra.mxu0 0.0
    %1645 = vmatprep.subr.mxu0 0.0
    %1646 = vmatpush1.msra.mxu0 0.0
    %1647 = vmatprep.subr.mxu0 0.0
    %1648 = vmatpush1.msra.mxu0 0.0
    %1649 = vmatprep.subr.mxu0 0.0
    %1650 = vmatpush1.msra.mxu0 0.0
    %1651 = vmatprep.subr.mxu0 0.0
    %1652 = vmatpush1.msra.mxu0 0.0
    %1653 = vmatprep.subr.mxu0 0.0
    %1654 = vmatpush1.msra.mxu0 0.0
    %1655 = vmatprep.subr.mxu0 0.0
    %1656 = vmatpush1.msra.mxu0 0.0
    %1657 = vmatprep.subr.mxu0 0.0
    %1658 = vmatpush1.msra.mxu0 0.0
    %1659 = vmatprep.subr.mxu0 0.0
    %1660 = vmatpush1.msra.mxu0 0.0
    %1661 = vmatprep.subr.mxu0 0.0
    %1662 = vmatpush1.msra.mxu0 0.0
    %1663 = vmatprep.subr.mxu0 0.0
    %1664 = vmatpush1.msra.mxu0 0.0
    %1665 = vmatprep.subr.mxu0 0.0
    %1666 = vmatpush1.msra.mxu0 0.0
    %1667 = vmatprep.subr.mxu0 0.0
    %1668 = vmatpush1.msra.mxu0 0.0
    %1669 = vmatprep.subr.mxu0 0.0
    %1670 = vmatpush1.msra.mxu0 0.0
    %1671 = vmatprep.subr.mxu0 0.0
    %1672 = vmatpush1.msra.mxu0 0.0
    %1673 = vmatprep.subr.mxu0 0.0
    %1674 = vmatpush1.msra.mxu0 0.0
    %1675 = vmatprep.subr.mxu0 0.0
    %1676 = vmatpush1.msra.mxu0 0.0
    %1677 = vmatprep.subr.mxu0 0.0
    %1678 = vmatpush1.msra.mxu0 0.0
    %1679 = vmatprep.subr.mxu0 0.0
    %1680 = vmatpush1.msra.mxu0 0.0
    %1681 = vmatprep.subr.mxu0 0.0
    %1682 = vmatpush1.msra.mxu0 0.0
    %1683 = vmatprep.subr.mxu0 0.0
    %1684 = vmatpush1.msra.mxu0 0.0
    %1685 = vmatprep.subr.mxu0 0.0
    %1686 = vmatpush1.msra.mxu0 0.0
    %1687 = vmatprep.subr.mxu0 0.0
    %1688 = vmatpush1.msra.mxu0 0.0
    %1689 = vmatprep.subr.mxu0 0.0
    %1690 = vmatpush1.msra.mxu0 0.0
    %1691 = vmatprep.subr.mxu0 0.0
    %1692 = vmatpush1.msra.mxu0 0.0
    %1693 = vmatprep.subr.mxu0 0.0
    %1694 = vmatpush1.msra.mxu0 0.0
    %1695 = vmatprep.subr.mxu0 0.0
    %1696 = vmatpush1.msra.mxu0 0.0
    %1697 = vmatprep.mubr.f32.mxu0 0.0
    %1698 = vmatmul.mubr.f32.gmra.mrb[0].mxu0 %v1621
    %v1699 = vpop.f32.mrb[0].mxu0
    %v1700 = vadd.f32 0.0, %v1699
    %v1701 = vpop.f32.mrb[0].mxu0
    %v1702 = vadd.f32 0.0, %v1701
    %1703 = vdwg.mxu0
    %1704 = vmatprep.subr.mxu0 %v1629
    %1705 = vmatpush1.msra.mxu0 %v1627
    %1706 = vmatprep.subr.mxu0 0.0
    %1707 = vmatpush1.msra.mxu0 0.0
    %1708 = vmatprep.subr.mxu0 0.0
    %1709 = vmatpush1.msra.mxu0 0.0
    %1710 = vmatprep.subr.mxu0 0.0
    %1711 = vmatpush1.msra.mxu0 0.0
    %1712 = vmatprep.subr.mxu0 0.0
    %1713 = vmatpush1.msra.mxu0 0.0
    %1714 = vmatprep.subr.mxu0 0.0
    %1715 = vmatpush1.msra.mxu0 0.0
    %1716 = vmatprep.subr.mxu0 0.0
    %1717 = vmatpush1.msra.mxu0 0.0
    %1718 = vmatprep.subr.mxu0 0.0
    %1719 = vmatpush1.msra.mxu0 0.0
    %1720 = vmatprep.subr.mxu0 0.0
    %1721 = vmatpush1.msra.mxu0 0.0
    %1722 = vmatprep.subr.mxu0 0.0
    %1723 = vmatpush1.msra.mxu0 0.0
    %1724 = vmatprep.subr.mxu0 0.0
    %1725 = vmatpush1.msra.mxu0 0.0
    %1726 = vmatprep.subr.mxu0 0.0
    %1727 = vmatpush1.msra.mxu0 0.0
    %1728 = vmatprep.subr.mxu0 0.0
    %1729 = vmatpush1.msra.mxu0 0.0
    %1730 = vmatprep.subr.mxu0 0.0
    %1731 = vmatpush1.msra.mxu0 0.0
    %1732 = vmatprep.subr.mxu0 0.0
    %1733 = vmatpush1.msra.mxu0 0.0
    %1734 = vmatprep.subr.mxu0 0.0
    %1735 = vmatpush1.msra.mxu0 0.0
    %1736 = vmatprep.subr.mxu0 0.0
    %1737 = vmatpush1.msra.mxu0 0.0
    %1738 = vmatprep.subr.mxu0 0.0
    %1739 = vmatpush1.msra.mxu0 0.0
    %1740 = vmatprep.subr.mxu0 0.0
    %1741 = vmatpush1.msra.mxu0 0.0
    %1742 = vmatprep.subr.mxu0 0.0
    %1743 = vmatpush1.msra.mxu0 0.0
    %1744 = vmatprep.subr.mxu0 0.0
    %1745 = vmatpush1.msra.mxu0 0.0
    %1746 = vmatprep.subr.mxu0 0.0
    %1747 = vmatpush1.msra.mxu0 0.0
    %1748 = vmatprep.subr.mxu0 0.0
    %1749 = vmatpush1.msra.mxu0 0.0
    %1750 = vmatprep.subr.mxu0 0.0
    %1751 = vmatpush1.msra.mxu0 0.0
    %1752 = vmatprep.subr.mxu0 0.0
    %1753 = vmatpush1.msra.mxu0 0.0
    %1754 = vmatprep.subr.mxu0 0.0
    %1755 = vmatpush1.msra.mxu0 0.0
    %1756 = vmatprep.subr.mxu0 0.0
    %1757 = vmatpush1.msra.mxu0 0.0
    %1758 = vmatprep.subr.mxu0 0.0
    %1759 = vmatpush1.msra.mxu0 0.0
    %1760 = vmatprep.subr.mxu0 0.0
    %1761 = vmatpush1.msra.mxu0 0.0
    %1762 = vmatprep.subr.mxu0 0.0
    %1763 = vmatpush1.msra.mxu0 0.0
    %1764 = vmatprep.subr.mxu0 0.0
    %1765 = vmatpush1.msra.mxu0 0.0
    %1766 = vmatprep.subr.mxu0 0.0
    %1767 = vmatpush1.msra.mxu0 0.0
    %1768 = vmatprep.mubr.f32.mxu0 0.0
    %1769 = vmatmul.mubr.f32.gmra.mrb[0].mxu0 %v1621
    %v1770 = vpop.f32.mrb[0].mxu0
    %v1771 = vpop.f32.mrb[0].mxu0
    %v1772 = vadd.f32 0.0, %v1771
    %1773 = vdwg.mxu0
    %1774 = vmatprep.subr.mxu0 0.0
    %1775 = vmatpush1.msra.mxu0 %v1631
    %1776 = vmatprep.subr.mxu0 0.0
    %1777 = vmatpush1.msra.mxu0 0.0
    %1778 = vmatprep.subr.mxu0 0.0
    %1779 = vmatpush1.msra.mxu0 0.0
    %1780 = vmatprep.subr.mxu0 0.0
    %1781 = vmatpush1.msra.mxu0 0.0
    %1782 = vmatprep.subr.mxu0 0.0
    %1783 = vmatpush1.msra.mxu0 0.0
    %1784 = vmatprep.subr.mxu0 0.0
    %1785 = vmatpush1.msra.mxu0 0.0
    %1786 = vmatprep.subr.mxu0 0.0
    %1787 = vmatpush1.msra.mxu0 0.0
    %1788 = vmatprep.subr.mxu0 0.0
    %1789 = vmatpush1.msra.mxu0 0.0
    %1790 = vmatprep.subr.mxu0 0.0
    %1791 = vmatpush1.msra.mxu0 0.0
    %1792 = vmatprep.subr.mxu0 0.0
    %1793 = vmatpush1.msra.mxu0 0.0
    %1794 = vmatprep.subr.mxu0 0.0
    %1795 = vmatpush1.msra.mxu0 0.0
    %1796 = vmatprep.subr.mxu0 0.0
    %1797 = vmatpush1.msra.mxu0 0.0
    %1798 = vmatprep.subr.mxu0 0.0
    %1799 = vmatpush1.msra.mxu0 0.0
    %1800 = vmatprep.subr.mxu0 0.0
    %1801 = vmatpush1.msra.mxu0 0.0
    %1802 = vmatprep.subr.mxu0 0.0
    %1803 = vmatpush1.msra.mxu0 0.0
    %1804 = vmatprep.subr.mxu0 0.0
    %1805 = vmatpush1.msra.mxu0 0.0
    %1806 = vmatprep.subr.mxu0 0.0
    %1807 = vmatpush1.msra.mxu0 0.0
    %1808 = vmatprep.subr.mxu0 0.0
    %1809 = vmatpush1.msra.mxu0 0.0
    %1810 = vmatprep.subr.mxu0 0.0
    %1811 = vmatpush1.msra.mxu0 0.0
    %1812 = vmatprep.subr.mxu0 0.0
    %1813 = vmatpush1.msra.mxu0 0.0
    %1814 = vmatprep.subr.mxu0 0.0
    %1815 = vmatpush1.msra.mxu0 0.0
    %1816 = vmatprep.subr.mxu0 0.0
    %1817 = vmatpush1.msra.mxu0 0.0
    %1818 = vmatprep.subr.mxu0 0.0
    %1819 = vmatpush1.msra.mxu0 0.0
    %1820 = vmatprep.subr.mxu0 0.0
    %1821 = vmatpush1.msra.mxu0 0.0
    %1822 = vmatprep.subr.mxu0 0.0
    %1823 = vmatpush1.msra.mxu0 0.0
    %1824 = vmatprep.subr.mxu0 0.0
    %1825 = vmatpush1.msra.mxu0 0.0
    %1826 = vmatprep.subr.mxu0 0.0
    %1827 = vmatpush1.msra.mxu0 0.0
    %1828 = vmatprep.subr.mxu0 0.0
    %1829 = vmatpush1.msra.mxu0 0.0
    %1830 = vmatprep.subr.mxu0 0.0
    %1831 = vmatpush1.msra.mxu0 0.0
    %1832 = vmatprep.subr.mxu0 0.0
    %1833 = vmatpush1.msra.mxu0 0.0
    %1834 = vmatprep.subr.mxu0 0.0
    %1835 = vmatpush1.msra.mxu0 0.0
    %1836 = vmatprep.subr.mxu0 0.0
    %1837 = vmatpush1.msra.mxu0 0.0
    %1838 = vmatprep.mubr.f32.mxu0 0.0
    %1839 = vmatmul.mubr.f32.gmra.mrb[0].mxu0 %v1621
    %v1840 = vpop.f32.mrb[0].mxu0
    %v1841 = vadd.f32 0.0, %v1840
    %v1842 = vpop.f32.mrb[0].mxu0
    %1843 = vdwg.mxu0
    %1844 = vrot.lane.b32.xlu0 %v94, 15
    %v1845 = vpop.permute.xlu0 %1844
    %1846 = vrot.lane.b32.xlu0 %v95, 15
    %v1847 = vpop.permute.xlu0 %1846
    %1848 = vrot.lane.b32.xlu0 %v96, 15
    %v1849 = vpop.permute.xlu0 %1848
    %1850 = vrot.lane.b32.xlu0 %v97, 15
    %v1851 = vpop.permute.xlu0 %1850
    %1852 = vrot.lane.b32.xlu0 %v98, 15
    %v1853 = vpop.permute.xlu0 %1852
    %1854 = vrot.lane.b32.xlu0 %v99, 15
    %v1855 = vpop.permute.xlu0 %1854
    %vm1856 = vcmask 121856
    %v1857 = vsel %vm1856, %v1845, %v1847
    %v1858 = vsel %vm1856, %v1847, %v1849
    %v1859 = vsel %vm1856, %v1849, %v1851
    %v1860 = vsel %vm1856, %v1851, %v1853
    %v1861 = vsel %vm1856, %v1853, %v1855
    %v1863 = vsel %vm127, %v1599, 0
    %v1865 = vsel %vm131, %v1857, 0
    %v1867 = vsel %vm131, %v1858, 0
    %v1869 = vsel %vm131, %v1859, 0
    %v1871 = vsel %vm131, %v1860, 0
    %v1873 = vsel %vm131, %v1861, 0
    %1875 = vmatprep.subr.mxu0 %v1867
    %1876 = vmatpush1.msra.mxu0 %v1865
    %1877 = vmatprep.subr.mxu0 0.0
    %1878 = vmatpush1.msra.mxu0 0.0
    %1879 = vmatprep.subr.mxu0 0.0
    %1880 = vmatpush1.msra.mxu0 0.0
    %1881 = vmatprep.subr.mxu0 0.0
    %1882 = vmatpush1.msra.mxu0 0.0
    %1883 = vmatprep.subr.mxu0 0.0
    %1884 = vmatpush1.msra.mxu0 0.0
    %1885 = vmatprep.subr.mxu0 0.0
    %1886 = vmatpush1.msra.mxu0 0.0
    %1887 = vmatprep.subr.mxu0 0.0
    %1888 = vmatpush1.msra.mxu0 0.0
    %1889 = vmatprep.subr.mxu0 0.0
    %1890 = vmatpush1.msra.mxu0 0.0
    %1891 = vmatprep.subr.mxu0 0.0
    %1892 = vmatpush1.msra.mxu0 0.0
    %1893 = vmatprep.subr.mxu0 0.0
    %1894 = vmatpush1.msra.mxu0 0.0
    %1895 = vmatprep.subr.mxu0 0.0
    %1896 = vmatpush1.msra.mxu0 0.0
    %1897 = vmatprep.subr.mxu0 0.0
    %1898 = vmatpush1.msra.mxu0 0.0
    %1899 = vmatprep.subr.mxu0 0.0
    %1900 = vmatpush1.msra.mxu0 0.0
    %1901 = vmatprep.subr.mxu0 0.0
    %1902 = vmatpush1.msra.mxu0 0.0
    %1903 = vmatprep.subr.mxu0 0.0
    %1904 = vmatpush1.msra.mxu0 0.0
    %1905 = vmatprep.subr.mxu0 0.0
    %1906 = vmatpush1.msra.mxu0 0.0
    %1907 = vmatprep.subr.mxu0 0.0
    %1908 = vmatpush1.msra.mxu0 0.0
    %1909 = vmatprep.subr.mxu0 0.0
    %1910 = vmatpush1.msra.mxu0 0.0
    %1911 = vmatprep.subr.mxu0 0.0
    %1912 = vmatpush1.msra.mxu0 0.0
    %1913 = vmatprep.subr.mxu0 0.0
    %1914 = vmatpush1.msra.mxu0 0.0
    %1915 = vmatprep.subr.mxu0 0.0
    %1916 = vmatpush1.msra.mxu0 0.0
    %1917 = vmatprep.subr.mxu0 0.0
    %1918 = vmatpush1.msra.mxu0 0.0
    %1919 = vmatprep.subr.mxu0 0.0
    %1920 = vmatpush1.msra.mxu0 0.0
    %1921 = vmatprep.subr.mxu0 0.0
    %1922 = vmatpush1.msra.mxu0 0.0
    %1923 = vmatprep.subr.mxu0 0.0
    %1924 = vmatpush1.msra.mxu0 0.0
    %1925 = vmatprep.subr.mxu0 0.0
    %1926 = vmatpush1.msra.mxu0 0.0
    %1927 = vmatprep.subr.mxu0 0.0
    %1928 = vmatpush1.msra.mxu0 0.0
    %1929 = vmatprep.subr.mxu0 0.0
    %1930 = vmatpush1.msra.mxu0 0.0
    %1931 = vmatprep.subr.mxu0 0.0
    %1932 = vmatpush1.msra.mxu0 0.0
    %1933 = vmatprep.subr.mxu0 0.0
    %1934 = vmatpush1.msra.mxu0 0.0
    %1935 = vmatprep.subr.mxu0 0.0
    %1936 = vmatpush1.msra.mxu0 0.0
    %1937 = vmatprep.subr.mxu0 0.0
    %1938 = vmatpush1.msra.mxu0 0.0
    %1939 = vmatprep.mubr.f32.mxu0 0.0
    %1940 = vmatmul.mubr.f32.gmra.mrb[0].mxu0 %v1863
    %v1941 = vpop.f32.mrb[0].mxu0
    %v1942 = vadd.f32 %v1700, %v1941
    %v1943 = vpop.f32.mrb[0].mxu0
    %v1944 = vadd.f32 %v1702, %v1943
    %1945 = vdwg.mxu0
    %1946 = vmatprep.subr.mxu0 %v1871
    %1947 = vmatpush1.msra.mxu0 %v1869
    %1948 = vmatprep.subr.mxu0 0.0
    %1949 = vmatpush1.msra.mxu0 0.0
    %1950 = vmatprep.subr.mxu0 0.0
    %1951 = vmatpush1.msra.mxu0 0.0
    %1952 = vmatprep.subr.mxu0 0.0
    %1953 = vmatpush1.msra.mxu0 0.0
    %1954 = vmatprep.subr.mxu0 0.0
    %1955 = vmatpush1.msra.mxu0 0.0
    %1956 = vmatprep.subr.mxu0 0.0
    %1957 = vmatpush1.msra.mxu0 0.0
    %1958 = vmatprep.subr.mxu0 0.0
    %1959 = vmatpush1.msra.mxu0 0.0
    %1960 = vmatprep.subr.mxu0 0.0
    %1961 = vmatpush1.msra.mxu0 0.0
    %1962 = vmatprep.subr.mxu0 0.0
    %1963 = vmatpush1.msra.mxu0 0.0
    %1964 = vmatprep.subr.mxu0 0.0
    %1965 = vmatpush1.msra.mxu0 0.0
    %1966 = vmatprep.subr.mxu0 0.0
    %1967 = vmatpush1.msra.mxu0 0.0
    %1968 = vmatprep.subr.mxu0 0.0
    %1969 = vmatpush1.msra.mxu0 0.0
    %1970 = vmatprep.subr.mxu0 0.0
    %1971 = vmatpush1.msra.mxu0 0.0
    %1972 = vmatprep.subr.mxu0 0.0
    %1973 = vmatpush1.msra.mxu0 0.0
    %1974 = vmatprep.subr.mxu0 0.0
    %1975 = vmatpush1.msra.mxu0 0.0
    %1976 = vmatprep.subr.mxu0 0.0
    %1977 = vmatpush1.msra.mxu0 0.0
    %1978 = vmatprep.subr.mxu0 0.0
    %1979 = vmatpush1.msra.mxu0 0.0
    %1980 = vmatprep.subr.mxu0 0.0
    %1981 = vmatpush1.msra.mxu0 0.0
    %1982 = vmatprep.subr.mxu0 0.0
    %1983 = vmatpush1.msra.mxu0 0.0
    %1984 = vmatprep.subr.mxu0 0.0
    %1985 = vmatpush1.msra.mxu0 0.0
    %1986 = vmatprep.subr.mxu0 0.0
    %1987 = vmatpush1.msra.mxu0 0.0
    %1988 = vmatprep.subr.mxu0 0.0
    %1989 = vmatpush1.msra.mxu0 0.0
    %1990 = vmatprep.subr.mxu0 0.0
    %1991 = vmatpush1.msra.mxu0 0.0
    %1992 = vmatprep.subr.mxu0 0.0
    %1993 = vmatpush1.msra.mxu0 0.0
    %1994 = vmatprep.subr.mxu0 0.0
    %1995 = vmatpush1.msra.mxu0 0.0
    %1996 = vmatprep.subr.mxu0 0.0
    %1997 = vmatpush1.msra.mxu0 0.0
    %1998 = vmatprep.subr.mxu0 0.0
    %1999 = vmatpush1.msra.mxu0 0.0
    %2000 = vmatprep.subr.mxu0 0.0
    %2001 = vmatpush1.msra.mxu0 0.0
    %2002 = vmatprep.subr.mxu0 0.0
    %2003 = vmatpush1.msra.mxu0 0.0
    %2004 = vmatprep.subr.mxu0 0.0
    %2005 = vmatpush1.msra.mxu0 0.0
    %2006 = vmatprep.subr.mxu0 0.0
    %2007 = vmatpush1.msra.mxu0 0.0
    %2008 = vmatprep.subr.mxu0 0.0
    %2009 = vmatpush1.msra.mxu0 0.0
    %2010 = vmatprep.mubr.f32.mxu0 0.0
    %2011 = vmatmul.mubr.f32.gmra.mrb[0].mxu0 %v1863
    %v2012 = vpop.f32.mrb[0].mxu0
    %v2013 = vpop.f32.mrb[0].mxu0
    %v2014 = vadd.f32 %v1772, %v2013
    %2015 = vdwg.mxu0
    %2016 = vmatprep.subr.mxu0 0.0
    %2017 = vmatpush1.msra.mxu0 %v1873
    %2018 = vmatprep.subr.mxu0 0.0
    %2019 = vmatpush1.msra.mxu0 0.0
    %2020 = vmatprep.subr.mxu0 0.0
    %2021 = vmatpush1.msra.mxu0 0.0
    %2022 = vmatprep.subr.mxu0 0.0
    %2023 = vmatpush1.msra.mxu0 0.0
    %2024 = vmatprep.subr.mxu0 0.0
    %2025 = vmatpush1.msra.mxu0 0.0
    %2026 = vmatprep.subr.mxu0 0.0
    %2027 = vmatpush1.msra.mxu0 0.0
    %2028 = vmatprep.subr.mxu0 0.0
    %2029 = vmatpush1.msra.mxu0 0.0
    %2030 = vmatprep.subr.mxu0 0.0
    %2031 = vmatpush1.msra.mxu0 0.0
    %2032 = vmatprep.subr.mxu0 0.0
    %2033 = vmatpush1.msra.mxu0 0.0
    %2034 = vmatprep.subr.mxu0 0.0
    %2035 = vmatpush1.msra.mxu0 0.0
    %2036 = vmatprep.subr.mxu0 0.0
    %2037 = vmatpush1.msra.mxu0 0.0
    %2038 = vmatprep.subr.mxu0 0.0
    %2039 = vmatpush1.msra.mxu0 0.0
    %2040 = vmatprep.subr.mxu0 0.0
    %2041 = vmatpush1.msra.mxu0 0.0
    %2042 = vmatprep.subr.mxu0 0.0
    %2043 = vmatpush1.msra.mxu0 0.0
    %2044 = vmatprep.subr.mxu0 0.0
    %2045 = vmatpush1.msra.mxu0 0.0
    %2046 = vmatprep.subr.mxu0 0.0
    %2047 = vmatpush1.msra.mxu0 0.0
    %2048 = vmatprep.subr.mxu0 0.0
    %2049 = vmatpush1.msra.mxu0 0.0
    %2050 = vmatprep.subr.mxu0 0.0
    %2051 = vmatpush1.msra.mxu0 0.0
    %2052 = vmatprep.subr.mxu0 0.0
    %2053 = vmatpush1.msra.mxu0 0.0
    %2054 = vmatprep.subr.mxu0 0.0
    %2055 = vmatpush1.msra.mxu0 0.0
    %2056 = vmatprep.subr.mxu0 0.0
    %2057 = vmatpush1.msra.mxu0 0.0
    %2058 = vmatprep.subr.mxu0 0.0
    %2059 = vmatpush1.msra.mxu0 0.0
    %2060 = vmatprep.subr.mxu0 0.0
    %2061 = vmatpush1.msra.mxu0 0.0
    %2062 = vmatprep.subr.mxu0 0.0
    %2063 = vmatpush1.msra.mxu0 0.0
    %2064 = vmatprep.subr.mxu0 0.0
    %2065 = vmatpush1.msra.mxu0 0.0
    %2066 = vmatprep.subr.mxu0 0.0
    %2067 = vmatpush1.msra.mxu0 0.0
    %2068 = vmatprep.subr.mxu0 0.0
    %2069 = vmatpush1.msra.mxu0 0.0
    %2070 = vmatprep.subr.mxu0 0.0
    %2071 = vmatpush1.msra.mxu0 0.0
    %2072 = vmatprep.subr.mxu0 0.0
    %2073 = vmatpush1.msra.mxu0 0.0
    %2074 = vmatprep.subr.mxu0 0.0
    %2075 = vmatpush1.msra.mxu0 0.0
    %2076 = vmatprep.subr.mxu0 0.0
    %2077 = vmatpush1.msra.mxu0 0.0
    %2078 = vmatprep.subr.mxu0 0.0
    %2079 = vmatpush1.msra.mxu0 0.0
    %2080 = vmatprep.mubr.f32.mxu0 0.0
    %2081 = vmatmul.mubr.f32.gmra.mrb[0].mxu0 %v1863
    %v2082 = vpop.f32.mrb[0].mxu0
    %v2083 = vadd.f32 %v1841, %v2082
    %v2084 = vpop.f32.mrb[0].mxu0
    %2085 = vdwg.mxu0
    %s2086 = scalar_lea.vmem %s1, 64
    %v2087 = vld [vmem:[%s2086] sm:$0xff]
    %2088 = vrot.lane.b32.xlu0 %v595, 111
    %v2089 = vpop.permute.xlu0 %2088
    %2090 = vrot.lane.b32.xlu0 %v596, 111
    %v2091 = vpop.permute.xlu0 %2090
    %2092 = vrot.lane.b32.xlu0 %v597, 111
    %v2093 = vpop.permute.xlu0 %2092
    %2094 = vrot.lane.b32.xlu0 %v598, 111
    %v2095 = vpop.permute.xlu0 %2094
    %2096 = vrot.lane.b32.xlu0 %v599, 111
    %v2097 = vpop.permute.xlu0 %2096
    %2098 = vrot.lane.b32.xlu0 %v600, 111
    %v2099 = vpop.permute.xlu0 %2098
    %vm2100 = vcmask 908288
    %v2101 = vsel %vm2100, %v2089, %v2091
    %v2102 = vsel %vm2100, %v2091, %v2093
    %v2103 = vsel %vm2100, %v2093, %v2095
    %v2104 = vsel %vm2100, %v2095, %v2097
    %v2105 = vsel %vm2100, %v2097, %v2099
    %v2107 = vsel %vm127, %v2087, 0
    %v2109 = vsel %vm131, %v2101, 0
    %v2111 = vsel %vm131, %v2102, 0
    %v2113 = vsel %vm131, %v2103, 0
    %v2115 = vsel %vm131, %v2104, 0
    %v2117 = vsel %vm131, %v2105, 0
    %2119 = vmatprep.subr.mxu0 %v2111
    %2120 = vmatpush1.msra.mxu0 %v2109
    %2121 = vmatprep.subr.mxu0 0.0
    %2122 = vmatpush1.msra.mxu0 0.0
    %2123 = vmatprep.subr.mxu0 0.0
    %2124 = vmatpush1.msra.mxu0 0.0
    %2125 = vmatprep.subr.mxu0 0.0
    %2126 = vmatpush1.msra.mxu0 0.0
    %2127 = vmatprep.subr.mxu0 0.0
    %2128 = vmatpush1.msra.mxu0 0.0
    %2129 = vmatprep.subr.mxu0 0.0
    %2130 = vmatpush1.msra.mxu0 0.0
    %2131 = vmatprep.subr.mxu0 0.0
    %2132 = vmatpush1.msra.mxu0 0.0
    %2133 = vmatprep.subr.mxu0 0.0
    %2134 = vmatpush1.msra.mxu0 0.0
    %2135 = vmatprep.subr.mxu0 0.0
    %2136 = vmatpush1.msra.mxu0 0.0
    %2137 = vmatprep.subr.mxu0 0.0
    %2138 = vmatpush1.msra.mxu0 0.0
    %2139 = vmatprep.subr.mxu0 0.0
    %2140 = vmatpush1.msra.mxu0 0.0
    %2141 = vmatprep.subr.mxu0 0.0
    %2142 = vmatpush1.msra.mxu0 0.0
    %2143 = vmatprep.subr.mxu0 0.0
    %2144 = vmatpush1.msra.mxu0 0.0
    %2145 = vmatprep.subr.mxu0 0.0
    %2146 = vmatpush1.msra.mxu0 0.0
    %2147 = vmatprep.subr.mxu0 0.0
    %2148 = vmatpush1.msra.mxu0 0.0
    %2149 = vmatprep.subr.mxu0 0.0
    %2150 = vmatpush1.msra.mxu0 0.0
    %2151 = vmatprep.subr.mxu0 0.0
    %2152 = vmatpush1.msra.mxu0 0.0
    %2153 = vmatprep.subr.mxu0 0.0
    %2154 = vmatpush1.msra.mxu0 0.0
    %2155 = vmatprep.subr.mxu0 0.0
    %2156 = vmatpush1.msra.mxu0 0.0
    %2157 = vmatprep.subr.mxu0 0.0
    %2158 = vmatpush1.msra.mxu0 0.0
    %2159 = vmatprep.subr.mxu0 0.0
    %2160 = vmatpush1.msra.mxu0 0.0
    %2161 = vmatprep.subr.mxu0 0.0
    %2162 = vmatpush1.msra.mxu0 0.0
    %2163 = vmatprep.subr.mxu0 0.0
    %2164 = vmatpush1.msra.mxu0 0.0
    %2165 = vmatprep.subr.mxu0 0.0
    %2166 = vmatpush1.msra.mxu0 0.0
    %2167 = vmatprep.subr.mxu0 0.0
    %2168 = vmatpush1.msra.mxu0 0.0
    %2169 = vmatprep.subr.mxu0 0.0
    %2170 = vmatpush1.msra.mxu0 0.0
    %2171 = vmatprep.subr.mxu0 0.0
    %2172 = vmatpush1.msra.mxu0 0.0
    %2173 = vmatprep.subr.mxu0 0.0
    %2174 = vmatpush1.msra.mxu0 0.0
    %2175 = vmatprep.subr.mxu0 0.0
    %2176 = vmatpush1.msra.mxu0 0.0
    %2177 = vmatprep.subr.mxu0 0.0
    %2178 = vmatpush1.msra.mxu0 0.0
    %2179 = vmatprep.subr.mxu0 0.0
    %2180 = vmatpush1.msra.mxu0 0.0
    %2181 = vmatprep.subr.mxu0 0.0
    %2182 = vmatpush1.msra.mxu0 0.0
    %2183 = vmatprep.mubr.f32.mxu0 0.0
    %2184 = vmatmul.mubr.f32.gmra.mrb[0].mxu0 %v2107
    %v2185 = vpop.f32.mrb[0].mxu0
    %v2186 = vadd.f32 0.0, %v2185
    %v2187 = vpop.f32.mrb[0].mxu0
    %v2188 = vadd.f32 0.0, %v2187
    %2189 = vdwg.mxu0
    %2190 = vmatprep.subr.mxu0 %v2115
    %2191 = vmatpush1.msra.mxu0 %v2113
    %2192 = vmatprep.subr.mxu0 0.0
    %2193 = vmatpush1.msra.mxu0 0.0
    %2194 = vmatprep.subr.mxu0 0.0
    %2195 = vmatpush1.msra.mxu0 0.0
    %2196 = vmatprep.subr.mxu0 0.0
    %2197 = vmatpush1.msra.mxu0 0.0
    %2198 = vmatprep.subr.mxu0 0.0
    %2199 = vmatpush1.msra.mxu0 0.0
    %2200 = vmatprep.subr.mxu0 0.0
    %2201 = vmatpush1.msra.mxu0 0.0
    %2202 = vmatprep.subr.mxu0 0.0
    %2203 = vmatpush1.msra.mxu0 0.0
    %2204 = vmatprep.subr.mxu0 0.0
    %2205 = vmatpush1.msra.mxu0 0.0
    %2206 = vmatprep.subr.mxu0 0.0
    %2207 = vmatpush1.msra.mxu0 0.0
    %2208 = vmatprep.subr.mxu0 0.0
    %2209 = vmatpush1.msra.mxu0 0.0
    %2210 = vmatprep.subr.mxu0 0.0
    %2211 = vmatpush1.msra.mxu0 0.0
    %2212 = vmatprep.subr.mxu0 0.0
    %2213 = vmatpush1.msra.mxu0 0.0
    %2214 = vmatprep.subr.mxu0 0.0
    %2215 = vmatpush1.msra.mxu0 0.0
    %2216 = vmatprep.subr.mxu0 0.0
    %2217 = vmatpush1.msra.mxu0 0.0
    %2218 = vmatprep.subr.mxu0 0.0
    %2219 = vmatpush1.msra.mxu0 0.0
    %2220 = vmatprep.subr.mxu0 0.0
    %2221 = vmatpush1.msra.mxu0 0.0
    %2222 = vmatprep.subr.mxu0 0.0
    %2223 = vmatpush1.msra.mxu0 0.0
    %2224 = vmatprep.subr.mxu0 0.0
    %2225 = vmatpush1.msra.mxu0 0.0
    %2226 = vmatprep.subr.mxu0 0.0
    %2227 = vmatpush1.msra.mxu0 0.0
    %2228 = vmatprep.subr.mxu0 0.0
    %2229 = vmatpush1.msra.mxu0 0.0
    %2230 = vmatprep.subr.mxu0 0.0
    %2231 = vmatpush1.msra.mxu0 0.0
    %2232 = vmatprep.subr.mxu0 0.0
    %2233 = vmatpush1.msra.mxu0 0.0
    %2234 = vmatprep.subr.mxu0 0.0
    %2235 = vmatpush1.msra.mxu0 0.0
    %2236 = vmatprep.subr.mxu0 0.0
    %2237 = vmatpush1.msra.mxu0 0.0
    %2238 = vmatprep.subr.mxu0 0.0
    %2239 = vmatpush1.msra.mxu0 0.0
    %2240 = vmatprep.subr.mxu0 0.0
    %2241 = vmatpush1.msra.mxu0 0.0
    %2242 = vmatprep.subr.mxu0 0.0
    %2243 = vmatpush1.msra.mxu0 0.0
    %2244 = vmatprep.subr.mxu0 0.0
    %2245 = vmatpush1.msra.mxu0 0.0
    %2246 = vmatprep.subr.mxu0 0.0
    %2247 = vmatpush1.msra.mxu0 0.0
    %2248 = vmatprep.subr.mxu0 0.0
    %2249 = vmatpush1.msra.mxu0 0.0
    %2250 = vmatprep.subr.mxu0 0.0
    %2251 = vmatpush1.msra.mxu0 0.0
    %2252 = vmatprep.subr.mxu0 0.0
    %2253 = vmatpush1.msra.mxu0 0.0
    %2254 = vmatprep.mubr.f32.mxu0 0.0
    %2255 = vmatmul.mubr.f32.gmra.mrb[0].mxu0 %v2107
    %v2256 = vpop.f32.mrb[0].mxu0
    %v2257 = vpop.f32.mrb[0].mxu0
    %v2258 = vadd.f32 0.0, %v2257
    %2259 = vdwg.mxu0
    %2260 = vmatprep.subr.mxu0 0.0
    %2261 = vmatpush1.msra.mxu0 %v2117
    %2262 = vmatprep.subr.mxu0 0.0
    %2263 = vmatpush1.msra.mxu0 0.0
    %2264 = vmatprep.subr.mxu0 0.0
    %2265 = vmatpush1.msra.mxu0 0.0
    %2266 = vmatprep.subr.mxu0 0.0
    %2267 = vmatpush1.msra.mxu0 0.0
    %2268 = vmatprep.subr.mxu0 0.0
    %2269 = vmatpush1.msra.mxu0 0.0
    %2270 = vmatprep.subr.mxu0 0.0
    %2271 = vmatpush1.msra.mxu0 0.0
    %2272 = vmatprep.subr.mxu0 0.0
    %2273 = vmatpush1.msra.mxu0 0.0
    %2274 = vmatprep.subr.mxu0 0.0
    %2275 = vmatpush1.msra.mxu0 0.0
    %2276 = vmatprep.subr.mxu0 0.0
    %2277 = vmatpush1.msra.mxu0 0.0
    %2278 = vmatprep.subr.mxu0 0.0
    %2279 = vmatpush1.msra.mxu0 0.0
    %2280 = vmatprep.subr.mxu0 0.0
    %2281 = vmatpush1.msra.mxu0 0.0
    %2282 = vmatprep.subr.mxu0 0.0
    %2283 = vmatpush1.msra.mxu0 0.0
    %2284 = vmatprep.subr.mxu0 0.0
    %2285 = vmatpush1.msra.mxu0 0.0
    %2286 = vmatprep.subr.mxu0 0.0
    %2287 = vmatpush1.msra.mxu0 0.0
    %2288 = vmatprep.subr.mxu0 0.0
    %2289 = vmatpush1.msra.mxu0 0.0
    %2290 = vmatprep.subr.mxu0 0.0
    %2291 = vmatpush1.msra.mxu0 0.0
    %2292 = vmatprep.subr.mxu0 0.0
    %2293 = vmatpush1.msra.mxu0 0.0
    %2294 = vmatprep.subr.mxu0 0.0
    %2295 = vmatpush1.msra.mxu0 0.0
    %2296 = vmatprep.subr.mxu0 0.0
    %2297 = vmatpush1.msra.mxu0 0.0
    %2298 = vmatprep.subr.mxu0 0.0
    %2299 = vmatpush1.msra.mxu0 0.0
    %2300 = vmatprep.subr.mxu0 0.0
    %2301 = vmatpush1.msra.mxu0 0.0
    %2302 = vmatprep.subr.mxu0 0.0
    %2303 = vmatpush1.msra.mxu0 0.0
    %2304 = vmatprep.subr.mxu0 0.0
    %2305 = vmatpush1.msra.mxu0 0.0
    %2306 = vmatprep.subr.mxu0 0.0
    %2307 = vmatpush1.msra.mxu0 0.0
    %2308 = vmatprep.subr.mxu0 0.0
    %2309 = vmatpush1.msra.mxu0 0.0
    %2310 = vmatprep.subr.mxu0 0.0
    %2311 = vmatpush1.msra.mxu0 0.0
    %2312 = vmatprep.subr.mxu0 0.0
    %2313 = vmatpush1.msra.mxu0 0.0
    %2314 = vmatprep.subr.mxu0 0.0
    %2315 = vmatpush1.msra.mxu0 0.0
    %2316 = vmatprep.subr.mxu0 0.0
    %2317 = vmatpush1.msra.mxu0 0.0
    %2318 = vmatprep.subr.mxu0 0.0
    %2319 = vmatpush1.msra.mxu0 0.0
    %2320 = vmatprep.subr.mxu0 0.0
    %2321 = vmatpush1.msra.mxu0 0.0
    %2322 = vmatprep.subr.mxu0 0.0
    %2323 = vmatpush1.msra.mxu0 0.0
    %2324 = vmatprep.mubr.f32.mxu0 0.0
    %2325 = vmatmul.mubr.f32.gmra.mrb[0].mxu0 %v2107
    %v2326 = vpop.f32.mrb[0].mxu0
    %v2327 = vadd.f32 0.0, %v2326
    %v2328 = vpop.f32.mrb[0].mxu0
    %2329 = vdwg.mxu0
    %v2330 = vadd.f32 %v1942, %v2186
    %v2331 = vadd.f32 %v1944, %v2188
    %v2332 = vadd.f32 %v2014, %v2258
    %v2333 = vadd.f32 %v2083, %v2327
    %v2335 = vlaneseq
    %v2336 = vshrl.u32 %v2335, 7
    %v2337 = vsub.s32 0, %v2336
    %v2338 = vrot.slane %v46, %v2337
    %v2339 = vlaneseq
    %v2340 = vshrl.u32 %v2339, 7
    %v2341 = vsub.s32 1, %v2340
    %v2342 = vrot.slane %v46, %v2341
    %v2343 = vlaneseq
    %v2344 = vshrl.u32 %v2343, 7
    %v2345 = vsub.s32 3, %v2344
    %v2346 = vrot.slane %v46, %v2345
    %v2347 = vlaneseq
    %v2348 = vshrl.u32 %v2347, 7
    %v2349 = vsub.s32 4, %v2348
    %v2350 = vrot.slane %v46, %v2349
    %v2355 = vmul.f32 %v2330, %v2338
    %v2356 = vmul.f32 %v2331, %v2342
    %v2357 = vmul.f32 %v2332, %v2346
    %v2358 = vmul.f32 %v2333, %v2350
    %v2359 = vadd.f32 %v876, %v1594
    %v2360 = vadd.f32 %v877, %v1595
    %v2361 = vadd.f32 %v878, %v1596
    %v2362 = vadd.f32 %v879, %v1597
    %v2363 = vadd.f32 %v2359, %v2355
    %v2364 = vadd.f32 %v2360, %v2356
    %v2365 = vadd.f32 %v2361, %v2357
    %v2366 = vadd.f32 %v2362, %v2358
    %2368 = vset.pattern.permute.xlu0 0
    %2369 = vperm.xlu0 %2368, %v49
    %v2370 = vpop.permute.xlu0 %2369
    %v2372 = vmul.f32 %v2363, %v2370
    %v2373 = vmul.f32 %v2364, %v2370
    %v2374 = vmul.f32 %v2365, %v2370
    %v2375 = vmul.f32 %v2366, %v2370
    %2377 = vset.pattern.permute.xlu0 0
    %2378 = vperm.xlu0 %2377, %v50
    %v2379 = vpop.permute.xlu0 %2378
    %v2381 = vadd.f32 %v2372, %v2379
    %v2382 = vadd.f32 %v2373, %v2379
    %v2383 = vadd.f32 %v2374, %v2379
    %v2384 = vadd.f32 %v2375, %v2379
    %v2385 = vmax.f32 %v2381, 0.0
    %v2386 = vmax.f32 %v2382, 0.0
    %v2387 = vmax.f32 %v2383, 0.0
    %v2388 = vmax.f32 %v2384, 0.0
    %2389 = vst [vmem:[#allocation2 + $0x8] sm:$0xff] %v2385
    %2390 = vst [vmem:[#allocation2 + $0x10] sm:$0xff] %v2386
    %2391 = vst [vmem:[#allocation2 + $0x20] sm:$0xff] %v2387
    %2392 = vst [vmem:[#allocation2 + $0x28] sm:$0xff] %v2388
    %v2393 = vld [vmem:[#allocation2] sm:$0xff]
    %v2394 = vld [vmem:[#allocation2 + $0x8] sm:$0xff]
    %v2395 = vld [vmem:[#allocation2 + $0x10] sm:$0xff]
    %v2396 = vld [vmem:[#allocation2 + $0x18] sm:$0xff]
    %v2397 = vld [vmem:[#allocation2 + $0x20] sm:$0xff]
    %v2398 = vld [vmem:[#allocation2 + $0x28] sm:$0xff]
    %v2399 = vld [vmem:[%s2] sm:$0xff]
    %s2400 = scalar_lea.vmem %s2, 24
    %v2401 = vld [vmem:[%s2400] sm:$0xff]
    %2408 = vrot.lane.b32.xlu0 %v2393, 1
    %v2409 = vpop.permute.xlu0 %2408
    %2410 = vrot.lane.b32.xlu0 %v2394, 1
    %v2411 = vpop.permute.xlu0 %2410
    %2412 = vrot.lane.b32.xlu0 %v2395, 1
    %v2413 = vpop.permute.xlu0 %2412
    %2414 = vrot.lane.b32.xlu0 %v2396, 1
    %v2415 = vpop.permute.xlu0 %2414
    %2416 = vrot.lane.b32.xlu0 %v2397, 1
    %v2417 = vpop.permute.xlu0 %2416
    %2418 = vrot.lane.b32.xlu0 %v2398, 1
    %v2419 = vpop.permute.xlu0 %2418
    %v2420 = vsel %vm121, %v2409, %v2411
    %v2421 = vsel %vm121, %v2411, %v2413
    %v2422 = vsel %vm121, %v2413, %v2415
    %v2423 = vsel %vm121, %v2415, %v2417
    %v2424 = vsel %vm121, %v2417, %v2419
    %vm2430 = vcmask 64512
    %v2432 = vsel %vm2430, %v2401, 0
    %2434 = vmatprep.subr.mxu0 %v2421
    %2435 = vmatpush1.msra.mxu0 %v2420
    %2436 = vmatprep.subr.mxu0 0.0
    %2437 = vmatpush1.msra.mxu0 0.0
    %2438 = vmatprep.subr.mxu0 0.0
    %2439 = vmatpush1.msra.mxu0 0.0
    %2440 = vmatprep.subr.mxu0 0.0
    %2441 = vmatpush1.msra.mxu0 0.0
    %2442 = vmatprep.subr.mxu0 0.0
    %2443 = vmatpush1.msra.mxu0 0.0
    %2444 = vmatprep.subr.mxu0 0.0
    %2445 = vmatpush1.msra.mxu0 0.0
    %2446 = vmatprep.subr.mxu0 0.0
    %2447 = vmatpush1.msra.mxu0 0.0
    %2448 = vmatprep.subr.mxu0 0.0
    %2449 = vmatpush1.msra.mxu0 0.0
    %2450 = vmatprep.subr.mxu0 0.0
    %2451 = vmatpush1.msra.mxu0 0.0
    %2452 = vmatprep.subr.mxu0 0.0
    %2453 = vmatpush1.msra.mxu0 0.0
    %2454 = vmatprep.subr.mxu0 0.0
    %2455 = vmatpush1.msra.mxu0 0.0
    %2456 = vmatprep.subr.mxu0 0.0
    %2457 = vmatpush1.msra.mxu0 0.0
    %2458 = vmatprep.subr.mxu0 0.0
    %2459 = vmatpush1.msra.mxu0 0.0
    %2460 = vmatprep.subr.mxu0 0.0
    %2461 = vmatpush1.msra.mxu0 0.0
    %2462 = vmatprep.subr.mxu0 0.0
    %2463 = vmatpush1.msra.mxu0 0.0
    %2464 = vmatprep.subr.mxu0 0.0
    %2465 = vmatpush1.msra.mxu0 0.0
    %2466 = vmatprep.subr.mxu0 0.0
    %2467 = vmatpush1.msra.mxu0 0.0
    %2468 = vmatprep.subr.mxu0 0.0
    %2469 = vmatpush1.msra.mxu0 0.0
    %2470 = vmatprep.subr.mxu0 0.0
    %2471 = vmatpush1.msra.mxu0 0.0
    %2472 = vmatprep.subr.mxu0 0.0
    %2473 = vmatpush1.msra.mxu0 0.0
    %2474 = vmatprep.subr.mxu0 0.0
    %2475 = vmatpush1.msra.mxu0 0.0
    %2476 = vmatprep.subr.mxu0 0.0
    %2477 = vmatpush1.msra.mxu0 0.0
    %2478 = vmatprep.subr.mxu0 0.0
    %2479 = vmatpush1.msra.mxu0 0.0
    %2480 = vmatprep.subr.mxu0 0.0
    %2481 = vmatpush1.msra.mxu0 0.0
    %2482 = vmatprep.subr.mxu0 0.0
    %2483 = vmatpush1.msra.mxu0 0.0
    %2484 = vmatprep.subr.mxu0 0.0
    %2485 = vmatpush1.msra.mxu0 0.0
    %2486 = vmatprep.subr.mxu0 0.0
    %2487 = vmatpush1.msra.mxu0 0.0
    %2488 = vmatprep.subr.mxu0 0.0
    %2489 = vmatpush1.msra.mxu0 0.0
    %2490 = vmatprep.subr.mxu0 0.0
    %2491 = vmatpush1.msra.mxu0 0.0
    %2492 = vmatprep.subr.mxu0 0.0
    %2493 = vmatpush1.msra.mxu0 0.0
    %2494 = vmatprep.subr.mxu0 0.0
    %2495 = vmatpush1.msra.mxu0 0.0
    %2496 = vmatprep.subr.mxu0 0.0
    %2497 = vmatpush1.msra.mxu0 0.0
    %2498 = vmatprep.mubr.f32.mxu0 0.0
    %2499 = vmatmul.mubr.f32.gmra.mrb[0].mxu0 %v2432
    %v2500 = vpop.f32.mrb[0].mxu0
    %v2501 = vadd.f32 0.0, %v2500
    %v2502 = vpop.f32.mrb[0].mxu0
    %v2503 = vadd.f32 0.0, %v2502
    %2504 = vdwg.mxu0
    %2505 = vmatprep.subr.mxu0 %v2423
    %2506 = vmatpush1.msra.mxu0 %v2422
    %2507 = vmatprep.subr.mxu0 0.0
    %2508 = vmatpush1.msra.mxu0 0.0
    %2509 = vmatprep.subr.mxu0 0.0
    %2510 = vmatpush1.msra.mxu0 0.0
    %2511 = vmatprep.subr.mxu0 0.0
    %2512 = vmatpush1.msra.mxu0 0.0
    %2513 = vmatprep.subr.mxu0 0.0
    %2514 = vmatpush1.msra.mxu0 0.0
    %2515 = vmatprep.subr.mxu0 0.0
    %2516 = vmatpush1.msra.mxu0 0.0
    %2517 = vmatprep.subr.mxu0 0.0
    %2518 = vmatpush1.msra.mxu0 0.0
    %2519 = vmatprep.subr.mxu0 0.0
    %2520 = vmatpush1.msra.mxu0 0.0
    %2521 = vmatprep.subr.mxu0 0.0
    %2522 = vmatpush1.msra.mxu0 0.0
    %2523 = vmatprep.subr.mxu0 0.0
    %2524 = vmatpush1.msra.mxu0 0.0
    %2525 = vmatprep.subr.mxu0 0.0
    %2526 = vmatpush1.msra.mxu0 0.0
    %2527 = vmatprep.subr.mxu0 0.0
    %2528 = vmatpush1.msra.mxu0 0.0
    %2529 = vmatprep.subr.mxu0 0.0
    %2530 = vmatpush1.msra.mxu0 0.0
    %2531 = vmatprep.subr.mxu0 0.0
    %2532 = vmatpush1.msra.mxu0 0.0
    %2533 = vmatprep.subr.mxu0 0.0
    %2534 = vmatpush1.msra.mxu0 0.0
    %2535 = vmatprep.subr.mxu0 0.0
    %2536 = vmatpush1.msra.mxu0 0.0
    %2537 = vmatprep.subr.mxu0 0.0
    %2538 = vmatpush1.msra.mxu0 0.0
    %2539 = vmatprep.subr.mxu0 0.0
    %2540 = vmatpush1.msra.mxu0 0.0
    %2541 = vmatprep.subr.mxu0 0.0
    %2542 = vmatpush1.msra.mxu0 0.0
    %2543 = vmatprep.subr.mxu0 0.0
    %2544 = vmatpush1.msra.mxu0 0.0
    %2545 = vmatprep.subr.mxu0 0.0
    %2546 = vmatpush1.msra.mxu0 0.0
    %2547 = vmatprep.subr.mxu0 0.0
    %2548 = vmatpush1.msra.mxu0 0.0
    %2549 = vmatprep.subr.mxu0 0.0
    %2550 = vmatpush1.msra.mxu0 0.0
    %2551 = vmatprep.subr.mxu0 0.0
    %2552 = vmatpush1.msra.mxu0 0.0
    %2553 = vmatprep.subr.mxu0 0.0
    %2554 = vmatpush1.msra.mxu0 0.0
    %2555 = vmatprep.subr.mxu0 0.0
    %2556 = vmatpush1.msra.mxu0 0.0
    %2557 = vmatprep.subr.mxu0 0.0
    %2558 = vmatpush1.msra.mxu0 0.0
    %2559 = vmatprep.subr.mxu0 0.0
    %2560 = vmatpush1.msra.mxu0 0.0
    %2561 = vmatprep.subr.mxu0 0.0
    %2562 = vmatpush1.msra.mxu0 0.0
    %2563 = vmatprep.subr.mxu0 0.0
    %2564 = vmatpush1.msra.mxu0 0.0
    %2565 = vmatprep.subr.mxu0 0.0
    %2566 = vmatpush1.msra.mxu0 0.0
    %2567 = vmatprep.subr.mxu0 0.0
    %2568 = vmatpush1.msra.mxu0 0.0
    %2569 = vmatprep.mubr.f32.mxu0 0.0
    %2570 = vmatmul.mubr.f32.gmra.mrb[0].mxu0 %v2432
    %v2571 = vpop.f32.mrb[0].mxu0
    %v2572 = vpop.f32.mrb[0].mxu0
    %v2573 = vadd.f32 0.0, %v2572
    %2574 = vdwg.mxu0
    %2575 = vmatprep.subr.mxu0 0.0
    %2576 = vmatpush1.msra.mxu0 %v2424
    %2577 = vmatprep.subr.mxu0 0.0
    %2578 = vmatpush1.msra.mxu0 0.0
    %2579 = vmatprep.subr.mxu0 0.0
    %2580 = vmatpush1.msra.mxu0 0.0
    %2581 = vmatprep.subr.mxu0 0.0
    %2582 = vmatpush1.msra.mxu0 0.0
    %2583 = vmatprep.subr.mxu0 0.0
    %2584 = vmatpush1.msra.mxu0 0.0
    %2585 = vmatprep.subr.mxu0 0.0
    %2586 = vmatpush1.msra.mxu0 0.0
    %2587 = vmatprep.subr.mxu0 0.0
    %2588 = vmatpush1.msra.mxu0 0.0
    %2589 = vmatprep.subr.mxu0 0.0
    %2590 = vmatpush1.msra.mxu0 0.0
    %2591 = vmatprep.subr.mxu0 0.0
    %2592 = vmatpush1.msra.mxu0 0.0
    %2593 = vmatprep.subr.mxu0 0.0
    %2594 = vmatpush1.msra.mxu0 0.0
    %2595 = vmatprep.subr.mxu0 0.0
    %2596 = vmatpush1.msra.mxu0 0.0
    %2597 = vmatprep.subr.mxu0 0.0
    %2598 = vmatpush1.msra.mxu0 0.0
    %2599 = vmatprep.subr.mxu0 0.0
    %2600 = vmatpush1.msra.mxu0 0.0
    %2601 = vmatprep.subr.mxu0 0.0
    %2602 = vmatpush1.msra.mxu0 0.0
    %2603 = vmatprep.subr.mxu0 0.0
    %2604 = vmatpush1.msra.mxu0 0.0
    %2605 = vmatprep.subr.mxu0 0.0
    %2606 = vmatpush1.msra.mxu0 0.0
    %2607 = vmatprep.subr.mxu0 0.0
    %2608 = vmatpush1.msra.mxu0 0.0
    %2609 = vmatprep.subr.mxu0 0.0
    %2610 = vmatpush1.msra.mxu0 0.0
    %2611 = vmatprep.subr.mxu0 0.0
    %2612 = vmatpush1.msra.mxu0 0.0
    %2613 = vmatprep.subr.mxu0 0.0
    %2614 = vmatpush1.msra.mxu0 0.0
    %2615 = vmatprep.subr.mxu0 0.0
    %2616 = vmatpush1.msra.mxu0 0.0
    %2617 = vmatprep.subr.mxu0 0.0
    %2618 = vmatpush1.msra.mxu0 0.0
    %2619 = vmatprep.subr.mxu0 0.0
    %2620 = vmatpush1.msra.mxu0 0.0
    %2621 = vmatprep.subr.mxu0 0.0
    %2622 = vmatpush1.msra.mxu0 0.0
    %2623 = vmatprep.subr.mxu0 0.0
    %2624 = vmatpush1.msra.mxu0 0.0
    %2625 = vmatprep.subr.mxu0 0.0
    %2626 = vmatpush1.msra.mxu0 0.0
    %2627 = vmatprep.subr.mxu0 0.0
    %2628 = vmatpush1.msra.mxu0 0.0
    %2629 = vmatprep.subr.mxu0 0.0
    %2630 = vmatpush1.msra.mxu0 0.0
    %2631 = vmatprep.subr.mxu0 0.0
    %2632 = vmatpush1.msra.mxu0 0.0
    %2633 = vmatprep.subr.mxu0 0.0
    %2634 = vmatpush1.msra.mxu0 0.0
    %2635 = vmatprep.subr.mxu0 0.0
    %2636 = vmatpush1.msra.mxu0 0.0
    %2637 = vmatprep.subr.mxu0 0.0
    %2638 = vmatpush1.msra.mxu0 0.0
    %2639 = vmatprep.mubr.f32.mxu0 0.0
    %2640 = vmatmul.mubr.f32.gmra.mrb[0].mxu0 %v2432
    %v2641 = vpop.f32.mrb[0].mxu0
    %v2642 = vadd.f32 0.0, %v2641
    %v2643 = vpop.f32.mrb[0].mxu0
    %2644 = vdwg.mxu0
    %2645 = vrot.lane.b32.xlu0 %v2393, 17
    %v2646 = vpop.permute.xlu0 %2645
    %2647 = vrot.lane.b32.xlu0 %v2394, 17
    %v2648 = vpop.permute.xlu0 %2647
    %2649 = vrot.lane.b32.xlu0 %v2395, 17
    %v2650 = vpop.permute.xlu0 %2649
    %2651 = vrot.lane.b32.xlu0 %v2396, 17
    %v2652 = vpop.permute.xlu0 %2651
    %2653 = vrot.lane.b32.xlu0 %v2397, 17
    %v2654 = vpop.permute.xlu0 %2653
    %2655 = vrot.lane.b32.xlu0 %v2398, 17
    %v2656 = vpop.permute.xlu0 %2655
    %v2657 = vsel %vm365, %v2646, %v2648
    %v2658 = vsel %vm365, %v2648, %v2650
    %v2659 = vsel %vm365, %v2650, %v2652
    %v2660 = vsel %vm365, %v2652, %v2654
    %v2661 = vsel %vm365, %v2654, %v2656
    %v2668 = vsel %vm2430, %v2399, 0
    %2670 = vmatprep.subr.mxu0 %v2658
    %2671 = vmatpush1.msra.mxu0 %v2657
    %2672 = vmatprep.subr.mxu0 0.0
    %2673 = vmatpush1.msra.mxu0 0.0
    %2674 = vmatprep.subr.mxu0 0.0
    %2675 = vmatpush1.msra.mxu0 0.0
    %2676 = vmatprep.subr.mxu0 0.0
    %2677 = vmatpush1.msra.mxu0 0.0
    %2678 = vmatprep.subr.mxu0 0.0
    %2679 = vmatpush1.msra.mxu0 0.0
    %2680 = vmatprep.subr.mxu0 0.0
    %2681 = vmatpush1.msra.mxu0 0.0
    %2682 = vmatprep.subr.mxu0 0.0
    %2683 = vmatpush1.msra.mxu0 0.0
    %2684 = vmatprep.subr.mxu0 0.0
    %2685 = vmatpush1.msra.mxu0 0.0
    %2686 = vmatprep.subr.mxu0 0.0
    %2687 = vmatpush1.msra.mxu0 0.0
    %2688 = vmatprep.subr.mxu0 0.0
    %2689 = vmatpush1.msra.mxu0 0.0
    %2690 = vmatprep.subr.mxu0 0.0
    %2691 = vmatpush1.msra.mxu0 0.0
    %2692 = vmatprep.subr.mxu0 0.0
    %2693 = vmatpush1.msra.mxu0 0.0
    %2694 = vmatprep.subr.mxu0 0.0
    %2695 = vmatpush1.msra.mxu0 0.0
    %2696 = vmatprep.subr.mxu0 0.0
    %2697 = vmatpush1.msra.mxu0 0.0
    %2698 = vmatprep.subr.mxu0 0.0
    %2699 = vmatpush1.msra.mxu0 0.0
    %2700 = vmatprep.subr.mxu0 0.0
    %2701 = vmatpush1.msra.mxu0 0.0
    %2702 = vmatprep.subr.mxu0 0.0
    %2703 = vmatpush1.msra.mxu0 0.0
    %2704 = vmatprep.subr.mxu0 0.0
    %2705 = vmatpush1.msra.mxu0 0.0
    %2706 = vmatprep.subr.mxu0 0.0
    %2707 = vmatpush1.msra.mxu0 0.0
    %2708 = vmatprep.subr.mxu0 0.0
    %2709 = vmatpush1.msra.mxu0 0.0
    %2710 = vmatprep.subr.mxu0 0.0
    %2711 = vmatpush1.msra.mxu0 0.0
    %2712 = vmatprep.subr.mxu0 0.0
    %2713 = vmatpush1.msra.mxu0 0.0
    %2714 = vmatprep.subr.mxu0 0.0
    %2715 = vmatpush1.msra.mxu0 0.0
    %2716 = vmatprep.subr.mxu0 0.0
    %2717 = vmatpush1.msra.mxu0 0.0
    %2718 = vmatprep.subr.mxu0 0.0
    %2719 = vmatpush1.msra.mxu0 0.0
    %2720 = vmatprep.subr.mxu0 0.0
    %2721 = vmatpush1.msra.mxu0 0.0
    %2722 = vmatprep.subr.mxu0 0.0
    %2723 = vmatpush1.msra.mxu0 0.0
    %2724 = vmatprep.subr.mxu0 0.0
    %2725 = vmatpush1.msra.mxu0 0.0
    %2726 = vmatprep.subr.mxu0 0.0
    %2727 = vmatpush1.msra.mxu0 0.0
    %2728 = vmatprep.subr.mxu0 0.0
    %2729 = vmatpush1.msra.mxu0 0.0
    %2730 = vmatprep.subr.mxu0 0.0
    %2731 = vmatpush1.msra.mxu0 0.0
    %2732 = vmatprep.subr.mxu0 0.0
    %2733 = vmatpush1.msra.mxu0 0.0
    %2734 = vmatprep.mubr.f32.mxu0 0.0
    %2735 = vmatmul.mubr.f32.gmra.mrb[0].mxu0 %v2668
    %v2736 = vpop.f32.mrb[0].mxu0
    %v2737 = vadd.f32 %v2501, %v2736
    %v2738 = vpop.f32.mrb[0].mxu0
    %v2739 = vadd.f32 %v2503, %v2738
    %2740 = vdwg.mxu0
    %2741 = vmatprep.subr.mxu0 %v2660
    %2742 = vmatpush1.msra.mxu0 %v2659
    %2743 = vmatprep.subr.mxu0 0.0
    %2744 = vmatpush1.msra.mxu0 0.0
    %2745 = vmatprep.subr.mxu0 0.0
    %2746 = vmatpush1.msra.mxu0 0.0
    %2747 = vmatprep.subr.mxu0 0.0
    %2748 = vmatpush1.msra.mxu0 0.0
    %2749 = vmatprep.subr.mxu0 0.0
    %2750 = vmatpush1.msra.mxu0 0.0
    %2751 = vmatprep.subr.mxu0 0.0
    %2752 = vmatpush1.msra.mxu0 0.0
    %2753 = vmatprep.subr.mxu0 0.0
    %2754 = vmatpush1.msra.mxu0 0.0
    %2755 = vmatprep.subr.mxu0 0.0
    %2756 = vmatpush1.msra.mxu0 0.0
    %2757 = vmatprep.subr.mxu0 0.0
    %2758 = vmatpush1.msra.mxu0 0.0
    %2759 = vmatprep.subr.mxu0 0.0
    %2760 = vmatpush1.msra.mxu0 0.0
    %2761 = vmatprep.subr.mxu0 0.0
    %2762 = vmatpush1.msra.mxu0 0.0
    %2763 = vmatprep.subr.mxu0 0.0
    %2764 = vmatpush1.msra.mxu0 0.0
    %2765 = vmatprep.subr.mxu0 0.0
    %2766 = vmatpush1.msra.mxu0 0.0
    %2767 = vmatprep.subr.mxu0 0.0
    %2768 = vmatpush1.msra.mxu0 0.0
    %2769 = vmatprep.subr.mxu0 0.0
    %2770 = vmatpush1.msra.mxu0 0.0
    %2771 = vmatprep.subr.mxu0 0.0
    %2772 = vmatpush1.msra.mxu0 0.0
    %2773 = vmatprep.subr.mxu0 0.0
    %2774 = vmatpush1.msra.mxu0 0.0
    %2775 = vmatprep.subr.mxu0 0.0
    %2776 = vmatpush1.msra.mxu0 0.0
    %2777 = vmatprep.subr.mxu0 0.0
    %2778 = vmatpush1.msra.mxu0 0.0
    %2779 = vmatprep.subr.mxu0 0.0
    %2780 = vmatpush1.msra.mxu0 0.0
    %2781 = vmatprep.subr.mxu0 0.0
    %2782 = vmatpush1.msra.mxu0 0.0
    %2783 = vmatprep.subr.mxu0 0.0
    %2784 = vmatpush1.msra.mxu0 0.0
    %2785 = vmatprep.subr.mxu0 0.0
    %2786 = vmatpush1.msra.mxu0 0.0
    %2787 = vmatprep.subr.mxu0 0.0
    %2788 = vmatpush1.msra.mxu0 0.0
    %2789 = vmatprep.subr.mxu0 0.0
    %2790 = vmatpush1.msra.mxu0 0.0
    %2791 = vmatprep.subr.mxu0 0.0
    %2792 = vmatpush1.msra.mxu0 0.0
    %2793 = vmatprep.subr.mxu0 0.0
    %2794 = vmatpush1.msra.mxu0 0.0
    %2795 = vmatprep.subr.mxu0 0.0
    %2796 = vmatpush1.msra.mxu0 0.0
    %2797 = vmatprep.subr.mxu0 0.0
    %2798 = vmatpush1.msra.mxu0 0.0
    %2799 = vmatprep.subr.mxu0 0.0
    %2800 = vmatpush1.msra.mxu0 0.0
    %2801 = vmatprep.subr.mxu0 0.0
    %2802 = vmatpush1.msra.mxu0 0.0
    %2803 = vmatprep.subr.mxu0 0.0
    %2804 = vmatpush1.msra.mxu0 0.0
    %2805 = vmatprep.mubr.f32.mxu0 0.0
    %2806 = vmatmul.mubr.f32.gmra.mrb[0].mxu0 %v2668
    %v2807 = vpop.f32.mrb[0].mxu0
    %v2808 = vpop.f32.mrb[0].mxu0
    %v2809 = vadd.f32 %v2573, %v2808
    %2810 = vdwg.mxu0
    %2811 = vmatprep.subr.mxu0 0.0
    %2812 = vmatpush1.msra.mxu0 %v2661
    %2813 = vmatprep.subr.mxu0 0.0
    %2814 = vmatpush1.msra.mxu0 0.0
    %2815 = vmatprep.subr.mxu0 0.0
    %2816 = vmatpush1.msra.mxu0 0.0
    %2817 = vmatprep.subr.mxu0 0.0
    %2818 = vmatpush1.msra.mxu0 0.0
    %2819 = vmatprep.subr.mxu0 0.0
    %2820 = vmatpush1.msra.mxu0 0.0
    %2821 = vmatprep.subr.mxu0 0.0
    %2822 = vmatpush1.msra.mxu0 0.0
    %2823 = vmatprep.subr.mxu0 0.0
    %2824 = vmatpush1.msra.mxu0 0.0
    %2825 = vmatprep.subr.mxu0 0.0
    %2826 = vmatpush1.msra.mxu0 0.0
    %2827 = vmatprep.subr.mxu0 0.0
    %2828 = vmatpush1.msra.mxu0 0.0
    %2829 = vmatprep.subr.mxu0 0.0
    %2830 = vmatpush1.msra.mxu0 0.0
    %2831 = vmatprep.subr.mxu0 0.0
    %2832 = vmatpush1.msra.mxu0 0.0
    %2833 = vmatprep.subr.mxu0 0.0
    %2834 = vmatpush1.msra.mxu0 0.0
    %2835 = vmatprep.subr.mxu0 0.0
    %2836 = vmatpush1.msra.mxu0 0.0
    %2837 = vmatprep.subr.mxu0 0.0
    %2838 = vmatpush1.msra.mxu0 0.0
    %2839 = vmatprep.subr.mxu0 0.0
    %2840 = vmatpush1.msra.mxu0 0.0
    %2841 = vmatprep.subr.mxu0 0.0
    %2842 = vmatpush1.msra.mxu0 0.0
    %2843 = vmatprep.subr.mxu0 0.0
    %2844 = vmatpush1.msra.mxu0 0.0
    %2845 = vmatprep.subr.mxu0 0.0
    %2846 = vmatpush1.msra.mxu0 0.0
    %2847 = vmatprep.subr.mxu0 0.0
    %2848 = vmatpush1.msra.mxu0 0.0
    %2849 = vmatprep.subr.mxu0 0.0
    %2850 = vmatpush1.msra.mxu0 0.0
    %2851 = vmatprep.subr.mxu0 0.0
    %2852 = vmatpush1.msra.mxu0 0.0
    %2853 = vmatprep.subr.mxu0 0.0
    %2854 = vmatpush1.msra.mxu0 0.0
    %2855 = vmatprep.subr.mxu0 0.0
    %2856 = vmatpush1.msra.mxu0 0.0
    %2857 = vmatprep.subr.mxu0 0.0
    %2858 = vmatpush1.msra.mxu0 0.0
    %2859 = vmatprep.subr.mxu0 0.0
    %2860 = vmatpush1.msra.mxu0 0.0
    %2861 = vmatprep.subr.mxu0 0.0
    %2862 = vmatpush1.msra.mxu0 0.0
    %2863 = vmatprep.subr.mxu0 0.0
    %2864 = vmatpush1.msra.mxu0 0.0
    %2865 = vmatprep.subr.mxu0 0.0
    %2866 = vmatpush1.msra.mxu0 0.0
    %2867 = vmatprep.subr.mxu0 0.0
    %2868 = vmatpush1.msra.mxu0 0.0
    %2869 = vmatprep.subr.mxu0 0.0
    %2870 = vmatpush1.msra.mxu0 0.0
    %2871 = vmatprep.subr.mxu0 0.0
    %2872 = vmatpush1.msra.mxu0 0.0
    %2873 = vmatprep.subr.mxu0 0.0
    %2874 = vmatpush1.msra.mxu0 0.0
    %2875 = vmatprep.mubr.f32.mxu0 0.0
    %2876 = vmatmul.mubr.f32.gmra.mrb[0].mxu0 %v2668
    %v2877 = vpop.f32.mrb[0].mxu0
    %v2878 = vadd.f32 %v2642, %v2877
    %v2879 = vpop.f32.mrb[0].mxu0
    %2880 = vdwg.mxu0
    %v2881 = vld [vmem:[#allocation2 + $0x8] sm:$0xff]
    %v2882 = vld [vmem:[#allocation2 + $0x10] sm:$0xff]
    %v2883 = vld [vmem:[#allocation2 + $0x18] sm:$0xff]
    %v2884 = vld [vmem:[#allocation2 + $0x20] sm:$0xff]
    %v2885 = vld [vmem:[#allocation2 + $0x28] sm:$0xff]
    %v2886 = vld [vmem:[#allocation2 + $0x30] sm:$0xff]
    %s2887 = scalar_lea.vmem %s2, 48
    %v2888 = vld [vmem:[%s2887] sm:$0xff]
    %2895 = vrot.lane.b32.xlu0 %v2881, 113
    %v2896 = vpop.permute.xlu0 %2895
    %2897 = vrot.lane.b32.xlu0 %v2882, 113
    %v2898 = vpop.permute.xlu0 %2897
    %2899 = vrot.lane.b32.xlu0 %v2883, 113
    %v2900 = vpop.permute.xlu0 %2899
    %2901 = vrot.lane.b32.xlu0 %v2884, 113
    %v2902 = vpop.permute.xlu0 %2901
    %2903 = vrot.lane.b32.xlu0 %v2885, 113
    %v2904 = vpop.permute.xlu0 %2903
    %2905 = vrot.lane.b32.xlu0 %v2886, 113
    %v2906 = vpop.permute.xlu0 %2905
    %v2907 = vsel %vm621, %v2896, %v2898
    %v2908 = vsel %vm621, %v2898, %v2900
    %v2909 = vsel %vm621, %v2900, %v2902
    %v2910 = vsel %vm621, %v2902, %v2904
    %v2911 = vsel %vm621, %v2904, %v2906
    %v2918 = vsel %vm2430, %v2888, 0
    %2920 = vmatprep.subr.mxu0 %v2908
    %2921 = vmatpush1.msra.mxu0 %v2907
    %2922 = vmatprep.subr.mxu0 0.0
    %2923 = vmatpush1.msra.mxu0 0.0
    %2924 = vmatprep.subr.mxu0 0.0
    %2925 = vmatpush1.msra.mxu0 0.0
    %2926 = vmatprep.subr.mxu0 0.0
    %2927 = vmatpush1.msra.mxu0 0.0
    %2928 = vmatprep.subr.mxu0 0.0
    %2929 = vmatpush1.msra.mxu0 0.0
    %2930 = vmatprep.subr.mxu0 0.0
    %2931 = vmatpush1.msra.mxu0 0.0
    %2932 = vmatprep.subr.mxu0 0.0
    %2933 = vmatpush1.msra.mxu0 0.0
    %2934 = vmatprep.subr.mxu0 0.0
    %2935 = vmatpush1.msra.mxu0 0.0
    %2936 = vmatprep.subr.mxu0 0.0
    %2937 = vmatpush1.msra.mxu0 0.0
    %2938 = vmatprep.subr.mxu0 0.0
    %2939 = vmatpush1.msra.mxu0 0.0
    %2940 = vmatprep.subr.mxu0 0.0
    %2941 = vmatpush1.msra.mxu0 0.0
    %2942 = vmatprep.subr.mxu0 0.0
    %2943 = vmatpush1.msra.mxu0 0.0
    %2944 = vmatprep.subr.mxu0 0.0
    %2945 = vmatpush1.msra.mxu0 0.0
    %2946 = vmatprep.subr.mxu0 0.0
    %2947 = vmatpush1.msra.mxu0 0.0
    %2948 = vmatprep.subr.mxu0 0.0
    %2949 = vmatpush1.msra.mxu0 0.0
    %2950 = vmatprep.subr.mxu0 0.0
    %2951 = vmatpush1.msra.mxu0 0.0
    %2952 = vmatprep.subr.mxu0 0.0
    %2953 = vmatpush1.msra.mxu0 0.0
    %2954 = vmatprep.subr.mxu0 0.0
    %2955 = vmatpush1.msra.mxu0 0.0
    %2956 = vmatprep.subr.mxu0 0.0
    %2957 = vmatpush1.msra.mxu0 0.0
    %2958 = vmatprep.subr.mxu0 0.0
    %2959 = vmatpush1.msra.mxu0 0.0
    %2960 = vmatprep.subr.mxu0 0.0
    %2961 = vmatpush1.msra.mxu0 0.0
    %2962 = vmatprep.subr.mxu0 0.0
    %2963 = vmatpush1.msra.mxu0 0.0
    %2964 = vmatprep.subr.mxu0 0.0
    %2965 = vmatpush1.msra.mxu0 0.0
    %2966 = vmatprep.subr.mxu0 0.0
    %2967 = vmatpush1.msra.mxu0 0.0
    %2968 = vmatprep.subr.mxu0 0.0
    %2969 = vmatpush1.msra.mxu0 0.0
    %2970 = vmatprep.subr.mxu0 0.0
    %2971 = vmatpush1.msra.mxu0 0.0
    %2972 = vmatprep.subr.mxu0 0.0
    %2973 = vmatpush1.msra.mxu0 0.0
    %2974 = vmatprep.subr.mxu0 0.0
    %2975 = vmatpush1.msra.mxu0 0.0
    %2976 = vmatprep.subr.mxu0 0.0
    %2977 = vmatpush1.msra.mxu0 0.0
    %2978 = vmatprep.subr.mxu0 0.0
    %2979 = vmatpush1.msra.mxu0 0.0
    %2980 = vmatprep.subr.mxu0 0.0
    %2981 = vmatpush1.msra.mxu0 0.0
    %2982 = vmatprep.subr.mxu0 0.0
    %2983 = vmatpush1.msra.mxu0 0.0
    %2984 = vmatprep.mubr.f32.mxu0 0.0
    %2985 = vmatmul.mubr.f32.gmra.mrb[0].mxu0 %v2918
    %v2986 = vpop.f32.mrb[0].mxu0
    %v2987 = vadd.f32 0.0, %v2986
    %v2988 = vpop.f32.mrb[0].mxu0
    %v2989 = vadd.f32 0.0, %v2988
    %2990 = vdwg.mxu0
    %2991 = vmatprep.subr.mxu0 %v2910
    %2992 = vmatpush1.msra.mxu0 %v2909
    %2993 = vmatprep.subr.mxu0 0.0
    %2994 = vmatpush1.msra.mxu0 0.0
    %2995 = vmatprep.subr.mxu0 0.0
    %2996 = vmatpush1.msra.mxu0 0.0
    %2997 = vmatprep.subr.mxu0 0.0
    %2998 = vmatpush1.msra.mxu0 0.0
    %2999 = vmatprep.subr.mxu0 0.0
    %3000 = vmatpush1.msra.mxu0 0.0
    %3001 = vmatprep.subr.mxu0 0.0
    %3002 = vmatpush1.msra.mxu0 0.0
    %3003 = vmatprep.subr.mxu0 0.0
    %3004 = vmatpush1.msra.mxu0 0.0
    %3005 = vmatprep.subr.mxu0 0.0
    %3006 = vmatpush1.msra.mxu0 0.0
    %3007 = vmatprep.subr.mxu0 0.0
    %3008 = vmatpush1.msra.mxu0 0.0
    %3009 = vmatprep.subr.mxu0 0.0
    %3010 = vmatpush1.msra.mxu0 0.0
    %3011 = vmatprep.subr.mxu0 0.0
    %3012 = vmatpush1.msra.mxu0 0.0
    %3013 = vmatprep.subr.mxu0 0.0
    %3014 = vmatpush1.msra.mxu0 0.0
    %3015 = vmatprep.subr.mxu0 0.0
    %3016 = vmatpush1.msra.mxu0 0.0
    %3017 = vmatprep.subr.mxu0 0.0
    %3018 = vmatpush1.msra.mxu0 0.0
    %3019 = vmatprep.subr.mxu0 0.0
    %3020 = vmatpush1.msra.mxu0 0.0
    %3021 = vmatprep.subr.mxu0 0.0
    %3022 = vmatpush1.msra.mxu0 0.0
    %3023 = vmatprep.subr.mxu0 0.0
    %3024 = vmatpush1.msra.mxu0 0.0
    %3025 = vmatprep.subr.mxu0 0.0
    %3026 = vmatpush1.msra.mxu0 0.0
    %3027 = vmatprep.subr.mxu0 0.0
    %3028 = vmatpush1.msra.mxu0 0.0
    %3029 = vmatprep.subr.mxu0 0.0
    %3030 = vmatpush1.msra.mxu0 0.0
    %3031 = vmatprep.subr.mxu0 0.0
    %3032 = vmatpush1.msra.mxu0 0.0
    %3033 = vmatprep.subr.mxu0 0.0
    %3034 = vmatpush1.msra.mxu0 0.0
    %3035 = vmatprep.subr.mxu0 0.0
    %3036 = vmatpush1.msra.mxu0 0.0
    %3037 = vmatprep.subr.mxu0 0.0
    %3038 = vmatpush1.msra.mxu0 0.0
    %3039 = vmatprep.subr.mxu0 0.0
    %3040 = vmatpush1.msra.mxu0 0.0
    %3041 = vmatprep.subr.mxu0 0.0
    %3042 = vmatpush1.msra.mxu0 0.0
    %3043 = vmatprep.subr.mxu0 0.0
    %3044 = vmatpush1.msra.mxu0 0.0
    %3045 = vmatprep.subr.mxu0 0.0
    %3046 = vmatpush1.msra.mxu0 0.0
    %3047 = vmatprep.subr.mxu0 0.0
    %3048 = vmatpush1.msra.mxu0 0.0
    %3049 = vmatprep.subr.mxu0 0.0
    %3050 = vmatpush1.msra.mxu0 0.0
    %3051 = vmatprep.subr.mxu0 0.0
    %3052 = vmatpush1.msra.mxu0 0.0
    %3053 = vmatprep.subr.mxu0 0.0
    %3054 = vmatpush1.msra.mxu0 0.0
    %3055 = vmatprep.mubr.f32.mxu0 0.0
    %3056 = vmatmul.mubr.f32.gmra.mrb[0].mxu0 %v2918
    %v3057 = vpop.f32.mrb[0].mxu0
    %v3058 = vpop.f32.mrb[0].mxu0
    %v3059 = vadd.f32 0.0, %v3058
    %3060 = vdwg.mxu0
    %3061 = vmatprep.subr.mxu0 0.0
    %3062 = vmatpush1.msra.mxu0 %v2911
    %3063 = vmatprep.subr.mxu0 0.0
    %3064 = vmatpush1.msra.mxu0 0.0
    %3065 = vmatprep.subr.mxu0 0.0
    %3066 = vmatpush1.msra.mxu0 0.0
    %3067 = vmatprep.subr.mxu0 0.0
    %3068 = vmatpush1.msra.mxu0 0.0
    %3069 = vmatprep.subr.mxu0 0.0
    %3070 = vmatpush1.msra.mxu0 0.0
    %3071 = vmatprep.subr.mxu0 0.0
    %3072 = vmatpush1.msra.mxu0 0.0
    %3073 = vmatprep.subr.mxu0 0.0
    %3074 = vmatpush1.msra.mxu0 0.0
    %3075 = vmatprep.subr.mxu0 0.0
    %3076 = vmatpush1.msra.mxu0 0.0
    %3077 = vmatprep.subr.mxu0 0.0
    %3078 = vmatpush1.msra.mxu0 0.0
    %3079 = vmatprep.subr.mxu0 0.0
    %3080 = vmatpush1.msra.mxu0 0.0
    %3081 = vmatprep.subr.mxu0 0.0
    %3082 = vmatpush1.msra.mxu0 0.0
    %3083 = vmatprep.subr.mxu0 0.0
    %3084 = vmatpush1.msra.mxu0 0.0
    %3085 = vmatprep.subr.mxu0 0.0
    %3086 = vmatpush1.msra.mxu0 0.0
    %3087 = vmatprep.subr.mxu0 0.0
    %3088 = vmatpush1.msra.mxu0 0.0
    %3089 = vmatprep.subr.mxu0 0.0
    %3090 = vmatpush1.msra.mxu0 0.0
    %3091 = vmatprep.subr.mxu0 0.0
    %3092 = vmatpush1.msra.mxu0 0.0
    %3093 = vmatprep.subr.mxu0 0.0
    %3094 = vmatpush1.msra.mxu0 0.0
    %3095 = vmatprep.subr.mxu0 0.0
    %3096 = vmatpush1.msra.mxu0 0.0
    %3097 = vmatprep.subr.mxu0 0.0
    %3098 = vmatpush1.msra.mxu0 0.0
    %3099 = vmatprep.subr.mxu0 0.0
    %3100 = vmatpush1.msra.mxu0 0.0
    %3101 = vmatprep.subr.mxu0 0.0
    %3102 = vmatpush1.msra.mxu0 0.0
    %3103 = vmatprep.subr.mxu0 0.0
    %3104 = vmatpush1.msra.mxu0 0.0
    %3105 = vmatprep.subr.mxu0 0.0
    %3106 = vmatpush1.msra.mxu0 0.0
    %3107 = vmatprep.subr.mxu0 0.0
    %3108 = vmatpush1.msra.mxu0 0.0
    %3109 = vmatprep.subr.mxu0 0.0
    %3110 = vmatpush1.msra.mxu0 0.0
    %3111 = vmatprep.subr.mxu0 0.0
    %3112 = vmatpush1.msra.mxu0 0.0
    %3113 = vmatprep.subr.mxu0 0.0
    %3114 = vmatpush1.msra.mxu0 0.0
    %3115 = vmatprep.subr.mxu0 0.0
    %3116 = vmatpush1.msra.mxu0 0.0
    %3117 = vmatprep.subr.mxu0 0.0
    %3118 = vmatpush1.msra.mxu0 0.0
    %3119 = vmatprep.subr.mxu0 0.0
    %3120 = vmatpush1.msra.mxu0 0.0
    %3121 = vmatprep.subr.mxu0 0.0
    %3122 = vmatpush1.msra.mxu0 0.0
    %3123 = vmatprep.subr.mxu0 0.0
    %3124 = vmatpush1.msra.mxu0 0.0
    %3125 = vmatprep.mubr.f32.mxu0 0.0
    %3126 = vmatmul.mubr.f32.gmra.mrb[0].mxu0 %v2918
    %v3127 = vpop.f32.mrb[0].mxu0
    %v3128 = vadd.f32 0.0, %v3127
    %v3129 = vpop.f32.mrb[0].mxu0
    %3130 = vdwg.mxu0
    %v3131 = vadd.f32 %v2737, %v2987
    %v3132 = vadd.f32 %v2739, %v2989
    %v3133 = vadd.f32 %v2809, %v3059
    %v3134 = vadd.f32 %v2878, %v3128
    %v3135 = vmul.f32 %v3131, %v859
    %v3136 = vmul.f32 %v3132, %v863
    %v3137 = vmul.f32 %v3133, %v867
    %v3138 = vmul.f32 %v3134, %v871
    %s3139 = scalar_lea.vmem %s2, 8
    %v3140 = vld [vmem:[%s3139] sm:$0xff]
    %s3141 = scalar_lea.vmem %s2, 32
    %v3142 = vld [vmem:[%s3141] sm:$0xff]
    %v3144 = vsel %vm2430, %v3142, 0
    %3146 = vmatprep.subr.mxu0 %v2395
    %3147 = vmatpush1.msra.mxu0 %v2394
    %3148 = vmatprep.subr.mxu0 0.0
    %3149 = vmatpush1.msra.mxu0 0.0
    %3150 = vmatprep.subr.mxu0 0.0
    %3151 = vmatpush1.msra.mxu0 0.0
    %3152 = vmatprep.subr.mxu0 0.0
    %3153 = vmatpush1.msra.mxu0 0.0
    %3154 = vmatprep.subr.mxu0 0.0
    %3155 = vmatpush1.msra.mxu0 0.0
    %3156 = vmatprep.subr.mxu0 0.0
    %3157 = vmatpush1.msra.mxu0 0.0
    %3158 = vmatprep.subr.mxu0 0.0
    %3159 = vmatpush1.msra.mxu0 0.0
    %3160 = vmatprep.subr.mxu0 0.0
    %3161 = vmatpush1.msra.mxu0 0.0
    %3162 = vmatprep.subr.mxu0 0.0
    %3163 = vmatpush1.msra.mxu0 0.0
    %3164 = vmatprep.subr.mxu0 0.0
    %3165 = vmatpush1.msra.mxu0 0.0
    %3166 = vmatprep.subr.mxu0 0.0
    %3167 = vmatpush1.msra.mxu0 0.0
    %3168 = vmatprep.subr.mxu0 0.0
    %3169 = vmatpush1.msra.mxu0 0.0
    %3170 = vmatprep.subr.mxu0 0.0
    %3171 = vmatpush1.msra.mxu0 0.0
    %3172 = vmatprep.subr.mxu0 0.0
    %3173 = vmatpush1.msra.mxu0 0.0
    %3174 = vmatprep.subr.mxu0 0.0
    %3175 = vmatpush1.msra.mxu0 0.0
    %3176 = vmatprep.subr.mxu0 0.0
    %3177 = vmatpush1.msra.mxu0 0.0
    %3178 = vmatprep.subr.mxu0 0.0
    %3179 = vmatpush1.msra.mxu0 0.0
    %3180 = vmatprep.subr.mxu0 0.0
    %3181 = vmatpush1.msra.mxu0 0.0
    %3182 = vmatprep.subr.mxu0 0.0
    %3183 = vmatpush1.msra.mxu0 0.0
    %3184 = vmatprep.subr.mxu0 0.0
    %3185 = vmatpush1.msra.mxu0 0.0
    %3186 = vmatprep.subr.mxu0 0.0
    %3187 = vmatpush1.msra.mxu0 0.0
    %3188 = vmatprep.subr.mxu0 0.0
    %3189 = vmatpush1.msra.mxu0 0.0
    %3190 = vmatprep.subr.mxu0 0.0
    %3191 = vmatpush1.msra.mxu0 0.0
    %3192 = vmatprep.subr.mxu0 0.0
    %3193 = vmatpush1.msra.mxu0 0.0
    %3194 = vmatprep.subr.mxu0 0.0
    %3195 = vmatpush1.msra.mxu0 0.0
    %3196 = vmatprep.subr.mxu0 0.0
    %3197 = vmatpush1.msra.mxu0 0.0
    %3198 = vmatprep.subr.mxu0 0.0
    %3199 = vmatpush1.msra.mxu0 0.0
    %3200 = vmatprep.subr.mxu0 0.0
    %3201 = vmatpush1.msra.mxu0 0.0
    %3202 = vmatprep.subr.mxu0 0.0
    %3203 = vmatpush1.msra.mxu0 0.0
    %3204 = vmatprep.subr.mxu0 0.0
    %3205 = vmatpush1.msra.mxu0 0.0
    %3206 = vmatprep.subr.mxu0 0.0
    %3207 = vmatpush1.msra.mxu0 0.0
    %3208 = vmatprep.subr.mxu0 0.0
    %3209 = vmatpush1.msra.mxu0 0.0
    %3210 = vmatprep.mubr.f32.mxu0 0.0
    %3211 = vmatmul.mubr.f32.gmra.mrb[0].mxu0 %v3144
    %v3212 = vpop.f32.mrb[0].mxu0
    %v3213 = vadd.f32 0.0, %v3212
    %v3214 = vpop.f32.mrb[0].mxu0
    %v3215 = vadd.f32 0.0, %v3214
    %3216 = vdwg.mxu0
    %3217 = vmatprep.subr.mxu0 %v2397
    %3218 = vmatpush1.msra.mxu0 %v2396
    %3219 = vmatprep.subr.mxu0 0.0
    %3220 = vmatpush1.msra.mxu0 0.0
    %3221 = vmatprep.subr.mxu0 0.0
    %3222 = vmatpush1.msra.mxu0 0.0
    %3223 = vmatprep.subr.mxu0 0.0
    %3224 = vmatpush1.msra.mxu0 0.0
    %3225 = vmatprep.subr.mxu0 0.0
    %3226 = vmatpush1.msra.mxu0 0.0
    %3227 = vmatprep.subr.mxu0 0.0
    %3228 = vmatpush1.msra.mxu0 0.0
    %3229 = vmatprep.subr.mxu0 0.0
    %3230 = vmatpush1.msra.mxu0 0.0
    %3231 = vmatprep.subr.mxu0 0.0
    %3232 = vmatpush1.msra.mxu0 0.0
    %3233 = vmatprep.subr.mxu0 0.0
    %3234 = vmatpush1.msra.mxu0 0.0
    %3235 = vmatprep.subr.mxu0 0.0
    %3236 = vmatpush1.msra.mxu0 0.0
    %3237 = vmatprep.subr.mxu0 0.0
    %3238 = vmatpush1.msra.mxu0 0.0
    %3239 = vmatprep.subr.mxu0 0.0
    %3240 = vmatpush1.msra.mxu0 0.0
    %3241 = vmatprep.subr.mxu0 0.0
    %3242 = vmatpush1.msra.mxu0 0.0
    %3243 = vmatprep.subr.mxu0 0.0
    %3244 = vmatpush1.msra.mxu0 0.0
    %3245 = vmatprep.subr.mxu0 0.0
    %3246 = vmatpush1.msra.mxu0 0.0
    %3247 = vmatprep.subr.mxu0 0.0
    %3248 = vmatpush1.msra.mxu0 0.0
    %3249 = vmatprep.subr.mxu0 0.0
    %3250 = vmatpush1.msra.mxu0 0.0
    %3251 = vmatprep.subr.mxu0 0.0
    %3252 = vmatpush1.msra.mxu0 0.0
    %3253 = vmatprep.subr.mxu0 0.0
    %3254 = vmatpush1.msra.mxu0 0.0
    %3255 = vmatprep.subr.mxu0 0.0
    %3256 = vmatpush1.msra.mxu0 0.0
    %3257 = vmatprep.subr.mxu0 0.0
    %3258 = vmatpush1.msra.mxu0 0.0
    %3259 = vmatprep.subr.mxu0 0.0
    %3260 = vmatpush1.msra.mxu0 0.0
    %3261 = vmatprep.subr.mxu0 0.0
    %3262 = vmatpush1.msra.mxu0 0.0
    %3263 = vmatprep.subr.mxu0 0.0
    %3264 = vmatpush1.msra.mxu0 0.0
    %3265 = vmatprep.subr.mxu0 0.0
    %3266 = vmatpush1.msra.mxu0 0.0
    %3267 = vmatprep.subr.mxu0 0.0
    %3268 = vmatpush1.msra.mxu0 0.0
    %3269 = vmatprep.subr.mxu0 0.0
    %3270 = vmatpush1.msra.mxu0 0.0
    %3271 = vmatprep.subr.mxu0 0.0
    %3272 = vmatpush1.msra.mxu0 0.0
    %3273 = vmatprep.subr.mxu0 0.0
    %3274 = vmatpush1.msra.mxu0 0.0
    %3275 = vmatprep.subr.mxu0 0.0
    %3276 = vmatpush1.msra.mxu0 0.0
    %3277 = vmatprep.subr.mxu0 0.0
    %3278 = vmatpush1.msra.mxu0 0.0
    %3279 = vmatprep.subr.mxu0 0.0
    %3280 = vmatpush1.msra.mxu0 0.0
    %3281 = vmatprep.mubr.f32.mxu0 0.0
    %3282 = vmatmul.mubr.f32.gmra.mrb[0].mxu0 %v3144
    %v3283 = vpop.f32.mrb[0].mxu0
    %v3284 = vpop.f32.mrb[0].mxu0
    %v3285 = vadd.f32 0.0, %v3284
    %3286 = vdwg.mxu0
    %3287 = vmatprep.subr.mxu0 0.0
    %3288 = vmatpush1.msra.mxu0 %v2398
    %3289 = vmatprep.subr.mxu0 0.0
    %3290 = vmatpush1.msra.mxu0 0.0
    %3291 = vmatprep.subr.mxu0 0.0
    %3292 = vmatpush1.msra.mxu0 0.0
    %3293 = vmatprep.subr.mxu0 0.0
    %3294 = vmatpush1.msra.mxu0 0.0
    %3295 = vmatprep.subr.mxu0 0.0
    %3296 = vmatpush1.msra.mxu0 0.0
    %3297 = vmatprep.subr.mxu0 0.0
    %3298 = vmatpush1.msra.mxu0 0.0
    %3299 = vmatprep.subr.mxu0 0.0
    %3300 = vmatpush1.msra.mxu0 0.0
    %3301 = vmatprep.subr.mxu0 0.0
    %3302 = vmatpush1.msra.mxu0 0.0
    %3303 = vmatprep.subr.mxu0 0.0
    %3304 = vmatpush1.msra.mxu0 0.0
    %3305 = vmatprep.subr.mxu0 0.0
    %3306 = vmatpush1.msra.mxu0 0.0
    %3307 = vmatprep.subr.mxu0 0.0
    %3308 = vmatpush1.msra.mxu0 0.0
    %3309 = vmatprep.subr.mxu0 0.0
    %3310 = vmatpush1.msra.mxu0 0.0
    %3311 = vmatprep.subr.mxu0 0.0
    %3312 = vmatpush1.msra.mxu0 0.0
    %3313 = vmatprep.subr.mxu0 0.0
    %3314 = vmatpush1.msra.mxu0 0.0
    %3315 = vmatprep.subr.mxu0 0.0
    %3316 = vmatpush1.msra.mxu0 0.0
    %3317 = vmatprep.subr.mxu0 0.0
    %3318 = vmatpush1.msra.mxu0 0.0
    %3319 = vmatprep.subr.mxu0 0.0
    %3320 = vmatpush1.msra.mxu0 0.0
    %3321 = vmatprep.subr.mxu0 0.0
    %3322 = vmatpush1.msra.mxu0 0.0
    %3323 = vmatprep.subr.mxu0 0.0
    %3324 = vmatpush1.msra.mxu0 0.0
    %3325 = vmatprep.subr.mxu0 0.0
    %3326 = vmatpush1.msra.mxu0 0.0
    %3327 = vmatprep.subr.mxu0 0.0
    %3328 = vmatpush1.msra.mxu0 0.0
    %3329 = vmatprep.subr.mxu0 0.0
    %3330 = vmatpush1.msra.mxu0 0.0
    %3331 = vmatprep.subr.mxu0 0.0
    %3332 = vmatpush1.msra.mxu0 0.0
    %3333 = vmatprep.subr.mxu0 0.0
    %3334 = vmatpush1.msra.mxu0 0.0
    %3335 = vmatprep.subr.mxu0 0.0
    %3336 = vmatpush1.msra.mxu0 0.0
    %3337 = vmatprep.subr.mxu0 0.0
    %3338 = vmatpush1.msra.mxu0 0.0
    %3339 = vmatprep.subr.mxu0 0.0
    %3340 = vmatpush1.msra.mxu0 0.0
    %3341 = vmatprep.subr.mxu0 0.0
    %3342 = vmatpush1.msra.mxu0 0.0
    %3343 = vmatprep.subr.mxu0 0.0
    %3344 = vmatpush1.msra.mxu0 0.0
    %3345 = vmatprep.subr.mxu0 0.0
    %3346 = vmatpush1.msra.mxu0 0.0
    %3347 = vmatprep.subr.mxu0 0.0
    %3348 = vmatpush1.msra.mxu0 0.0
    %3349 = vmatprep.subr.mxu0 0.0
    %3350 = vmatpush1.msra.mxu0 0.0
    %3351 = vmatprep.mubr.f32.mxu0 0.0
    %3352 = vmatmul.mubr.f32.gmra.mrb[0].mxu0 %v3144
    %v3353 = vpop.f32.mrb[0].mxu0
    %v3354 = vadd.f32 0.0, %v3353
    %v3355 = vpop.f32.mrb[0].mxu0
    %3356 = vdwg.mxu0
    %3357 = vrot.lane.b32.xlu0 %v2393, 16
    %v3358 = vpop.permute.xlu0 %3357
    %3359 = vrot.lane.b32.xlu0 %v2394, 16
    %v3360 = vpop.permute.xlu0 %3359
    %3361 = vrot.lane.b32.xlu0 %v2395, 16
    %v3362 = vpop.permute.xlu0 %3361
    %3363 = vrot.lane.b32.xlu0 %v2396, 16
    %v3364 = vpop.permute.xlu0 %3363
    %3365 = vrot.lane.b32.xlu0 %v2397, 16
    %v3366 = vpop.permute.xlu0 %3365
    %3367 = vrot.lane.b32.xlu0 %v2398, 16
    %v3368 = vpop.permute.xlu0 %3367
    %v3369 = vsel %vm1120, %v3358, %v3360
    %v3370 = vsel %vm1120, %v3360, %v3362
    %v3371 = vsel %vm1120, %v3362, %v3364
    %v3372 = vsel %vm1120, %v3364, %v3366
    %v3373 = vsel %vm1120, %v3366, %v3368
    %v3380 = vsel %vm2430, %v3140, 0
    %3382 = vmatprep.subr.mxu0 %v3370
    %3383 = vmatpush1.msra.mxu0 %v3369
    %3384 = vmatprep.subr.mxu0 0.0
    %3385 = vmatpush1.msra.mxu0 0.0
    %3386 = vmatprep.subr.mxu0 0.0
    %3387 = vmatpush1.msra.mxu0 0.0
    %3388 = vmatprep.subr.mxu0 0.0
    %3389 = vmatpush1.msra.mxu0 0.0
    %3390 = vmatprep.subr.mxu0 0.0
    %3391 = vmatpush1.msra.mxu0 0.0
    %3392 = vmatprep.subr.mxu0 0.0
    %3393 = vmatpush1.msra.mxu0 0.0
    %3394 = vmatprep.subr.mxu0 0.0
    %3395 = vmatpush1.msra.mxu0 0.0
    %3396 = vmatprep.subr.mxu0 0.0
    %3397 = vmatpush1.msra.mxu0 0.0
    %3398 = vmatprep.subr.mxu0 0.0
    %3399 = vmatpush1.msra.mxu0 0.0
    %3400 = vmatprep.subr.mxu0 0.0
    %3401 = vmatpush1.msra.mxu0 0.0
    %3402 = vmatprep.subr.mxu0 0.0
    %3403 = vmatpush1.msra.mxu0 0.0
    %3404 = vmatprep.subr.mxu0 0.0
    %3405 = vmatpush1.msra.mxu0 0.0
    %3406 = vmatprep.subr.mxu0 0.0
    %3407 = vmatpush1.msra.mxu0 0.0
    %3408 = vmatprep.subr.mxu0 0.0
    %3409 = vmatpush1.msra.mxu0 0.0
    %3410 = vmatprep.subr.mxu0 0.0
    %3411 = vmatpush1.msra.mxu0 0.0
    %3412 = vmatprep.subr.mxu0 0.0
    %3413 = vmatpush1.msra.mxu0 0.0
    %3414 = vmatprep.subr.mxu0 0.0
    %3415 = vmatpush1.msra.mxu0 0.0
    %3416 = vmatprep.subr.mxu0 0.0
    %3417 = vmatpush1.msra.mxu0 0.0
    %3418 = vmatprep.subr.mxu0 0.0
    %3419 = vmatpush1.msra.mxu0 0.0
    %3420 = vmatprep.subr.mxu0 0.0
    %3421 = vmatpush1.msra.mxu0 0.0
    %3422 = vmatprep.subr.mxu0 0.0
    %3423 = vmatpush1.msra.mxu0 0.0
    %3424 = vmatprep.subr.mxu0 0.0
    %3425 = vmatpush1.msra.mxu0 0.0
    %3426 = vmatprep.subr.mxu0 0.0
    %3427 = vmatpush1.msra.mxu0 0.0
    %3428 = vmatprep.subr.mxu0 0.0
    %3429 = vmatpush1.msra.mxu0 0.0
    %3430 = vmatprep.subr.mxu0 0.0
    %3431 = vmatpush1.msra.mxu0 0.0
    %3432 = vmatprep.subr.mxu0 0.0
    %3433 = vmatpush1.msra.mxu0 0.0
    %3434 = vmatprep.subr.mxu0 0.0
    %3435 = vmatpush1.msra.mxu0 0.0
    %3436 = vmatprep.subr.mxu0 0.0
    %3437 = vmatpush1.msra.mxu0 0.0
    %3438 = vmatprep.subr.mxu0 0.0
    %3439 = vmatpush1.msra.mxu0 0.0
    %3440 = vmatprep.subr.mxu0 0.0
    %3441 = vmatpush1.msra.mxu0 0.0
    %3442 = vmatprep.subr.mxu0 0.0
    %3443 = vmatpush1.msra.mxu0 0.0
    %3444 = vmatprep.subr.mxu0 0.0
    %3445 = vmatpush1.msra.mxu0 0.0
    %3446 = vmatprep.mubr.f32.mxu0 0.0
    %3447 = vmatmul.mubr.f32.gmra.mrb[0].mxu0 %v3380
    %v3448 = vpop.f32.mrb[0].mxu0
    %v3449 = vadd.f32 %v3213, %v3448
    %v3450 = vpop.f32.mrb[0].mxu0
    %v3451 = vadd.f32 %v3215, %v3450
    %3452 = vdwg.mxu0
    %3453 = vmatprep.subr.mxu0 %v3372
    %3454 = vmatpush1.msra.mxu0 %v3371
    %3455 = vmatprep.subr.mxu0 0.0
    %3456 = vmatpush1.msra.mxu0 0.0
    %3457 = vmatprep.subr.mxu0 0.0
    %3458 = vmatpush1.msra.mxu0 0.0
    %3459 = vmatprep.subr.mxu0 0.0
    %3460 = vmatpush1.msra.mxu0 0.0
    %3461 = vmatprep.subr.mxu0 0.0
    %3462 = vmatpush1.msra.mxu0 0.0
    %3463 = vmatprep.subr.mxu0 0.0
    %3464 = vmatpush1.msra.mxu0 0.0
    %3465 = vmatprep.subr.mxu0 0.0
    %3466 = vmatpush1.msra.mxu0 0.0
    %3467 = vmatprep.subr.mxu0 0.0
    %3468 = vmatpush1.msra.mxu0 0.0
    %3469 = vmatprep.subr.mxu0 0.0
    %3470 = vmatpush1.msra.mxu0 0.0
    %3471 = vmatprep.subr.mxu0 0.0
    %3472 = vmatpush1.msra.mxu0 0.0
    %3473 = vmatprep.subr.mxu0 0.0
    %3474 = vmatpush1.msra.mxu0 0.0
    %3475 = vmatprep.subr.mxu0 0.0
    %3476 = vmatpush1.msra.mxu0 0.0
    %3477 = vmatprep.subr.mxu0 0.0
    %3478 = vmatpush1.msra.mxu0 0.0
    %3479 = vmatprep.subr.mxu0 0.0
    %3480 = vmatpush1.msra.mxu0 0.0
    %3481 = vmatprep.subr.mxu0 0.0
    %3482 = vmatpush1.msra.mxu0 0.0
    %3483 = vmatprep.subr.mxu0 0.0
    %3484 = vmatpush1.msra.mxu0 0.0
    %3485 = vmatprep.subr.mxu0 0.0
    %3486 = vmatpush1.msra.mxu0 0.0
    %3487 = vmatprep.subr.mxu0 0.0
    %3488 = vmatpush1.msra.mxu0 0.0
    %3489 = vmatprep.subr.mxu0 0.0
    %3490 = vmatpush1.msra.mxu0 0.0
    %3491 = vmatprep.subr.mxu0 0.0
    %3492 = vmatpush1.msra.mxu0 0.0
    %3493 = vmatprep.subr.mxu0 0.0
    %3494 = vmatpush1.msra.mxu0 0.0
    %3495 = vmatprep.subr.mxu0 0.0
    %3496 = vmatpush1.msra.mxu0 0.0
    %3497 = vmatprep.subr.mxu0 0.0
    %3498 = vmatpush1.msra.mxu0 0.0
    %3499 = vmatprep.subr.mxu0 0.0
    %3500 = vmatpush1.msra.mxu0 0.0
    %3501 = vmatprep.subr.mxu0 0.0
    %3502 = vmatpush1.msra.mxu0 0.0
    %3503 = vmatprep.subr.mxu0 0.0
    %3504 = vmatpush1.msra.mxu0 0.0
    %3505 = vmatprep.subr.mxu0 0.0
    %3506 = vmatpush1.msra.mxu0 0.0
    %3507 = vmatprep.subr.mxu0 0.0
    %3508 = vmatpush1.msra.mxu0 0.0
    %3509 = vmatprep.subr.mxu0 0.0
    %3510 = vmatpush1.msra.mxu0 0.0
    %3511 = vmatprep.subr.mxu0 0.0
    %3512 = vmatpush1.msra.mxu0 0.0
    %3513 = vmatprep.subr.mxu0 0.0
    %3514 = vmatpush1.msra.mxu0 0.0
    %3515 = vmatprep.subr.mxu0 0.0
    %3516 = vmatpush1.msra.mxu0 0.0
    %3517 = vmatprep.mubr.f32.mxu0 0.0
    %3518 = vmatmul.mubr.f32.gmra.mrb[0].mxu0 %v3380
    %v3519 = vpop.f32.mrb[0].mxu0
    %v3520 = vpop.f32.mrb[0].mxu0
    %v3521 = vadd.f32 %v3285, %v3520
    %3522 = vdwg.mxu0
    %3523 = vmatprep.subr.mxu0 0.0
    %3524 = vmatpush1.msra.mxu0 %v3373
    %3525 = vmatprep.subr.mxu0 0.0
    %3526 = vmatpush1.msra.mxu0 0.0
    %3527 = vmatprep.subr.mxu0 0.0
    %3528 = vmatpush1.msra.mxu0 0.0
    %3529 = vmatprep.subr.mxu0 0.0
    %3530 = vmatpush1.msra.mxu0 0.0
    %3531 = vmatprep.subr.mxu0 0.0
    %3532 = vmatpush1.msra.mxu0 0.0
    %3533 = vmatprep.subr.mxu0 0.0
    %3534 = vmatpush1.msra.mxu0 0.0
    %3535 = vmatprep.subr.mxu0 0.0
    %3536 = vmatpush1.msra.mxu0 0.0
    %3537 = vmatprep.subr.mxu0 0.0
    %3538 = vmatpush1.msra.mxu0 0.0
    %3539 = vmatprep.subr.mxu0 0.0
    %3540 = vmatpush1.msra.mxu0 0.0
    %3541 = vmatprep.subr.mxu0 0.0
    %3542 = vmatpush1.msra.mxu0 0.0
    %3543 = vmatprep.subr.mxu0 0.0
    %3544 = vmatpush1.msra.mxu0 0.0
    %3545 = vmatprep.subr.mxu0 0.0
    %3546 = vmatpush1.msra.mxu0 0.0
    %3547 = vmatprep.subr.mxu0 0.0
    %3548 = vmatpush1.msra.mxu0 0.0
    %3549 = vmatprep.subr.mxu0 0.0
    %3550 = vmatpush1.msra.mxu0 0.0
    %3551 = vmatprep.subr.mxu0 0.0
    %3552 = vmatpush1.msra.mxu0 0.0
    %3553 = vmatprep.subr.mxu0 0.0
    %3554 = vmatpush1.msra.mxu0 0.0
    %3555 = vmatprep.subr.mxu0 0.0
    %3556 = vmatpush1.msra.mxu0 0.0
    %3557 = vmatprep.subr.mxu0 0.0
    %3558 = vmatpush1.msra.mxu0 0.0
    %3559 = vmatprep.subr.mxu0 0.0
    %3560 = vmatpush1.msra.mxu0 0.0
    %3561 = vmatprep.subr.mxu0 0.0
    %3562 = vmatpush1.msra.mxu0 0.0
    %3563 = vmatprep.subr.mxu0 0.0
    %3564 = vmatpush1.msra.mxu0 0.0
    %3565 = vmatprep.subr.mxu0 0.0
    %3566 = vmatpush1.msra.mxu0 0.0
    %3567 = vmatprep.subr.mxu0 0.0
    %3568 = vmatpush1.msra.mxu0 0.0
    %3569 = vmatprep.subr.mxu0 0.0
    %3570 = vmatpush1.msra.mxu0 0.0
    %3571 = vmatprep.subr.mxu0 0.0
    %3572 = vmatpush1.msra.mxu0 0.0
    %3573 = vmatprep.subr.mxu0 0.0
    %3574 = vmatpush1.msra.mxu0 0.0
    %3575 = vmatprep.subr.mxu0 0.0
    %3576 = vmatpush1.msra.mxu0 0.0
    %3577 = vmatprep.subr.mxu0 0.0
    %3578 = vmatpush1.msra.mxu0 0.0
    %3579 = vmatprep.subr.mxu0 0.0
    %3580 = vmatpush1.msra.mxu0 0.0
    %3581 = vmatprep.subr.mxu0 0.0
    %3582 = vmatpush1.msra.mxu0 0.0
    %3583 = vmatprep.subr.mxu0 0.0
    %3584 = vmatpush1.msra.mxu0 0.0
    %3585 = vmatprep.subr.mxu0 0.0
    %3586 = vmatpush1.msra.mxu0 0.0
    %3587 = vmatprep.mubr.f32.mxu0 0.0
    %3588 = vmatmul.mubr.f32.gmra.mrb[0].mxu0 %v3380
    %v3589 = vpop.f32.mrb[0].mxu0
    %v3590 = vadd.f32 %v3354, %v3589
    %v3591 = vpop.f32.mrb[0].mxu0
    %3592 = vdwg.mxu0
    %s3593 = scalar_lea.vmem %s2, 56
    %v3594 = vld [vmem:[%s3593] sm:$0xff]
    %3595 = vrot.lane.b32.xlu0 %v2881, 112
    %v3596 = vpop.permute.xlu0 %3595
    %3597 = vrot.lane.b32.xlu0 %v2882, 112
    %v3598 = vpop.permute.xlu0 %3597
    %3599 = vrot.lane.b32.xlu0 %v2883, 112
    %v3600 = vpop.permute.xlu0 %3599
    %3601 = vrot.lane.b32.xlu0 %v2884, 112
    %v3602 = vpop.permute.xlu0 %3601
    %3603 = vrot.lane.b32.xlu0 %v2885, 112
    %v3604 = vpop.permute.xlu0 %3603
    %3605 = vrot.lane.b32.xlu0 %v2886, 112
    %v3606 = vpop.permute.xlu0 %3605
    %v3607 = vsel %vm1364, %v3596, %v3598
    %v3608 = vsel %vm1364, %v3598, %v3600
    %v3609 = vsel %vm1364, %v3600, %v3602
    %v3610 = vsel %vm1364, %v3602, %v3604
    %v3611 = vsel %vm1364, %v3604, %v3606
    %v3618 = vsel %vm2430, %v3594, 0
    %3620 = vmatprep.subr.mxu0 %v3608
    %3621 = vmatpush1.msra.mxu0 %v3607
    %3622 = vmatprep.subr.mxu0 0.0
    %3623 = vmatpush1.msra.mxu0 0.0
    %3624 = vmatprep.subr.mxu0 0.0
    %3625 = vmatpush1.msra.mxu0 0.0
    %3626 = vmatprep.subr.mxu0 0.0
    %3627 = vmatpush1.msra.mxu0 0.0
    %3628 = vmatprep.subr.mxu0 0.0
    %3629 = vmatpush1.msra.mxu0 0.0
    %3630 = vmatprep.subr.mxu0 0.0
    %3631 = vmatpush1.msra.mxu0 0.0
    %3632 = vmatprep.subr.mxu0 0.0
    %3633 = vmatpush1.msra.mxu0 0.0
    %3634 = vmatprep.subr.mxu0 0.0
    %3635 = vmatpush1.msra.mxu0 0.0
    %3636 = vmatprep.subr.mxu0 0.0
    %3637 = vmatpush1.msra.mxu0 0.0
    %3638 = vmatprep.subr.mxu0 0.0
    %3639 = vmatpush1.msra.mxu0 0.0
    %3640 = vmatprep.subr.mxu0 0.0
    %3641 = vmatpush1.msra.mxu0 0.0
    %3642 = vmatprep.subr.mxu0 0.0
    %3643 = vmatpush1.msra.mxu0 0.0
    %3644 = vmatprep.subr.mxu0 0.0
    %3645 = vmatpush1.msra.mxu0 0.0
    %3646 = vmatprep.subr.mxu0 0.0
    %3647 = vmatpush1.msra.mxu0 0.0
    %3648 = vmatprep.subr.mxu0 0.0
    %3649 = vmatpush1.msra.mxu0 0.0
    %3650 = vmatprep.subr.mxu0 0.0
    %3651 = vmatpush1.msra.mxu0 0.0
    %3652 = vmatprep.subr.mxu0 0.0
    %3653 = vmatpush1.msra.mxu0 0.0
    %3654 = vmatprep.subr.mxu0 0.0
    %3655 = vmatpush1.msra.mxu0 0.0
    %3656 = vmatprep.subr.mxu0 0.0
    %3657 = vmatpush1.msra.mxu0 0.0
    %3658 = vmatprep.subr.mxu0 0.0
    %3659 = vmatpush1.msra.mxu0 0.0
    %3660 = vmatprep.subr.mxu0 0.0
    %3661 = vmatpush1.msra.mxu0 0.0
    %3662 = vmatprep.subr.mxu0 0.0
    %3663 = vmatpush1.msra.mxu0 0.0
    %3664 = vmatprep.subr.mxu0 0.0
    %3665 = vmatpush1.msra.mxu0 0.0
    %3666 = vmatprep.subr.mxu0 0.0
    %3667 = vmatpush1.msra.mxu0 0.0
    %3668 = vmatprep.subr.mxu0 0.0
    %3669 = vmatpush1.msra.mxu0 0.0
    %3670 = vmatprep.subr.mxu0 0.0
    %3671 = vmatpush1.msra.mxu0 0.0
    %3672 = vmatprep.subr.mxu0 0.0
    %3673 = vmatpush1.msra.mxu0 0.0
    %3674 = vmatprep.subr.mxu0 0.0
    %3675 = vmatpush1.msra.mxu0 0.0
    %3676 = vmatprep.subr.mxu0 0.0
    %3677 = vmatpush1.msra.mxu0 0.0
    %3678 = vmatprep.subr.mxu0 0.0
    %3679 = vmatpush1.msra.mxu0 0.0
    %3680 = vmatprep.subr.mxu0 0.0
    %3681 = vmatpush1.msra.mxu0 0.0
    %3682 = vmatprep.subr.mxu0 0.0
    %3683 = vmatpush1.msra.mxu0 0.0
    %3684 = vmatprep.mubr.f32.mxu0 0.0
    %3685 = vmatmul.mubr.f32.gmra.mrb[0].mxu0 %v3618
    %v3686 = vpop.f32.mrb[0].mxu0
    %v3687 = vadd.f32 0.0, %v3686
    %v3688 = vpop.f32.mrb[0].mxu0
    %v3689 = vadd.f32 0.0, %v3688
    %3690 = vdwg.mxu0
    %3691 = vmatprep.subr.mxu0 %v3610
    %3692 = vmatpush1.msra.mxu0 %v3609
    %3693 = vmatprep.subr.mxu0 0.0
    %3694 = vmatpush1.msra.mxu0 0.0
    %3695 = vmatprep.subr.mxu0 0.0
    %3696 = vmatpush1.msra.mxu0 0.0
    %3697 = vmatprep.subr.mxu0 0.0
    %3698 = vmatpush1.msra.mxu0 0.0
    %3699 = vmatprep.subr.mxu0 0.0
    %3700 = vmatpush1.msra.mxu0 0.0
    %3701 = vmatprep.subr.mxu0 0.0
    %3702 = vmatpush1.msra.mxu0 0.0
    %3703 = vmatprep.subr.mxu0 0.0
    %3704 = vmatpush1.msra.mxu0 0.0
    %3705 = vmatprep.subr.mxu0 0.0
    %3706 = vmatpush1.msra.mxu0 0.0
    %3707 = vmatprep.subr.mxu0 0.0
    %3708 = vmatpush1.msra.mxu0 0.0
    %3709 = vmatprep.subr.mxu0 0.0
    %3710 = vmatpush1.msra.mxu0 0.0
    %3711 = vmatprep.subr.mxu0 0.0
    %3712 = vmatpush1.msra.mxu0 0.0
    %3713 = vmatprep.subr.mxu0 0.0
    %3714 = vmatpush1.msra.mxu0 0.0
    %3715 = vmatprep.subr.mxu0 0.0
    %3716 = vmatpush1.msra.mxu0 0.0
    %3717 = vmatprep.subr.mxu0 0.0
    %3718 = vmatpush1.msra.mxu0 0.0
    %3719 = vmatprep.subr.mxu0 0.0
    %3720 = vmatpush1.msra.mxu0 0.0
    %3721 = vmatprep.subr.mxu0 0.0
    %3722 = vmatpush1.msra.mxu0 0.0
    %3723 = vmatprep.subr.mxu0 0.0
    %3724 = vmatpush1.msra.mxu0 0.0
    %3725 = vmatprep.subr.mxu0 0.0
    %3726 = vmatpush1.msra.mxu0 0.0
    %3727 = vmatprep.subr.mxu0 0.0
    %3728 = vmatpush1.msra.mxu0 0.0
    %3729 = vmatprep.subr.mxu0 0.0
    %3730 = vmatpush1.msra.mxu0 0.0
    %3731 = vmatprep.subr.mxu0 0.0
    %3732 = vmatpush1.msra.mxu0 0.0
    %3733 = vmatprep.subr.mxu0 0.0
    %3734 = vmatpush1.msra.mxu0 0.0
    %3735 = vmatprep.subr.mxu0 0.0
    %3736 = vmatpush1.msra.mxu0 0.0
    %3737 = vmatprep.subr.mxu0 0.0
    %3738 = vmatpush1.msra.mxu0 0.0
    %3739 = vmatprep.subr.mxu0 0.0
    %3740 = vmatpush1.msra.mxu0 0.0
    %3741 = vmatprep.subr.mxu0 0.0
    %3742 = vmatpush1.msra.mxu0 0.0
    %3743 = vmatprep.subr.mxu0 0.0
    %3744 = vmatpush1.msra.mxu0 0.0
    %3745 = vmatprep.subr.mxu0 0.0
    %3746 = vmatpush1.msra.mxu0 0.0
    %3747 = vmatprep.subr.mxu0 0.0
    %3748 = vmatpush1.msra.mxu0 0.0
    %3749 = vmatprep.subr.mxu0 0.0
    %3750 = vmatpush1.msra.mxu0 0.0
    %3751 = vmatprep.subr.mxu0 0.0
    %3752 = vmatpush1.msra.mxu0 0.0
    %3753 = vmatprep.subr.mxu0 0.0
    %3754 = vmatpush1.msra.mxu0 0.0
    %3755 = vmatprep.mubr.f32.mxu0 0.0
    %3756 = vmatmul.mubr.f32.gmra.mrb[0].mxu0 %v3618
    %v3757 = vpop.f32.mrb[0].mxu0
    %v3758 = vpop.f32.mrb[0].mxu0
    %v3759 = vadd.f32 0.0, %v3758
    %3760 = vdwg.mxu0
    %3761 = vmatprep.subr.mxu0 0.0
    %3762 = vmatpush1.msra.mxu0 %v3611
    %3763 = vmatprep.subr.mxu0 0.0
    %3764 = vmatpush1.msra.mxu0 0.0
    %3765 = vmatprep.subr.mxu0 0.0
    %3766 = vmatpush1.msra.mxu0 0.0
    %3767 = vmatprep.subr.mxu0 0.0
    %3768 = vmatpush1.msra.mxu0 0.0
    %3769 = vmatprep.subr.mxu0 0.0
    %3770 = vmatpush1.msra.mxu0 0.0
    %3771 = vmatprep.subr.mxu0 0.0
    %3772 = vmatpush1.msra.mxu0 0.0
    %3773 = vmatprep.subr.mxu0 0.0
    %3774 = vmatpush1.msra.mxu0 0.0
    %3775 = vmatprep.subr.mxu0 0.0
    %3776 = vmatpush1.msra.mxu0 0.0
    %3777 = vmatprep.subr.mxu0 0.0
    %3778 = vmatpush1.msra.mxu0 0.0
    %3779 = vmatprep.subr.mxu0 0.0
    %3780 = vmatpush1.msra.mxu0 0.0
    %3781 = vmatprep.subr.mxu0 0.0
    %3782 = vmatpush1.msra.mxu0 0.0
    %3783 = vmatprep.subr.mxu0 0.0
    %3784 = vmatpush1.msra.mxu0 0.0
    %3785 = vmatprep.subr.mxu0 0.0
    %3786 = vmatpush1.msra.mxu0 0.0
    %3787 = vmatprep.subr.mxu0 0.0
    %3788 = vmatpush1.msra.mxu0 0.0
    %3789 = vmatprep.subr.mxu0 0.0
    %3790 = vmatpush1.msra.mxu0 0.0
    %3791 = vmatprep.subr.mxu0 0.0
    %3792 = vmatpush1.msra.mxu0 0.0
    %3793 = vmatprep.subr.mxu0 0.0
    %3794 = vmatpush1.msra.mxu0 0.0
    %3795 = vmatprep.subr.mxu0 0.0
    %3796 = vmatpush1.msra.mxu0 0.0
    %3797 = vmatprep.subr.mxu0 0.0
    %3798 = vmatpush1.msra.mxu0 0.0
    %3799 = vmatprep.subr.mxu0 0.0
    %3800 = vmatpush1.msra.mxu0 0.0
    %3801 = vmatprep.subr.mxu0 0.0
    %3802 = vmatpush1.msra.mxu0 0.0
    %3803 = vmatprep.subr.mxu0 0.0
    %3804 = vmatpush1.msra.mxu0 0.0
    %3805 = vmatprep.subr.mxu0 0.0
    %3806 = vmatpush1.msra.mxu0 0.0
    %3807 = vmatprep.subr.mxu0 0.0
    %3808 = vmatpush1.msra.mxu0 0.0
    %3809 = vmatprep.subr.mxu0 0.0
    %3810 = vmatpush1.msra.mxu0 0.0
    %3811 = vmatprep.subr.mxu0 0.0
    %3812 = vmatpush1.msra.mxu0 0.0
    %3813 = vmatprep.subr.mxu0 0.0
    %3814 = vmatpush1.msra.mxu0 0.0
    %3815 = vmatprep.subr.mxu0 0.0
    %3816 = vmatpush1.msra.mxu0 0.0
    %3817 = vmatprep.subr.mxu0 0.0
    %3818 = vmatpush1.msra.mxu0 0.0
    %3819 = vmatprep.subr.mxu0 0.0
    %3820 = vmatpush1.msra.mxu0 0.0
    %3821 = vmatprep.subr.mxu0 0.0
    %3822 = vmatpush1.msra.mxu0 0.0
    %3823 = vmatprep.subr.mxu0 0.0
    %3824 = vmatpush1.msra.mxu0 0.0
    %3825 = vmatprep.mubr.f32.mxu0 0.0
    %3826 = vmatmul.mubr.f32.gmra.mrb[0].mxu0 %v3618
    %v3827 = vpop.f32.mrb[0].mxu0
    %v3828 = vadd.f32 0.0, %v3827
    %v3829 = vpop.f32.mrb[0].mxu0
    %3830 = vdwg.mxu0
    %v3831 = vadd.f32 %v3449, %v3687
    %v3832 = vadd.f32 %v3451, %v3689
    %v3833 = vadd.f32 %v3521, %v3759
    %v3834 = vadd.f32 %v3590, %v3828
    %s3835 = scalar_lea.vmem %s2, 16
    %v3836 = vld [vmem:[%s3835] sm:$0xff]
    %s3837 = scalar_lea.vmem %s2, 40
    %v3838 = vld [vmem:[%s3837] sm:$0xff]
    %3839 = vrot.lane.b32.xlu0 %v2881, 127
    %v3840 = vpop.permute.xlu0 %3839
    %3841 = vrot.lane.b32.xlu0 %v2882, 127
    %v3842 = vpop.permute.xlu0 %3841
    %3843 = vrot.lane.b32.xlu0 %v2883, 127
    %v3844 = vpop.permute.xlu0 %3843
    %3845 = vrot.lane.b32.xlu0 %v2884, 127
    %v3846 = vpop.permute.xlu0 %3845
    %3847 = vrot.lane.b32.xlu0 %v2885, 127
    %v3848 = vpop.permute.xlu0 %3847
    %3849 = vrot.lane.b32.xlu0 %v2886, 127
    %v3850 = vpop.permute.xlu0 %3849
    %v3851 = vsel %vm1614, %v3840, %v3842
    %v3852 = vsel %vm1614, %v3842, %v3844
    %v3853 = vsel %vm1614, %v3844, %v3846
    %v3854 = vsel %vm1614, %v3846, %v3848
    %v3855 = vsel %vm1614, %v3848, %v3850
    %v3862 = vsel %vm2430, %v3838, 0
    %3864 = vmatprep.subr.mxu0 %v3852
    %3865 = vmatpush1.msra.mxu0 %v3851
    %3866 = vmatprep.subr.mxu0 0.0
    %3867 = vmatpush1.msra.mxu0 0.0
    %3868 = vmatprep.subr.mxu0 0.0
    %3869 = vmatpush1.msra.mxu0 0.0
    %3870 = vmatprep.subr.mxu0 0.0
    %3871 = vmatpush1.msra.mxu0 0.0
    %3872 = vmatprep.subr.mxu0 0.0
    %3873 = vmatpush1.msra.mxu0 0.0
    %3874 = vmatprep.subr.mxu0 0.0
    %3875 = vmatpush1.msra.mxu0 0.0
    %3876 = vmatprep.subr.mxu0 0.0
    %3877 = vmatpush1.msra.mxu0 0.0
    %3878 = vmatprep.subr.mxu0 0.0
    %3879 = vmatpush1.msra.mxu0 0.0
    %3880 = vmatprep.subr.mxu0 0.0
    %3881 = vmatpush1.msra.mxu0 0.0
    %3882 = vmatprep.subr.mxu0 0.0
    %3883 = vmatpush1.msra.mxu0 0.0
    %3884 = vmatprep.subr.mxu0 0.0
    %3885 = vmatpush1.msra.mxu0 0.0
    %3886 = vmatprep.subr.mxu0 0.0
    %3887 = vmatpush1.msra.mxu0 0.0
    %3888 = vmatprep.subr.mxu0 0.0
    %3889 = vmatpush1.msra.mxu0 0.0
    %3890 = vmatprep.subr.mxu0 0.0
    %3891 = vmatpush1.msra.mxu0 0.0
    %3892 = vmatprep.subr.mxu0 0.0
    %3893 = vmatpush1.msra.mxu0 0.0
    %3894 = vmatprep.subr.mxu0 0.0
    %3895 = vmatpush1.msra.mxu0 0.0
    %3896 = vmatprep.subr.mxu0 0.0
    %3897 = vmatpush1.msra.mxu0 0.0
    %3898 = vmatprep.subr.mxu0 0.0
    %3899 = vmatpush1.msra.mxu0 0.0
    %3900 = vmatprep.subr.mxu0 0.0
    %3901 = vmatpush1.msra.mxu0 0.0
    %3902 = vmatprep.subr.mxu0 0.0
    %3903 = vmatpush1.msra.mxu0 0.0
    %3904 = vmatprep.subr.mxu0 0.0
    %3905 = vmatpush1.msra.mxu0 0.0
    %3906 = vmatprep.subr.mxu0 0.0
    %3907 = vmatpush1.msra.mxu0 0.0
    %3908 = vmatprep.subr.mxu0 0.0
    %3909 = vmatpush1.msra.mxu0 0.0
    %3910 = vmatprep.subr.mxu0 0.0
    %3911 = vmatpush1.msra.mxu0 0.0
    %3912 = vmatprep.subr.mxu0 0.0
    %3913 = vmatpush1.msra.mxu0 0.0
    %3914 = vmatprep.subr.mxu0 0.0
    %3915 = vmatpush1.msra.mxu0 0.0
    %3916 = vmatprep.subr.mxu0 0.0
    %3917 = vmatpush1.msra.mxu0 0.0
    %3918 = vmatprep.subr.mxu0 0.0
    %3919 = vmatpush1.msra.mxu0 0.0
    %3920 = vmatprep.subr.mxu0 0.0
    %3921 = vmatpush1.msra.mxu0 0.0
    %3922 = vmatprep.subr.mxu0 0.0
    %3923 = vmatpush1.msra.mxu0 0.0
    %3924 = vmatprep.subr.mxu0 0.0
    %3925 = vmatpush1.msra.mxu0 0.0
    %3926 = vmatprep.subr.mxu0 0.0
    %3927 = vmatpush1.msra.mxu0 0.0
    %3928 = vmatprep.mubr.f32.mxu0 0.0
    %3929 = vmatmul.mubr.f32.gmra.mrb[0].mxu0 %v3862
    %v3930 = vpop.f32.mrb[0].mxu0
    %v3931 = vadd.f32 0.0, %v3930
    %v3932 = vpop.f32.mrb[0].mxu0
    %v3933 = vadd.f32 0.0, %v3932
    %3934 = vdwg.mxu0
    %3935 = vmatprep.subr.mxu0 %v3854
    %3936 = vmatpush1.msra.mxu0 %v3853
    %3937 = vmatprep.subr.mxu0 0.0
    %3938 = vmatpush1.msra.mxu0 0.0
    %3939 = vmatprep.subr.mxu0 0.0
    %3940 = vmatpush1.msra.mxu0 0.0
    %3941 = vmatprep.subr.mxu0 0.0
    %3942 = vmatpush1.msra.mxu0 0.0
    %3943 = vmatprep.subr.mxu0 0.0
    %3944 = vmatpush1.msra.mxu0 0.0
    %3945 = vmatprep.subr.mxu0 0.0
    %3946 = vmatpush1.msra.mxu0 0.0
    %3947 = vmatprep.subr.mxu0 0.0
    %3948 = vmatpush1.msra.mxu0 0.0
    %3949 = vmatprep.subr.mxu0 0.0
    %3950 = vmatpush1.msra.mxu0 0.0
    %3951 = vmatprep.subr.mxu0 0.0
    %3952 = vmatpush1.msra.mxu0 0.0
    %3953 = vmatprep.subr.mxu0 0.0
    %3954 = vmatpush1.msra.mxu0 0.0
    %3955 = vmatprep.subr.mxu0 0.0
    %3956 = vmatpush1.msra.mxu0 0.0
    %3957 = vmatprep.subr.mxu0 0.0
    %3958 = vmatpush1.msra.mxu0 0.0
    %3959 = vmatprep.subr.mxu0 0.0
    %3960 = vmatpush1.msra.mxu0 0.0
    %3961 = vmatprep.subr.mxu0 0.0
    %3962 = vmatpush1.msra.mxu0 0.0
    %3963 = vmatprep.subr.mxu0 0.0
    %3964 = vmatpush1.msra.mxu0 0.0
    %3965 = vmatprep.subr.mxu0 0.0
    %3966 = vmatpush1.msra.mxu0 0.0
    %3967 = vmatprep.subr.mxu0 0.0
    %3968 = vmatpush1.msra.mxu0 0.0
    %3969 = vmatprep.subr.mxu0 0.0
    %3970 = vmatpush1.msra.mxu0 0.0
    %3971 = vmatprep.subr.mxu0 0.0
    %3972 = vmatpush1.msra.mxu0 0.0
    %3973 = vmatprep.subr.mxu0 0.0
    %3974 = vmatpush1.msra.mxu0 0.0
    %3975 = vmatprep.subr.mxu0 0.0
    %3976 = vmatpush1.msra.mxu0 0.0
    %3977 = vmatprep.subr.mxu0 0.0
    %3978 = vmatpush1.msra.mxu0 0.0
    %3979 = vmatprep.subr.mxu0 0.0
    %3980 = vmatpush1.msra.mxu0 0.0
    %3981 = vmatprep.subr.mxu0 0.0
    %3982 = vmatpush1.msra.mxu0 0.0
    %3983 = vmatprep.subr.mxu0 0.0
    %3984 = vmatpush1.msra.mxu0 0.0
    %3985 = vmatprep.subr.mxu0 0.0
    %3986 = vmatpush1.msra.mxu0 0.0
    %3987 = vmatprep.subr.mxu0 0.0
    %3988 = vmatpush1.msra.mxu0 0.0
    %3989 = vmatprep.subr.mxu0 0.0
    %3990 = vmatpush1.msra.mxu0 0.0
    %3991 = vmatprep.subr.mxu0 0.0
    %3992 = vmatpush1.msra.mxu0 0.0
    %3993 = vmatprep.subr.mxu0 0.0
    %3994 = vmatpush1.msra.mxu0 0.0
    %3995 = vmatprep.subr.mxu0 0.0
    %3996 = vmatpush1.msra.mxu0 0.0
    %3997 = vmatprep.subr.mxu0 0.0
    %3998 = vmatpush1.msra.mxu0 0.0
    %3999 = vmatprep.mubr.f32.mxu0 0.0
    %4000 = vmatmul.mubr.f32.gmra.mrb[0].mxu0 %v3862
    %v4001 = vpop.f32.mrb[0].mxu0
    %v4002 = vpop.f32.mrb[0].mxu0
    %v4003 = vadd.f32 0.0, %v4002
    %4004 = vdwg.mxu0
    %4005 = vmatprep.subr.mxu0 0.0
    %4006 = vmatpush1.msra.mxu0 %v3855
    %4007 = vmatprep.subr.mxu0 0.0
    %4008 = vmatpush1.msra.mxu0 0.0
    %4009 = vmatprep.subr.mxu0 0.0
    %4010 = vmatpush1.msra.mxu0 0.0
    %4011 = vmatprep.subr.mxu0 0.0
    %4012 = vmatpush1.msra.mxu0 0.0
    %4013 = vmatprep.subr.mxu0 0.0
    %4014 = vmatpush1.msra.mxu0 0.0
    %4015 = vmatprep.subr.mxu0 0.0
    %4016 = vmatpush1.msra.mxu0 0.0
    %4017 = vmatprep.subr.mxu0 0.0
    %4018 = vmatpush1.msra.mxu0 0.0
    %4019 = vmatprep.subr.mxu0 0.0
    %4020 = vmatpush1.msra.mxu0 0.0
    %4021 = vmatprep.subr.mxu0 0.0
    %4022 = vmatpush1.msra.mxu0 0.0
    %4023 = vmatprep.subr.mxu0 0.0
    %4024 = vmatpush1.msra.mxu0 0.0
    %4025 = vmatprep.subr.mxu0 0.0
    %4026 = vmatpush1.msra.mxu0 0.0
    %4027 = vmatprep.subr.mxu0 0.0
    %4028 = vmatpush1.msra.mxu0 0.0
    %4029 = vmatprep.subr.mxu0 0.0
    %4030 = vmatpush1.msra.mxu0 0.0
    %4031 = vmatprep.subr.mxu0 0.0
    %4032 = vmatpush1.msra.mxu0 0.0
    %4033 = vmatprep.subr.mxu0 0.0
    %4034 = vmatpush1.msra.mxu0 0.0
    %4035 = vmatprep.subr.mxu0 0.0
    %4036 = vmatpush1.msra.mxu0 0.0
    %4037 = vmatprep.subr.mxu0 0.0
    %4038 = vmatpush1.msra.mxu0 0.0
    %4039 = vmatprep.subr.mxu0 0.0
    %4040 = vmatpush1.msra.mxu0 0.0
    %4041 = vmatprep.subr.mxu0 0.0
    %4042 = vmatpush1.msra.mxu0 0.0
    %4043 = vmatprep.subr.mxu0 0.0
    %4044 = vmatpush1.msra.mxu0 0.0
    %4045 = vmatprep.subr.mxu0 0.0
    %4046 = vmatpush1.msra.mxu0 0.0
    %4047 = vmatprep.subr.mxu0 0.0
    %4048 = vmatpush1.msra.mxu0 0.0
    %4049 = vmatprep.subr.mxu0 0.0
    %4050 = vmatpush1.msra.mxu0 0.0
    %4051 = vmatprep.subr.mxu0 0.0
    %4052 = vmatpush1.msra.mxu0 0.0
    %4053 = vmatprep.subr.mxu0 0.0
    %4054 = vmatpush1.msra.mxu0 0.0
    %4055 = vmatprep.subr.mxu0 0.0
    %4056 = vmatpush1.msra.mxu0 0.0
    %4057 = vmatprep.subr.mxu0 0.0
    %4058 = vmatpush1.msra.mxu0 0.0
    %4059 = vmatprep.subr.mxu0 0.0
    %4060 = vmatpush1.msra.mxu0 0.0
    %4061 = vmatprep.subr.mxu0 0.0
    %4062 = vmatpush1.msra.mxu0 0.0
    %4063 = vmatprep.subr.mxu0 0.0
    %4064 = vmatpush1.msra.mxu0 0.0
    %4065 = vmatprep.subr.mxu0 0.0
    %4066 = vmatpush1.msra.mxu0 0.0
    %4067 = vmatprep.subr.mxu0 0.0
    %4068 = vmatpush1.msra.mxu0 0.0
    %4069 = vmatprep.mubr.f32.mxu0 0.0
    %4070 = vmatmul.mubr.f32.gmra.mrb[0].mxu0 %v3862
    %v4071 = vpop.f32.mrb[0].mxu0
    %v4072 = vadd.f32 0.0, %v4071
    %v4073 = vpop.f32.mrb[0].mxu0
    %4074 = vdwg.mxu0
    %4075 = vrot.lane.b32.xlu0 %v2393, 15
    %v4076 = vpop.permute.xlu0 %4075
    %4077 = vrot.lane.b32.xlu0 %v2394, 15
    %v4078 = vpop.permute.xlu0 %4077
    %4079 = vrot.lane.b32.xlu0 %v2395, 15
    %v4080 = vpop.permute.xlu0 %4079
    %4081 = vrot.lane.b32.xlu0 %v2396, 15
    %v4082 = vpop.permute.xlu0 %4081
    %4083 = vrot.lane.b32.xlu0 %v2397, 15
    %v4084 = vpop.permute.xlu0 %4083
    %4085 = vrot.lane.b32.xlu0 %v2398, 15
    %v4086 = vpop.permute.xlu0 %4085
    %v4087 = vsel %vm1856, %v4076, %v4078
    %v4088 = vsel %vm1856, %v4078, %v4080
    %v4089 = vsel %vm1856, %v4080, %v4082
    %v4090 = vsel %vm1856, %v4082, %v4084
    %v4091 = vsel %vm1856, %v4084, %v4086
    %v4098 = vsel %vm2430, %v3836, 0
    %4100 = vmatprep.subr.mxu0 %v4088
    %4101 = vmatpush1.msra.mxu0 %v4087
    %4102 = vmatprep.subr.mxu0 0.0
    %4103 = vmatpush1.msra.mxu0 0.0
    %4104 = vmatprep.subr.mxu0 0.0
    %4105 = vmatpush1.msra.mxu0 0.0
    %4106 = vmatprep.subr.mxu0 0.0
    %4107 = vmatpush1.msra.mxu0 0.0
    %4108 = vmatprep.subr.mxu0 0.0
    %4109 = vmatpush1.msra.mxu0 0.0
    %4110 = vmatprep.subr.mxu0 0.0
    %4111 = vmatpush1.msra.mxu0 0.0
    %4112 = vmatprep.subr.mxu0 0.0
    %4113 = vmatpush1.msra.mxu0 0.0
    %4114 = vmatprep.subr.mxu0 0.0
    %4115 = vmatpush1.msra.mxu0 0.0
    %4116 = vmatprep.subr.mxu0 0.0
    %4117 = vmatpush1.msra.mxu0 0.0
    %4118 = vmatprep.subr.mxu0 0.0
    %4119 = vmatpush1.msra.mxu0 0.0
    %4120 = vmatprep.subr.mxu0 0.0
    %4121 = vmatpush1.msra.mxu0 0.0
    %4122 = vmatprep.subr.mxu0 0.0
    %4123 = vmatpush1.msra.mxu0 0.0
    %4124 = vmatprep.subr.mxu0 0.0
    %4125 = vmatpush1.msra.mxu0 0.0
    %4126 = vmatprep.subr.mxu0 0.0
    %4127 = vmatpush1.msra.mxu0 0.0
    %4128 = vmatprep.subr.mxu0 0.0
    %4129 = vmatpush1.msra.mxu0 0.0
    %4130 = vmatprep.subr.mxu0 0.0
    %4131 = vmatpush1.msra.mxu0 0.0
    %4132 = vmatprep.subr.mxu0 0.0
    %4133 = vmatpush1.msra.mxu0 0.0
    %4134 = vmatprep.subr.mxu0 0.0
    %4135 = vmatpush1.msra.mxu0 0.0
    %4136 = vmatprep.subr.mxu0 0.0
    %4137 = vmatpush1.msra.mxu0 0.0
    %4138 = vmatprep.subr.mxu0 0.0
    %4139 = vmatpush1.msra.mxu0 0.0
    %4140 = vmatprep.subr.mxu0 0.0
    %4141 = vmatpush1.msra.mxu0 0.0
    %4142 = vmatprep.subr.mxu0 0.0
    %4143 = vmatpush1.msra.mxu0 0.0
    %4144 = vmatprep.subr.mxu0 0.0
    %4145 = vmatpush1.msra.mxu0 0.0
    %4146 = vmatprep.subr.mxu0 0.0
    %4147 = vmatpush1.msra.mxu0 0.0
    %4148 = vmatprep.subr.mxu0 0.0
    %4149 = vmatpush1.msra.mxu0 0.0
    %4150 = vmatprep.subr.mxu0 0.0
    %4151 = vmatpush1.msra.mxu0 0.0
    %4152 = vmatprep.subr.mxu0 0.0
    %4153 = vmatpush1.msra.mxu0 0.0
    %4154 = vmatprep.subr.mxu0 0.0
    %4155 = vmatpush1.msra.mxu0 0.0
    %4156 = vmatprep.subr.mxu0 0.0
    %4157 = vmatpush1.msra.mxu0 0.0
    %4158 = vmatprep.subr.mxu0 0.0
    %4159 = vmatpush1.msra.mxu0 0.0
    %4160 = vmatprep.subr.mxu0 0.0
    %4161 = vmatpush1.msra.mxu0 0.0
    %4162 = vmatprep.subr.mxu0 0.0
    %4163 = vmatpush1.msra.mxu0 0.0
    %4164 = vmatprep.mubr.f32.mxu0 0.0
    %4165 = vmatmul.mubr.f32.gmra.mrb[0].mxu0 %v4098
    %v4166 = vpop.f32.mrb[0].mxu0
    %v4167 = vadd.f32 %v3931, %v4166
    %v4168 = vpop.f32.mrb[0].mxu0
    %v4169 = vadd.f32 %v3933, %v4168
    %4170 = vdwg.mxu0
    %4171 = vmatprep.subr.mxu0 %v4090
    %4172 = vmatpush1.msra.mxu0 %v4089
    %4173 = vmatprep.subr.mxu0 0.0
    %4174 = vmatpush1.msra.mxu0 0.0
    %4175 = vmatprep.subr.mxu0 0.0
    %4176 = vmatpush1.msra.mxu0 0.0
    %4177 = vmatprep.subr.mxu0 0.0
    %4178 = vmatpush1.msra.mxu0 0.0
    %4179 = vmatprep.subr.mxu0 0.0
    %4180 = vmatpush1.msra.mxu0 0.0
    %4181 = vmatprep.subr.mxu0 0.0
    %4182 = vmatpush1.msra.mxu0 0.0
    %4183 = vmatprep.subr.mxu0 0.0
    %4184 = vmatpush1.msra.mxu0 0.0
    %4185 = vmatprep.subr.mxu0 0.0
    %4186 = vmatpush1.msra.mxu0 0.0
    %4187 = vmatprep.subr.mxu0 0.0
    %4188 = vmatpush1.msra.mxu0 0.0
    %4189 = vmatprep.subr.mxu0 0.0
    %4190 = vmatpush1.msra.mxu0 0.0
    %4191 = vmatprep.subr.mxu0 0.0
    %4192 = vmatpush1.msra.mxu0 0.0
    %4193 = vmatprep.subr.mxu0 0.0
    %4194 = vmatpush1.msra.mxu0 0.0
    %4195 = vmatprep.subr.mxu0 0.0
    %4196 = vmatpush1.msra.mxu0 0.0
    %4197 = vmatprep.subr.mxu0 0.0
    %4198 = vmatpush1.msra.mxu0 0.0
    %4199 = vmatprep.subr.mxu0 0.0
    %4200 = vmatpush1.msra.mxu0 0.0
    %4201 = vmatprep.subr.mxu0 0.0
    %4202 = vmatpush1.msra.mxu0 0.0
    %4203 = vmatprep.subr.mxu0 0.0
    %4204 = vmatpush1.msra.mxu0 0.0
    %4205 = vmatprep.subr.mxu0 0.0
    %4206 = vmatpush1.msra.mxu0 0.0
    %4207 = vmatprep.subr.mxu0 0.0
    %4208 = vmatpush1.msra.mxu0 0.0
    %4209 = vmatprep.subr.mxu0 0.0
    %4210 = vmatpush1.msra.mxu0 0.0
    %4211 = vmatprep.subr.mxu0 0.0
    %4212 = vmatpush1.msra.mxu0 0.0
    %4213 = vmatprep.subr.mxu0 0.0
    %4214 = vmatpush1.msra.mxu0 0.0
    %4215 = vmatprep.subr.mxu0 0.0
    %4216 = vmatpush1.msra.mxu0 0.0
    %4217 = vmatprep.subr.mxu0 0.0
    %4218 = vmatpush1.msra.mxu0 0.0
    %4219 = vmatprep.subr.mxu0 0.0
    %4220 = vmatpush1.msra.mxu0 0.0
    %4221 = vmatprep.subr.mxu0 0.0
    %4222 = vmatpush1.msra.mxu0 0.0
    %4223 = vmatprep.subr.mxu0 0.0
    %4224 = vmatpush1.msra.mxu0 0.0
    %4225 = vmatprep.subr.mxu0 0.0
    %4226 = vmatpush1.msra.mxu0 0.0
    %4227 = vmatprep.subr.mxu0 0.0
    %4228 = vmatpush1.msra.mxu0 0.0
    %4229 = vmatprep.subr.mxu0 0.0
    %4230 = vmatpush1.msra.mxu0 0.0
    %4231 = vmatprep.subr.mxu0 0.0
    %4232 = vmatpush1.msra.mxu0 0.0
    %4233 = vmatprep.subr.mxu0 0.0
    %4234 = vmatpush1.msra.mxu0 0.0
    %4235 = vmatprep.mubr.f32.mxu0 0.0
    %4236 = vmatmul.mubr.f32.gmra.mrb[0].mxu0 %v4098
    %v4237 = vpop.f32.mrb[0].mxu0
    %v4238 = vpop.f32.mrb[0].mxu0
    %v4239 = vadd.f32 %v4003, %v4238
    %4240 = vdwg.mxu0
    %4241 = vmatprep.subr.mxu0 0.0
    %4242 = vmatpush1.msra.mxu0 %v4091
    %4243 = vmatprep.subr.mxu0 0.0
    %4244 = vmatpush1.msra.mxu0 0.0
    %4245 = vmatprep.subr.mxu0 0.0
    %4246 = vmatpush1.msra.mxu0 0.0
    %4247 = vmatprep.subr.mxu0 0.0
    %4248 = vmatpush1.msra.mxu0 0.0
    %4249 = vmatprep.subr.mxu0 0.0
    %4250 = vmatpush1.msra.mxu0 0.0
    %4251 = vmatprep.subr.mxu0 0.0
    %4252 = vmatpush1.msra.mxu0 0.0
    %4253 = vmatprep.subr.mxu0 0.0
    %4254 = vmatpush1.msra.mxu0 0.0
    %4255 = vmatprep.subr.mxu0 0.0
    %4256 = vmatpush1.msra.mxu0 0.0
    %4257 = vmatprep.subr.mxu0 0.0
    %4258 = vmatpush1.msra.mxu0 0.0
    %4259 = vmatprep.subr.mxu0 0.0
    %4260 = vmatpush1.msra.mxu0 0.0
    %4261 = vmatprep.subr.mxu0 0.0
    %4262 = vmatpush1.msra.mxu0 0.0
    %4263 = vmatprep.subr.mxu0 0.0
    %4264 = vmatpush1.msra.mxu0 0.0
    %4265 = vmatprep.subr.mxu0 0.0
    %4266 = vmatpush1.msra.mxu0 0.0
    %4267 = vmatprep.subr.mxu0 0.0
    %4268 = vmatpush1.msra.mxu0 0.0
    %4269 = vmatprep.subr.mxu0 0.0
    %4270 = vmatpush1.msra.mxu0 0.0
    %4271 = vmatprep.subr.mxu0 0.0
    %4272 = vmatpush1.msra.mxu0 0.0
    %4273 = vmatprep.subr.mxu0 0.0
    %4274 = vmatpush1.msra.mxu0 0.0
    %4275 = vmatprep.subr.mxu0 0.0
    %4276 = vmatpush1.msra.mxu0 0.0
    %4277 = vmatprep.subr.mxu0 0.0
    %4278 = vmatpush1.msra.mxu0 0.0
    %4279 = vmatprep.subr.mxu0 0.0
    %4280 = vmatpush1.msra.mxu0 0.0
    %4281 = vmatprep.subr.mxu0 0.0
    %4282 = vmatpush1.msra.mxu0 0.0
    %4283 = vmatprep.subr.mxu0 0.0
    %4284 = vmatpush1.msra.mxu0 0.0
    %4285 = vmatprep.subr.mxu0 0.0
    %4286 = vmatpush1.msra.mxu0 0.0
    %4287 = vmatprep.subr.mxu0 0.0
    %4288 = vmatpush1.msra.mxu0 0.0
    %4289 = vmatprep.subr.mxu0 0.0
    %4290 = vmatpush1.msra.mxu0 0.0
    %4291 = vmatprep.subr.mxu0 0.0
    %4292 = vmatpush1.msra.mxu0 0.0
    %4293 = vmatprep.subr.mxu0 0.0
    %4294 = vmatpush1.msra.mxu0 0.0
    %4295 = vmatprep.subr.mxu0 0.0
    %4296 = vmatpush1.msra.mxu0 0.0
    %4297 = vmatprep.subr.mxu0 0.0
    %4298 = vmatpush1.msra.mxu0 0.0
    %4299 = vmatprep.subr.mxu0 0.0
    %4300 = vmatpush1.msra.mxu0 0.0
    %4301 = vmatprep.subr.mxu0 0.0
    %4302 = vmatpush1.msra.mxu0 0.0
    %4303 = vmatprep.subr.mxu0 0.0
    %4304 = vmatpush1.msra.mxu0 0.0
    %4305 = vmatprep.mubr.f32.mxu0 0.0
    %4306 = vmatmul.mubr.f32.gmra.mrb[0].mxu0 %v4098
    %v4307 = vpop.f32.mrb[0].mxu0
    %v4308 = vadd.f32 %v4072, %v4307
    %v4309 = vpop.f32.mrb[0].mxu0
    %4310 = vdwg.mxu0
    %s4311 = scalar_lea.vmem %s2, 64
    %v4312 = vld [vmem:[%s4311] sm:$0xff]
    %4313 = vrot.lane.b32.xlu0 %v2881, 111
    %v4314 = vpop.permute.xlu0 %4313
    %4315 = vrot.lane.b32.xlu0 %v2882, 111
    %v4316 = vpop.permute.xlu0 %4315
    %4317 = vrot.lane.b32.xlu0 %v2883, 111
    %v4318 = vpop.permute.xlu0 %4317
    %4319 = vrot.lane.b32.xlu0 %v2884, 111
    %v4320 = vpop.permute.xlu0 %4319
    %4321 = vrot.lane.b32.xlu0 %v2885, 111
    %v4322 = vpop.permute.xlu0 %4321
    %4323 = vrot.lane.b32.xlu0 %v2886, 111
    %v4324 = vpop.permute.xlu0 %4323
    %v4325 = vsel %vm2100, %v4314, %v4316
    %v4326 = vsel %vm2100, %v4316, %v4318
    %v4327 = vsel %vm2100, %v4318, %v4320
    %v4328 = vsel %vm2100, %v4320, %v4322
    %v4329 = vsel %vm2100, %v4322, %v4324
    %v4336 = vsel %vm2430, %v4312, 0
    %4338 = vmatprep.subr.mxu0 %v4326
    %4339 = vmatpush1.msra.mxu0 %v4325
    %4340 = vmatprep.subr.mxu0 0.0
    %4341 = vmatpush1.msra.mxu0 0.0
    %4342 = vmatprep.subr.mxu0 0.0
    %4343 = vmatpush1.msra.mxu0 0.0
    %4344 = vmatprep.subr.mxu0 0.0
    %4345 = vmatpush1.msra.mxu0 0.0
    %4346 = vmatprep.subr.mxu0 0.0
    %4347 = vmatpush1.msra.mxu0 0.0
    %4348 = vmatprep.subr.mxu0 0.0
    %4349 = vmatpush1.msra.mxu0 0.0
    %4350 = vmatprep.subr.mxu0 0.0
    %4351 = vmatpush1.msra.mxu0 0.0
    %4352 = vmatprep.subr.mxu0 0.0
    %4353 = vmatpush1.msra.mxu0 0.0
    %4354 = vmatprep.subr.mxu0 0.0
    %4355 = vmatpush1.msra.mxu0 0.0
    %4356 = vmatprep.subr.mxu0 0.0
    %4357 = vmatpush1.msra.mxu0 0.0
    %4358 = vmatprep.subr.mxu0 0.0
    %4359 = vmatpush1.msra.mxu0 0.0
    %4360 = vmatprep.subr.mxu0 0.0
    %4361 = vmatpush1.msra.mxu0 0.0
    %4362 = vmatprep.subr.mxu0 0.0
    %4363 = vmatpush1.msra.mxu0 0.0
    %4364 = vmatprep.subr.mxu0 0.0
    %4365 = vmatpush1.msra.mxu0 0.0
    %4366 = vmatprep.subr.mxu0 0.0
    %4367 = vmatpush1.msra.mxu0 0.0
    %4368 = vmatprep.subr.mxu0 0.0
    %4369 = vmatpush1.msra.mxu0 0.0
    %4370 = vmatprep.subr.mxu0 0.0
    %4371 = vmatpush1.msra.mxu0 0.0
    %4372 = vmatprep.subr.mxu0 0.0
    %4373 = vmatpush1.msra.mxu0 0.0
    %4374 = vmatprep.subr.mxu0 0.0
    %4375 = vmatpush1.msra.mxu0 0.0
    %4376 = vmatprep.subr.mxu0 0.0
    %4377 = vmatpush1.msra.mxu0 0.0
    %4378 = vmatprep.subr.mxu0 0.0
    %4379 = vmatpush1.msra.mxu0 0.0
    %4380 = vmatprep.subr.mxu0 0.0
    %4381 = vmatpush1.msra.mxu0 0.0
    %4382 = vmatprep.subr.mxu0 0.0
    %4383 = vmatpush1.msra.mxu0 0.0
    %4384 = vmatprep.subr.mxu0 0.0
    %4385 = vmatpush1.msra.mxu0 0.0
    %4386 = vmatprep.subr.mxu0 0.0
    %4387 = vmatpush1.msra.mxu0 0.0
    %4388 = vmatprep.subr.mxu0 0.0
    %4389 = vmatpush1.msra.mxu0 0.0
    %4390 = vmatprep.subr.mxu0 0.0
    %4391 = vmatpush1.msra.mxu0 0.0
    %4392 = vmatprep.subr.mxu0 0.0
    %4393 = vmatpush1.msra.mxu0 0.0
    %4394 = vmatprep.subr.mxu0 0.0
    %4395 = vmatpush1.msra.mxu0 0.0
    %4396 = vmatprep.subr.mxu0 0.0
    %4397 = vmatpush1.msra.mxu0 0.0
    %4398 = vmatprep.subr.mxu0 0.0
    %4399 = vmatpush1.msra.mxu0 0.0
    %4400 = vmatprep.subr.mxu0 0.0
    %4401 = vmatpush1.msra.mxu0 0.0
    %4402 = vmatprep.mubr.f32.mxu0 0.0
    %4403 = vmatmul.mubr.f32.gmra.mrb[0].mxu0 %v4336
    %v4404 = vpop.f32.mrb[0].mxu0
    %v4405 = vadd.f32 0.0, %v4404
    %v4406 = vpop.f32.mrb[0].mxu0
    %v4407 = vadd.f32 0.0, %v4406
    %4408 = vdwg.mxu0
    %4409 = vmatprep.subr.mxu0 %v4328
    %4410 = vmatpush1.msra.mxu0 %v4327
    %4411 = vmatprep.subr.mxu0 0.0
    %4412 = vmatpush1.msra.mxu0 0.0
    %4413 = vmatprep.subr.mxu0 0.0
    %4414 = vmatpush1.msra.mxu0 0.0
    %4415 = vmatprep.subr.mxu0 0.0
    %4416 = vmatpush1.msra.mxu0 0.0
    %4417 = vmatprep.subr.mxu0 0.0
    %4418 = vmatpush1.msra.mxu0 0.0
    %4419 = vmatprep.subr.mxu0 0.0
    %4420 = vmatpush1.msra.mxu0 0.0
    %4421 = vmatprep.subr.mxu0 0.0
    %4422 = vmatpush1.msra.mxu0 0.0
    %4423 = vmatprep.subr.mxu0 0.0
    %4424 = vmatpush1.msra.mxu0 0.0
    %4425 = vmatprep.subr.mxu0 0.0
    %4426 = vmatpush1.msra.mxu0 0.0
    %4427 = vmatprep.subr.mxu0 0.0
    %4428 = vmatpush1.msra.mxu0 0.0
    %4429 = vmatprep.subr.mxu0 0.0
    %4430 = vmatpush1.msra.mxu0 0.0
    %4431 = vmatprep.subr.mxu0 0.0
    %4432 = vmatpush1.msra.mxu0 0.0
    %4433 = vmatprep.subr.mxu0 0.0
    %4434 = vmatpush1.msra.mxu0 0.0
    %4435 = vmatprep.subr.mxu0 0.0
    %4436 = vmatpush1.msra.mxu0 0.0
    %4437 = vmatprep.subr.mxu0 0.0
    %4438 = vmatpush1.msra.mxu0 0.0
    %4439 = vmatprep.subr.mxu0 0.0
    %4440 = vmatpush1.msra.mxu0 0.0
    %4441 = vmatprep.subr.mxu0 0.0
    %4442 = vmatpush1.msra.mxu0 0.0
    %4443 = vmatprep.subr.mxu0 0.0
    %4444 = vmatpush1.msra.mxu0 0.0
    %4445 = vmatprep.subr.mxu0 0.0
    %4446 = vmatpush1.msra.mxu0 0.0
    %4447 = vmatprep.subr.mxu0 0.0
    %4448 = vmatpush1.msra.mxu0 0.0
    %4449 = vmatprep.subr.mxu0 0.0
    %4450 = vmatpush1.msra.mxu0 0.0
    %4451 = vmatprep.subr.mxu0 0.0
    %4452 = vmatpush1.msra.mxu0 0.0
    %4453 = vmatprep.subr.mxu0 0.0
    %4454 = vmatpush1.msra.mxu0 0.0
    %4455 = vmatprep.subr.mxu0 0.0
    %4456 = vmatpush1.msra.mxu0 0.0
    %4457 = vmatprep.subr.mxu0 0.0
    %4458 = vmatpush1.msra.mxu0 0.0
    %4459 = vmatprep.subr.mxu0 0.0
    %4460 = vmatpush1.msra.mxu0 0.0
    %4461 = vmatprep.subr.mxu0 0.0
    %4462 = vmatpush1.msra.mxu0 0.0
    %4463 = vmatprep.subr.mxu0 0.0
    %4464 = vmatpush1.msra.mxu0 0.0
    %4465 = vmatprep.subr.mxu0 0.0
    %4466 = vmatpush1.msra.mxu0 0.0
    %4467 = vmatprep.subr.mxu0 0.0
    %4468 = vmatpush1.msra.mxu0 0.0
    %4469 = vmatprep.subr.mxu0 0.0
    %4470 = vmatpush1.msra.mxu0 0.0
    %4471 = vmatprep.subr.mxu0 0.0
    %4472 = vmatpush1.msra.mxu0 0.0
    %4473 = vmatprep.mubr.f32.mxu0 0.0
    %4474 = vmatmul.mubr.f32.gmra.mrb[0].mxu0 %v4336
    %v4475 = vpop.f32.mrb[0].mxu0
    %v4476 = vpop.f32.mrb[0].mxu0
    %v4477 = vadd.f32 0.0, %v4476
    %4478 = vdwg.mxu0
    %4479 = vmatprep.subr.mxu0 0.0
    %4480 = vmatpush1.msra.mxu0 %v4329
    %4481 = vmatprep.subr.mxu0 0.0
    %4482 = vmatpush1.msra.mxu0 0.0
    %4483 = vmatprep.subr.mxu0 0.0
    %4484 = vmatpush1.msra.mxu0 0.0
    %4485 = vmatprep.subr.mxu0 0.0
    %4486 = vmatpush1.msra.mxu0 0.0
    %4487 = vmatprep.subr.mxu0 0.0
    %4488 = vmatpush1.msra.mxu0 0.0
    %4489 = vmatprep.subr.mxu0 0.0
    %4490 = vmatpush1.msra.mxu0 0.0
    %4491 = vmatprep.subr.mxu0 0.0
    %4492 = vmatpush1.msra.mxu0 0.0
    %4493 = vmatprep.subr.mxu0 0.0
    %4494 = vmatpush1.msra.mxu0 0.0
    %4495 = vmatprep.subr.mxu0 0.0
    %4496 = vmatpush1.msra.mxu0 0.0
    %4497 = vmatprep.subr.mxu0 0.0
    %4498 = vmatpush1.msra.mxu0 0.0
    %4499 = vmatprep.subr.mxu0 0.0
    %4500 = vmatpush1.msra.mxu0 0.0
    %4501 = vmatprep.subr.mxu0 0.0
    %4502 = vmatpush1.msra.mxu0 0.0
    %4503 = vmatprep.subr.mxu0 0.0
    %4504 = vmatpush1.msra.mxu0 0.0
    %4505 = vmatprep.subr.mxu0 0.0
    %4506 = vmatpush1.msra.mxu0 0.0
    %4507 = vmatprep.subr.mxu0 0.0
    %4508 = vmatpush1.msra.mxu0 0.0
    %4509 = vmatprep.subr.mxu0 0.0
    %4510 = vmatpush1.msra.mxu0 0.0
    %4511 = vmatprep.subr.mxu0 0.0
    %4512 = vmatpush1.msra.mxu0 0.0
    %4513 = vmatprep.subr.mxu0 0.0
    %4514 = vmatpush1.msra.mxu0 0.0
    %4515 = vmatprep.subr.mxu0 0.0
    %4516 = vmatpush1.msra.mxu0 0.0
    %4517 = vmatprep.subr.mxu0 0.0
    %4518 = vmatpush1.msra.mxu0 0.0
    %4519 = vmatprep.subr.mxu0 0.0
    %4520 = vmatpush1.msra.mxu0 0.0
    %4521 = vmatprep.subr.mxu0 0.0
    %4522 = vmatpush1.msra.mxu0 0.0
    %4523 = vmatprep.subr.mxu0 0.0
    %4524 = vmatpush1.msra.mxu0 0.0
    %4525 = vmatprep.subr.mxu0 0.0
    %4526 = vmatpush1.msra.mxu0 0.0
    %4527 = vmatprep.subr.mxu0 0.0
    %4528 = vmatpush1.msra.mxu0 0.0
    %4529 = vmatprep.subr.mxu0 0.0
    %4530 = vmatpush1.msra.mxu0 0.0
    %4531 = vmatprep.subr.mxu0 0.0
    %4532 = vmatpush1.msra.mxu0 0.0
    %4533 = vmatprep.subr.mxu0 0.0
    %4534 = vmatpush1.msra.mxu0 0.0
    %4535 = vmatprep.subr.mxu0 0.0
    %4536 = vmatpush1.msra.mxu0 0.0
    %4537 = vmatprep.subr.mxu0 0.0
    %4538 = vmatpush1.msra.mxu0 0.0
    %4539 = vmatprep.subr.mxu0 0.0
    %4540 = vmatpush1.msra.mxu0 0.0
    %4541 = vmatprep.subr.mxu0 0.0
    %4542 = vmatpush1.msra.mxu0 0.0
    %4543 = vmatprep.mubr.f32.mxu0 0.0
    %4544 = vmatmul.mubr.f32.gmra.mrb[0].mxu0 %v4336
    %v4545 = vpop.f32.mrb[0].mxu0
    %v4546 = vadd.f32 0.0, %v4545
    %v4547 = vpop.f32.mrb[0].mxu0
    %4548 = vdwg.mxu0
    %v4549 = vadd.f32 %v4167, %v4405
    %v4550 = vadd.f32 %v4169, %v4407
    %v4551 = vadd.f32 %v4239, %v4477
    %v4552 = vadd.f32 %v4308, %v4546
    %v4553 = vmul.f32 %v4549, %v2338
    %v4554 = vmul.f32 %v4550, %v2342
    %v4555 = vmul.f32 %v4551, %v2346
    %v4556 = vmul.f32 %v4552, %v2350
    %v4557 = vadd.f32 %v3135, %v3831
    %v4558 = vadd.f32 %v3136, %v3832
    %v4559 = vadd.f32 %v3137, %v3833
    %v4560 = vadd.f32 %v3138, %v3834
    %v4561 = vadd.f32 %v4557, %v4553
    %v4562 = vadd.f32 %v4558, %v4554
    %v4563 = vadd.f32 %v4559, %v4555
    %v4564 = vadd.f32 %v4560, %v4556
    %v4565 = vld [vmem:[%s3] sm:$0xff]
    %v4566 = vld [vmem:[%s0] sm:$0xff]
    %v4568 = vcombine.high %v4566, %v4566
    %v4570 = vsel %vm127, %v4565, 0
    %v4572 = vsel %vm131, %v4566, 0
    %v4574 = vsel %vm131, %v4568, 0
    %4576 = vmatprep.subr.mxu0 %v4574
    %4577 = vmatpush1.msra.mxu0 %v4572
    %4578 = vmatprep.subr.mxu0 0.0
    %4579 = vmatpush1.msra.mxu0 0.0
    %4580 = vmatprep.subr.mxu0 0.0
    %4581 = vmatpush1.msra.mxu0 0.0
    %4582 = vmatprep.subr.mxu0 0.0
    %4583 = vmatpush1.msra.mxu0 0.0
    %4584 = vmatprep.subr.mxu0 0.0
    %4585 = vmatpush1.msra.mxu0 0.0
    %4586 = vmatprep.subr.mxu0 0.0
    %4587 = vmatpush1.msra.mxu0 0.0
    %4588 = vmatprep.subr.mxu0 0.0
    %4589 = vmatpush1.msra.mxu0 0.0
    %4590 = vmatprep.subr.mxu0 0.0
    %4591 = vmatpush1.msra.mxu0 0.0
    %4592 = vmatprep.subr.mxu0 0.0
    %4593 = vmatpush1.msra.mxu0 0.0
    %4594 = vmatprep.subr.mxu0 0.0
    %4595 = vmatpush1.msra.mxu0 0.0
    %4596 = vmatprep.subr.mxu0 0.0
    %4597 = vmatpush1.msra.mxu0 0.0
    %4598 = vmatprep.subr.mxu0 0.0
    %4599 = vmatpush1.msra.mxu0 0.0
    %4600 = vmatprep.subr.mxu0 0.0
    %4601 = vmatpush1.msra.mxu0 0.0
    %4602 = vmatprep.subr.mxu0 0.0
    %4603 = vmatpush1.msra.mxu0 0.0
    %4604 = vmatprep.subr.mxu0 0.0
    %4605 = vmatpush1.msra.mxu0 0.0
    %4606 = vmatprep.subr.mxu0 0.0
    %4607 = vmatpush1.msra.mxu0 0.0
    %4608 = vmatprep.subr.mxu0 0.0
    %4609 = vmatpush1.msra.mxu0 0.0
    %4610 = vmatprep.subr.mxu0 0.0
    %4611 = vmatpush1.msra.mxu0 0.0
    %4612 = vmatprep.subr.mxu0 0.0
    %4613 = vmatpush1.msra.mxu0 0.0
    %4614 = vmatprep.subr.mxu0 0.0
    %4615 = vmatpush1.msra.mxu0 0.0
    %4616 = vmatprep.subr.mxu0 0.0
    %4617 = vmatpush1.msra.mxu0 0.0
    %4618 = vmatprep.subr.mxu0 0.0
    %4619 = vmatpush1.msra.mxu0 0.0
    %4620 = vmatprep.subr.mxu0 0.0
    %4621 = vmatpush1.msra.mxu0 0.0
    %4622 = vmatprep.subr.mxu0 0.0
    %4623 = vmatpush1.msra.mxu0 0.0
    %4624 = vmatprep.subr.mxu0 0.0
    %4625 = vmatpush1.msra.mxu0 0.0
    %4626 = vmatprep.subr.mxu0 0.0
    %4627 = vmatpush1.msra.mxu0 0.0
    %4628 = vmatprep.subr.mxu0 0.0
    %4629 = vmatpush1.msra.mxu0 0.0
    %4630 = vmatprep.subr.mxu0 0.0
    %4631 = vmatpush1.msra.mxu0 0.0
    %4632 = vmatprep.subr.mxu0 0.0
    %4633 = vmatpush1.msra.mxu0 0.0
    %4634 = vmatprep.subr.mxu0 0.0
    %4635 = vmatpush1.msra.mxu0 0.0
    %4636 = vmatprep.subr.mxu0 0.0
    %4637 = vmatpush1.msra.mxu0 0.0
    %4638 = vmatprep.subr.mxu0 0.0
    %4639 = vmatpush1.msra.mxu0 0.0
    %4640 = vmatprep.mubr.f32.mxu0 0.0
    %4641 = vmatmul.mubr.f32.gmra.mrb[0].mxu0 %v4570
    %v4642 = vpop.f32.mrb[0].mxu0
    %v4643 = vadd.f32 0.0, %v4642
    %v4644 = vpop.f32.mrb[0].mxu0
    %v4645 = vadd.f32 0.0, %v4644
    %4646 = vdwg.mxu0
    %v4647 = vadd.f32 %v4561, %v4643
    %v4648 = vadd.f32 %v4562, %v4645
    %4650 = vset.pattern.permute.xlu0 0
    %4651 = vperm.xlu0 %4650, %v51
    %v4652 = vpop.permute.xlu0 %4651
    %v4654 = vadd.f32 %v4647, %v4652
    %v4655 = vadd.f32 %v4648, %v4652
    %4656 = vst [vmem:[#allocation3] sm:$0xff] %v4654
    %4657 = vst [vmem:[#allocation3 + $0x8] sm:$0xff] %v4655
    %s4658 = scalar_lea.vmem %s0, 8
    %v4659 = vld [vmem:[%s4658] sm:$0xff]
    %v4661 = vcombine.high %v4659, %v4659
    %v4662 = vsel %vm131, %v4659, 0
    %v4664 = vsel %vm131, %v4661, 0
    %4666 = vmatprep.subr.mxu0 %v4664
    %4667 = vmatpush1.msra.mxu0 %v4662
    %4668 = vmatprep.subr.mxu0 0.0
    %4669 = vmatpush1.msra.mxu0 0.0
    %4670 = vmatprep.subr.mxu0 0.0
    %4671 = vmatpush1.msra.mxu0 0.0
    %4672 = vmatprep.subr.mxu0 0.0
    %4673 = vmatpush1.msra.mxu0 0.0
    %4674 = vmatprep.subr.mxu0 0.0
    %4675 = vmatpush1.msra.mxu0 0.0
    %4676 = vmatprep.subr.mxu0 0.0
    %4677 = vmatpush1.msra.mxu0 0.0
    %4678 = vmatprep.subr.mxu0 0.0
    %4679 = vmatpush1.msra.mxu0 0.0
    %4680 = vmatprep.subr.mxu0 0.0
    %4681 = vmatpush1.msra.mxu0 0.0
    %4682 = vmatprep.subr.mxu0 0.0
    %4683 = vmatpush1.msra.mxu0 0.0
    %4684 = vmatprep.subr.mxu0 0.0
    %4685 = vmatpush1.msra.mxu0 0.0
    %4686 = vmatprep.subr.mxu0 0.0
    %4687 = vmatpush1.msra.mxu0 0.0
    %4688 = vmatprep.subr.mxu0 0.0
    %4689 = vmatpush1.msra.mxu0 0.0
    %4690 = vmatprep.subr.mxu0 0.0
    %4691 = vmatpush1.msra.mxu0 0.0
    %4692 = vmatprep.subr.mxu0 0.0
    %4693 = vmatpush1.msra.mxu0 0.0
    %4694 = vmatprep.subr.mxu0 0.0
    %4695 = vmatpush1.msra.mxu0 0.0
    %4696 = vmatprep.subr.mxu0 0.0
    %4697 = vmatpush1.msra.mxu0 0.0
    %4698 = vmatprep.subr.mxu0 0.0
    %4699 = vmatpush1.msra.mxu0 0.0
    %4700 = vmatprep.subr.mxu0 0.0
    %4701 = vmatpush1.msra.mxu0 0.0
    %4702 = vmatprep.subr.mxu0 0.0
    %4703 = vmatpush1.msra.mxu0 0.0
    %4704 = vmatprep.subr.mxu0 0.0
    %4705 = vmatpush1.msra.mxu0 0.0
    %4706 = vmatprep.subr.mxu0 0.0
    %4707 = vmatpush1.msra.mxu0 0.0
    %4708 = vmatprep.subr.mxu0 0.0
    %4709 = vmatpush1.msra.mxu0 0.0
    %4710 = vmatprep.subr.mxu0 0.0
    %4711 = vmatpush1.msra.mxu0 0.0
    %4712 = vmatprep.subr.mxu0 0.0
    %4713 = vmatpush1.msra.mxu0 0.0
    %4714 = vmatprep.subr.mxu0 0.0
    %4715 = vmatpush1.msra.mxu0 0.0
    %4716 = vmatprep.subr.mxu0 0.0
    %4717 = vmatpush1.msra.mxu0 0.0
    %4718 = vmatprep.subr.mxu0 0.0
    %4719 = vmatpush1.msra.mxu0 0.0
    %4720 = vmatprep.subr.mxu0 0.0
    %4721 = vmatpush1.msra.mxu0 0.0
    %4722 = vmatprep.subr.mxu0 0.0
    %4723 = vmatpush1.msra.mxu0 0.0
    %4724 = vmatprep.subr.mxu0 0.0
    %4725 = vmatpush1.msra.mxu0 0.0
    %4726 = vmatprep.subr.mxu0 0.0
    %4727 = vmatpush1.msra.mxu0 0.0
    %4728 = vmatprep.subr.mxu0 0.0
    %4729 = vmatpush1.msra.mxu0 0.0
    %4730 = vmatprep.mubr.f32.mxu0 0.0
    %4731 = vmatmul.mubr.f32.gmra.mrb[0].mxu0 %v4570
    %v4732 = vpop.f32.mrb[0].mxu0
    %v4733 = vadd.f32 0.0, %v4732
    %v4734 = vpop.f32.mrb[0].mxu0
    %v4735 = vadd.f32 0.0, %v4734
    %4736 = vdwg.mxu0
    %v4737 = vadd.f32 %v4563, %v4733
    %v4738 = vadd.f32 %v4564, %v4735
    %v4739 = vadd.f32 %v4737, %v4652
    %v4740 = vadd.f32 %v4738, %v4652
    %s4741 = scalar_lea.vmem [#allocation3], 16
    %4742 = vst [vmem:[%s4741] sm:$0xff] %v4739
    %4743 = vst [vmem:[%s4741 + $0x8] sm:$0xff] %v4740
    // Predicated region
    $region50: #{tpu_custom_call.1} parent=1 // pred_check
      _
    $region51: #{tpu_custom_call.1} parent=1 // pred_check_branch
      %4745 = sbr.rel (0) target = $region53
    $region52: #{tpu_custom_call.1} parent=1 // pred_region
      %s4747 = ssub.s32 512, 512
      %4748 = vsyncadd [#allocation4], %s4747
      %s4749 = sshll.u32 [#allocation3], 4
      %s4750 = int_to_ptr.vmem [resolvable:$true] %s4749
      %4755 = dma.vmem_to_hbm [thread:$0]  %s4750, 512, %s12, [#allocation4], 256, 256, 16
    $region53: #{tpu_custom_call.1} parent=1 // pred_fallthru
      _
    // Predicated region
    $region54: #{tpu_custom_call.1} parent=1 // pred_check
      _
    $region55: #{tpu_custom_call.1} parent=1 // pred_check_branch
      %4757 = sbr.rel (0) target = $region57
    $region56: #{tpu_custom_call.1} parent=1 // pred_region
      %4758 = dma.done [#allocation4], 512
    $region57: #{tpu_custom_call.1} parent=1 // pred_fallthru
      _
    %4759 = vsyncpa [#allocation4], 1

</llo_original>
